<compile_context>
chip_gen: v6e
topology: v6e:2x2x1
jax: 0.10.0
libtpu: 0.0.40
codegen_flags: <defaults>
</compile_context>

<pallas_src>
import functools

import jax
import jax.numpy as jnp
from jax import lax
from jax.experimental import pallas as pl
from jax.experimental.pallas import tpu as pltpu

EPS = 1e-5
_VMEM_LIMIT = 64 * 1024 * 1024  # scoped-VMEM cap (<= physical on all gens)


# ---------------------------------------------------------------------------
# Kernel 1: 3x3 conv + bias (optionally with a fused BN+ReLU pre-op applied to
# its input on load), plus streaming per-tile BatchNorm partial statistics.
# ---------------------------------------------------------------------------
def _conv_stats_kernel(x_mid_ref, x_up_ref, x_dn_ref, w_ref, b_ref,
                       s_ref, t_ref, y_ref, st_ref,
                       *, apply_pre, compute_dtype):
    i = pl.program_id(1)
    nh = pl.num_programs(1)
    _, th, w, cout = y_ref.shape
    cin = x_mid_ref.shape[-1]

    def pre(v):
        # Fused BatchNorm + ReLU of the *previous* ConvBlock, applied on load.
        if apply_pre:
            v = jnp.maximum(v * s_ref[...] + t_ref[...], 0.0)
        return v

    x_mid = pre(x_mid_ref[0])        # (th, w, cin)  current row tile
    top = pre(x_up_ref[0, 0])        # (w, cin)      row i*th - 1 (clamped)
    bot = pre(x_dn_ref[0, 0])        # (w, cin)      row (i+1)*th (clamped)
    # Zero the halo rows at the image border: conv zero-padding is applied
    # AFTER the previous block's activation, matching PyTorch semantics.
    top = top * jnp.where(i > 0, 1.0, 0.0)
    bot = bot * jnp.where(i < nh - 1, 1.0, 0.0)

    # Assemble the zero-padded (th+2, w+2, cin) tile functionally (in VMEM).
    xrows = jnp.concatenate([top[None], x_mid, bot[None]], axis=0)
    zcol = jnp.zeros((th + 2, 1, cin), xrows.dtype)
    xpad = jnp.concatenate([zcol, xrows, zcol], axis=1)   # (th+2, w+2, cin)

    # im2col: 9 shifted views concatenated on channels -> one MXU matmul,
    # contraction depth K = 9*cin.
    cols = [xpad[dy:dy + th, dx:dx + w, :]
            for dy in range(3) for dx in range(3)]
    patch = jnp.concatenate(cols, axis=-1).reshape(th * w, 9 * cin)

    y = jnp.dot(patch.astype(compute_dtype), w_ref[...].astype(compute_dtype),
                preferred_element_type=jnp.float32)
    y = y + b_ref[...]                                     # (1, cout) broadcast

    y_ref[...] = y.reshape(1, th, w, cout).astype(y_ref.dtype)

    # Streaming BN statistics: per-tile partial sum and sum of squares.
    ssum = jnp.sum(y, axis=0, keepdims=True)               # (1, cout)
    ssq = jnp.sum(y * y, axis=0, keepdims=True)            # (1, cout)
    st_ref[...] = jnp.concatenate([ssum, ssq], axis=0).reshape(1, 1, 2, cout)


def conv_pass(x, w, b, pre_scale, pre_shift, *, apply_pre, tile_h,
              compute_dtype=jnp.float32):
    """Conv3x3(pad=1)+bias over NHWC x, with optional fused pre BN+ReLU.
    Returns (raw conv output, per-tile BN partial stats)."""
    n, h, wd, cin = x.shape
    cout = w.shape[-1]
    assert h % tile_h == 0, "tile_h must divide H"
    nh = h // tile_h
    th = tile_h

    kernel = functools.partial(_conv_stats_kernel, apply_pre=apply_pre,
                               compute_dtype=compute_dtype)

    cost = pl.CostEstimate(
        flops=2 * n * h * wd * 9 * cin * cout,
        transcendentals=0,
        bytes_accessed=4 * (n * h * wd * (cin + cout) + 9 * cin * cout),
    )

    y, stats = pl.pallas_call(
        kernel,
        out_shape=(
            jax.ShapeDtypeStruct((n, h, wd, cout), jnp.float32),
            jax.ShapeDtypeStruct((n, nh, 2, cout), jnp.float32),
        ),
        grid=(n, nh),
        in_specs=[
            # current row tile
            pl.BlockSpec((1, th, wd, cin), lambda b_, i: (b_, i, 0, 0)),
            # 1-row halos above/below (clamped element index on a size-1 block
            # dim == block index; zero-masked at the border in-kernel)
            pl.BlockSpec((1, 1, wd, cin),
                         lambda b_, i: (b_, jnp.maximum(i * th - 1, 0), 0, 0)),
            pl.BlockSpec((1, 1, wd, cin),
                         lambda b_, i: (b_, jnp.minimum((i + 1) * th, h - 1), 0, 0)),
            # weights / bias / fused pre-BN scale & shift (same block every step;
            # stays VMEM-resident across the pipeline)
            pl.BlockSpec((9 * cin, cout), lambda b_, i: (0, 0)),
            pl.BlockSpec((1, cout), lambda b_, i: (0, 0)),
            pl.BlockSpec((1, cin), lambda b_, i: (0, 0)),
            pl.BlockSpec((1, cin), lambda b_, i: (0, 0)),
        ],
        out_specs=(
            pl.BlockSpec((1, th, wd, cout), lambda b_, i: (b_, i, 0, 0)),
            pl.BlockSpec((1, 1, 2, cout), lambda b_, i: (b_, i, 0, 0)),
        ),
        compiler_params=pltpu.CompilerParams(
            dimension_semantics=("parallel", "parallel"),
            vmem_limit_bytes=_VMEM_LIMIT,
        ),
        cost_estimate=cost,
    )(x, x, x, w, b, pre_scale, pre_shift)
    return y, stats


# ---------------------------------------------------------------------------
# Kernel 2: elementwise BN+ReLU epilogue (only needed for the final block).
# ---------------------------------------------------------------------------
def _bn_relu_kernel(y_ref, s_ref, t_ref, o_ref):
    o_ref[...] = jnp.maximum(y_ref[...] * s_ref[...] + t_ref[...],
                             0.0).astype(o_ref.dtype)


def bn_relu_pass(y, scale, shift, *, tile_h):
    n, h, wd, c = y.shape
    assert h % tile_h == 0
    nh = h // tile_h
    return pl.pallas_call(
        _bn_relu_kernel,
        out_shape=jax.ShapeDtypeStruct((n, h, wd, c), jnp.float32),
        grid=(n, nh),
        in_specs=[
            pl.BlockSpec((1, tile_h, wd, c), lambda b_, i: (b_, i, 0, 0)),
            pl.BlockSpec((1, c), lambda b_, i: (0, 0)),
            pl.BlockSpec((1, c), lambda b_, i: (0, 0)),
        ],
        out_specs=pl.BlockSpec((1, tile_h, wd, c), lambda b_, i: (b_, i, 0, 0)),
        compiler_params=pltpu.CompilerParams(
            dimension_semantics=("parallel", "parallel"),
            vmem_limit_bytes=_VMEM_LIMIT,
        ),
    )(y, scale, shift)


# ---------------------------------------------------------------------------
# Host-side helpers
# ---------------------------------------------------------------------------
def _bn_scale_shift(stats, gamma, beta, count):
    """Reduce per-tile partials into per-channel affine (scale, shift)."""
    s = jnp.sum(stats, axis=(0, 1))                 # (2, cout)
    mean = s[0:1] / count                           # (1, cout)
    # one-pass variance; clamp tiny negatives from f32 cancellation
    # (fine here since conv outputs are O(1))
    var = jnp.maximum(s[1:2] / count - mean * mean, 0.0)
    scale = gamma * lax.rsqrt(var + EPS)
    shift = beta - mean * scale
    return scale, shift


def _pick_tile_h(h, wd, cin, cout, budget_bytes=8 * 1024 * 1024):
    """Largest divisor of H whose per-step working set fits the budget.
    Budget is kept well under scoped VMEM (v7x: 64 MiB physical)."""
    best = 1
    for th in range(1, h + 1):
        if h % th:
            continue
        rows = th * wd
        per_step = 4 * (2 * rows * cin + 2 * rows * cout   # double-buffered I/O
                        + rows * 9 * cin                    # im2col patch
                        + (th + 2) * (wd + 2) * cin)        # padded tile
        if per_step <= budget_bytes:
            best = th
    return best


def double_conv(x_nchw, params, *, tile_h=None, compute_dtype=jnp.float32):
    """DoubleConv forward: (N, Cin, H, W) -> (N, Cout, H, W)."""
    (w1, b1, g1, be1), (w2, b2, g2, be2) = params
    x = jnp.transpose(x_nchw, (0, 2, 3, 1))         # NCHW -> NHWC (lane = C)
    n, h, wd, cin = x.shape
    cout = w1.shape[-1]
    if tile_h is None:
        tile_h = _pick_tile_h(h, wd, max(cin, cout), max(cin, cout))
    count = n * h * wd

    # Block 1: conv + streaming BN stats (no pre-op).
    ones = jnp.ones((1, cin), jnp.float32)
    zeros = jnp.zeros((1, cin), jnp.float32)
    y1, st1 = conv_pass(x, w1, b1, ones, zeros, apply_pre=False,
                        tile_h=tile_h, compute_dtype=compute_dtype)
    s1, t1 = _bn_scale_shift(st1, g1, be1, count)

    # Block 2: block-1's BN+ReLU is fused into this conv's input pre-op,
    # so the intermediate never needs a standalone elementwise pass.
    y2, st2 = conv_pass(y1, w2, b2, s1, t1, apply_pre=True,
                        tile_h=tile_h, compute_dtype=compute_dtype)
    s2, t2 = _bn_scale_shift(st2, g2, be2, count)

    # Final BN+ReLU epilogue for block 2.
    out = bn_relu_pass(y2, s2, t2, tile_h=tile_h)
    return jnp.transpose(out, (0, 3, 1, 2))         # NHWC -> NCHW


def init_params(key, in_channels, out_channels):
    """Deterministic synthetic init.  Conv weights stored as (9*Cin, Cout),
    row index = (dy*3 + dx)*Cin + c (matches the kernel's im2col order)."""
    def block(k, cin, cout):
        kw, kb = jax.random.split(k)
        fan_in = 9 * cin
        w = jax.random.normal(kw, (9 * cin, cout), jnp.float32) / jnp.sqrt(fan_in)
        b = 0.01 * jax.random.normal(kb, (1, cout), jnp.float32)
        gamma = jnp.ones((1, cout), jnp.float32)    # PyTorch BN default weight
        beta = jnp.zeros((1, cout), jnp.float32)    # PyTorch BN default bias
        return (w, b, gamma, beta)

    k1, k2 = jax.random.split(key)
    return (block(k1, in_channels, out_channels),
            block(k2, out_channels, out_channels))


# ---- pure-JAX reference (correctness check of the kernels) ----
def _ref_block(x_nhwc, w, b, gamma, beta):
    cin, cout = x_nhwc.shape[-1], w.shape[-1]
    w4 = w.reshape(3, 3, cin, cout)                 # HWIO
    y = lax.conv_general_dilated(
        x_nhwc, w4, window_strides=(1, 1), padding="SAME",
        dimension_numbers=("NHWC", "HWIO", "NHWC"))
    y = y + b.reshape(1, 1, 1, -1)
    mean = jnp.mean(y, axis=(0, 1, 2), keepdims=True)
    var = jnp.mean((y - mean) ** 2, axis=(0, 1, 2), keepdims=True)
    y = (y - mean) * (gamma.reshape(1, 1, 1, -1) * lax.rsqrt(var + EPS)) \
        + beta.reshape(1, 1, 1, -1)
    return jnp.maximum(y, 0.0)


def _ref_double_conv(x_nchw, params):
    x = jnp.transpose(x_nchw, (0, 2, 3, 1))
    for (w, b, g, be) in params:
        x = _ref_block(x, w, b, g, be)
    return jnp.transpose(x, (0, 3, 1, 2))


# TODO(synk): BatchNorm2d's running_mean/running_var buffer updates (a training
# side effect, not part of the returned tensor) are not materialized here.

if __name__ == "__main__":
    key = jax.random.PRNGKey(0)
    kx, kp = jax.random.split(key)

    N, Cin, Cout, H, W = 2, 4, 8, 16, 16
    x = jax.random.normal(kx, (N, Cin, H, W), jnp.float32)   # NCHW like PyTorch
    params = init_params(kp, Cin, Cout)

    # tile_h=8 forces 2 H-tiles per image so the interior-halo path and the
    # border masking are both exercised at this small test shape.
    fwd = jax.jit(functools.partial(double_conv, tile_h=8))
    out = jax.block_until_ready(fwd(x, params))

    ref = jax.block_until_ready(_ref_double_conv(x, params))
    assert out.shape == (N, Cout, H, W)
    err = jnp.max(jnp.abs(out - ref))
    assert jnp.allclose(out, ref, atol=1e-3, rtol=1e-3), f"max err {err}"

    print("KERNEL_OK")
</pallas_src>

<mosaic_0001>
module attributes {stable_mosaic.version = 11 : i64} {
  func.func @_conv_stats_kernel(%arg0: i32, %arg1: i32, %arg2: memref<1x8x16x4xf32, #tpu.memory_space<vmem>>, %arg3: memref<1x1x16x4xf32, #tpu.memory_space<vmem>>, %arg4: memref<1x1x16x4xf32, #tpu.memory_space<vmem>>, %arg5: memref<36x8xf32, #tpu.memory_space<vmem>>, %arg6: memref<1x8xf32, #tpu.memory_space<vmem>>, %arg7: memref<1x4xf32, #tpu.memory_space<vmem>>, %arg8: memref<1x4xf32, #tpu.memory_space<vmem>>, %arg9: memref<1x8x16x8xf32, #tpu.memory_space<vmem>>, %arg10: memref<1x1x2x8xf32, #tpu.memory_space<vmem>>) attributes {dimension_semantics = [#tpu.dimension_semantics<parallel>, #tpu.dimension_semantics<parallel>], iteration_bounds = array<i64: 2, 2>, scalar_prefetch = 0 : i64, scratch_operands = 0 : i64, tpu.core_type = #tpu.core_type<tc>, window_params = [{transform_indices = @transform_0, window_bounds = array<i64: 1, 8, 16, 4>}, {transform_indices = @transform_1, window_bounds = array<i64: 1, 1, 16, 4>}, {transform_indices = @transform_2, window_bounds = array<i64: 1, 1, 16, 4>}, {pipeline_mode = #tpu.pipeline_mode<synchronous>, transform_indices = @transform_3, window_bounds = array<i64: 36, 8>}, {pipeline_mode = #tpu.pipeline_mode<synchronous>, transform_indices = @transform_4, window_bounds = array<i64: 1, 8>}, {pipeline_mode = #tpu.pipeline_mode<synchronous>, transform_indices = @transform_5, window_bounds = array<i64: 1, 4>}, {pipeline_mode = #tpu.pipeline_mode<synchronous>, transform_indices = @transform_6, window_bounds = array<i64: 1, 4>}, {transform_indices = @transform_7, window_bounds = array<i64: 1, 8, 16, 8>}, {transform_indices = @transform_8, window_bounds = array<i64: 1, 1, 2, 8>}]} {
    %c0 = arith.constant 0 : index
    %c0_0 = arith.constant 0 : index
    %c0_1 = arith.constant 0 : index
    %c0_2 = arith.constant 0 : index
    %0 = vector.load %arg2[%c0, %c0_0, %c0_1, %c0_2] : memref<1x8x16x4xf32, #tpu.memory_space<vmem>>, vector<1x8x16x4xf32>
    %1 = vector.shape_cast %0 : vector<1x8x16x4xf32> to vector<8x16x4xf32>
    %c0_3 = arith.constant 0 : index
    %c0_4 = arith.constant 0 : index
    %c0_5 = arith.constant 0 : index
    %c0_6 = arith.constant 0 : index
    %2 = vector.load %arg3[%c0_3, %c0_4, %c0_5, %c0_6] : memref<1x1x16x4xf32, #tpu.memory_space<vmem>>, vector<1x1x16x4xf32>
    %3 = vector.shape_cast %2 : vector<1x1x16x4xf32> to vector<16x4xf32>
    %c0_7 = arith.constant 0 : index
    %c0_8 = arith.constant 0 : index
    %c0_9 = arith.constant 0 : index
    %c0_10 = arith.constant 0 : index
    %4 = vector.load %arg4[%c0_7, %c0_8, %c0_9, %c0_10] : memref<1x1x16x4xf32, #tpu.memory_space<vmem>>, vector<1x1x16x4xf32>
    %5 = vector.shape_cast %4 : vector<1x1x16x4xf32> to vector<16x4xf32>
    %c0_i32 = arith.constant 0 : i32
    %6 = arith.cmpi sgt, %arg1, %c0_i32 : i32
    %cst = arith.constant 1.000000e+00 : f32
    %cst_11 = arith.constant 0.000000e+00 : f32
    %7 = arith.select %6, %cst, %cst_11 : f32
    %8 = vector.broadcast %7 : f32 to vector<16x4xf32>
    %9 = arith.mulf %3, %8 : vector<16x4xf32>
    %c1_i32 = arith.constant 1 : i32
    %10 = arith.cmpi slt, %arg1, %c1_i32 : i32
    %cst_12 = arith.constant 1.000000e+00 : f32
    %cst_13 = arith.constant 0.000000e+00 : f32
    %11 = arith.select %10, %cst_12, %cst_13 : f32
    %12 = vector.broadcast %11 : f32 to vector<16x4xf32>
    %13 = arith.mulf %5, %12 : vector<16x4xf32>
    %14 = vector.shape_cast %9 : vector<16x4xf32> to vector<1x16x4xf32>
    %15 = vector.shape_cast %13 : vector<16x4xf32> to vector<1x16x4xf32>
    %16 = tpu.concatenate %14, %1, %15 in 0 : vector<1x16x4xf32>, vector<8x16x4xf32>, vector<1x16x4xf32> -> vector<10x16x4xf32>
    %cst_14 = arith.constant 0.000000e+00 : f32
    %17 = vector.broadcast %cst_14 : f32 to vector<10x1x4xf32>
    %18 = tpu.concatenate %17, %16, %17 in 1 : vector<10x1x4xf32>, vector<10x16x4xf32>, vector<10x1x4xf32> -> vector<10x18x4xf32>
    %19 = vector.extract_strided_slice %18 {offsets = [0, 0, 0], sizes = [8, 16, 4], strides = [1, 1, 1]} : vector<10x18x4xf32> to vector<8x16x4xf32>
    %20 = vector.extract_strided_slice %18 {offsets = [0, 1, 0], sizes = [8, 16, 4], strides = [1, 1, 1]} : vector<10x18x4xf32> to vector<8x16x4xf32>
    %21 = vector.extract_strided_slice %18 {offsets = [0, 2, 0], sizes = [8, 16, 4], strides = [1, 1, 1]} : vector<10x18x4xf32> to vector<8x16x4xf32>
    %22 = vector.extract_strided_slice %18 {offsets = [1, 0, 0], sizes = [8, 16, 4], strides = [1, 1, 1]} : vector<10x18x4xf32> to vector<8x16x4xf32>
    %23 = vector.extract_strided_slice %18 {offsets = [1, 1, 0], sizes = [8, 16, 4], strides = [1, 1, 1]} : vector<10x18x4xf32> to vector<8x16x4xf32>
    %24 = vector.extract_strided_slice %18 {offsets = [1, 2, 0], sizes = [8, 16, 4], strides = [1, 1, 1]} : vector<10x18x4xf32> to vector<8x16x4xf32>
    %25 = vector.extract_strided_slice %18 {offsets = [2, 0, 0], sizes = [8, 16, 4], strides = [1, 1, 1]} : vector<10x18x4xf32> to vector<8x16x4xf32>
    %26 = vector.extract_strided_slice %18 {offsets = [2, 1, 0], sizes = [8, 16, 4], strides = [1, 1, 1]} : vector<10x18x4xf32> to vector<8x16x4xf32>
    %27 = vector.extract_strided_slice %18 {offsets = [2, 2, 0], sizes = [8, 16, 4], strides = [1, 1, 1]} : vector<10x18x4xf32> to vector<8x16x4xf32>
    %28 = tpu.concatenate %19, %20, %21, %22, %23, %24, %25, %26, %27 in 2 : vector<8x16x4xf32>, vector<8x16x4xf32>, vector<8x16x4xf32>, vector<8x16x4xf32>, vector<8x16x4xf32>, vector<8x16x4xf32>, vector<8x16x4xf32>, vector<8x16x4xf32>, vector<8x16x4xf32> -> vector<8x16x36xf32>
    %29 = vector.shape_cast %28 : vector<8x16x36xf32> to vector<128x36xf32>
    %c0_15 = arith.constant 0 : index
    %c0_16 = arith.constant 0 : index
    %30 = vector.load %arg5[%c0_15, %c0_16] : memref<36x8xf32, #tpu.memory_space<vmem>>, vector<36x8xf32>
    %cst_17 = arith.constant dense<0.000000e+00> : vector<128x8xf32>
    %31 = tpu.matmul %29, %30, %cst_17 {dimension_numbers = #tpu.dot_dimension_numbers<[1], [0], [0], [1], [0, 0, 1, 1], [], []>} : vector<128x36xf32>, vector<36x8xf32>, vector<128x8xf32> -> vector<128x8xf32>
    %c0_18 = arith.constant 0 : index
    %c0_19 = arith.constant 0 : index
    %32 = vector.load %arg6[%c0_18, %c0_19] : memref<1x8xf32, #tpu.memory_space<vmem>>, vector<1x8xf32>
    %33 = vector.broadcast %32 : vector<1x8xf32> to vector<128x8xf32>
    %34 = arith.addf %31, %33 : vector<128x8xf32>
    %35 = vector.shape_cast %34 : vector<128x8xf32> to vector<1x8x16x8xf32>
    %c0_20 = arith.constant 0 : index
    %c0_21 = arith.constant 0 : index
    %c0_22 = arith.constant 0 : index
    %c0_23 = arith.constant 0 : index
    %36 = vector.load %arg9[%c0_20, %c0_21, %c0_22, %c0_23] : memref<1x8x16x8xf32, #tpu.memory_space<vmem>>, vector<1x8x16x8xf32>
    tpu.vector_store %arg9[%c0_20, %c0_21, %c0_22, %c0_23], %35 {strides = array<i32>} : memref<1x8x16x8xf32, #tpu.memory_space<vmem>>, vector<1x8x16x8xf32>,
    %cst_24 = arith.constant dense<0.000000e+00> : vector<8xf32>
    %37 = vector.multi_reduction <add>, %34, %cst_24 [0] : vector<128x8xf32> to vector<8xf32>
    %38 = vector.shape_cast %37 : vector<8xf32> to vector<1x8xf32>
    %39 = arith.mulf %34, %34 : vector<128x8xf32>
    %cst_25 = arith.constant dense<0.000000e+00> : vector<8xf32>
    %40 = vector.multi_reduction <add>, %39, %cst_25 [0] : vector<128x8xf32> to vector<8xf32>
    %41 = vector.shape_cast %40 : vector<8xf32> to vector<1x8xf32>
    %42 = tpu.concatenate %38, %41 in 0 : vector<1x8xf32>, vector<1x8xf32> -> vector<2x8xf32>
    %43 = vector.shape_cast %42 : vector<2x8xf32> to vector<1x1x2x8xf32>
    %c0_26 = arith.constant 0 : index
    %c0_27 = arith.constant 0 : index
    %c0_28 = arith.constant 0 : index
    %c0_29 = arith.constant 0 : index
    %44 = vector.load %arg10[%c0_26, %c0_27, %c0_28, %c0_29] : memref<1x1x2x8xf32, #tpu.memory_space<vmem>>, vector<1x1x2x8xf32>
    tpu.vector_store %arg10[%c0_26, %c0_27, %c0_28, %c0_29], %43 {strides = array<i32>} : memref<1x1x2x8xf32, #tpu.memory_space<vmem>>, vector<1x1x2x8xf32>,
    return
  }
  func.func @transform_0(%arg0: i32, %arg1: i32) -> (i32, i32, i32, i32) {
    %c0_i32 = arith.constant 0 : i32
    %c0_i32_0 = arith.constant 0 : i32
    %c0_i32_1 = arith.constant 0 : i32
    return %arg0, %arg1, %c0_i32, %c0_i32_0 : i32, i32, i32, i32
  }
  func.func @transform_1(%arg0: i32, %arg1: i32) -> (i32, i32, i32, i32) {
    %c8_i32 = arith.constant 8 : i32
    %0 = arith.muli %arg1, %c8_i32 : i32
    %c1_i32 = arith.constant 1 : i32
    %1 = arith.subi %0, %c1_i32 : i32
    %c0_i32 = arith.constant 0 : i32
    %2 = arith.maxsi %1, %c0_i32 : i32
    %c0_i32_0 = arith.constant 0 : i32
    %c0_i32_1 = arith.constant 0 : i32
    %c0_i32_2 = arith.constant 0 : i32
    return %arg0, %2, %c0_i32_0, %c0_i32_1 : i32, i32, i32, i32
  }
  func.func @transform_2(%arg0: i32, %arg1: i32) -> (i32, i32, i32, i32) {
    %c1_i32 = arith.constant 1 : i32
    %0 = arith.addi %arg1, %c1_i32 : i32
    %c8_i32 = arith.constant 8 : i32
    %1 = arith.muli %0, %c8_i32 : i32
    %c15_i32 = arith.constant 15 : i32
    %2 = arith.minsi %1, %c15_i32 : i32
    %c0_i32 = arith.constant 0 : i32
    %c0_i32_0 = arith.constant 0 : i32
    %c0_i32_1 = arith.constant 0 : i32
    return %arg0, %2, %c0_i32, %c0_i32_0 : i32, i32, i32, i32
  }
  func.func @transform_3(%arg0: i32, %arg1: i32) -> (i32, i32) {
    %c0_i32 = arith.constant 0 : i32
    %c0_i32_0 = arith.constant 0 : i32
    %c0_i32_1 = arith.constant 0 : i32
    return %c0_i32, %c0_i32_0 : i32, i32
  }
  func.func @transform_4(%arg0: i32, %arg1: i32) -> (i32, i32) {
    %c0_i32 = arith.constant 0 : i32
    %c0_i32_0 = arith.constant 0 : i32
    %c0_i32_1 = arith.constant 0 : i32
    return %c0_i32, %c0_i32_0 : i32, i32
  }
  func.func @transform_5(%arg0: i32, %arg1: i32) -> (i32, i32) {
    %c0_i32 = arith.constant 0 : i32
    %c0_i32_0 = arith.constant 0 : i32
    %c0_i32_1 = arith.constant 0 : i32
    return %c0_i32, %c0_i32_0 : i32, i32
  }
  func.func @transform_6(%arg0: i32, %arg1: i32) -> (i32, i32) {
    %c0_i32 = arith.constant 0 : i32
    %c0_i32_0 = arith.constant 0 : i32
    %c0_i32_1 = arith.constant 0 : i32
    return %c0_i32, %c0_i32_0 : i32, i32
  }
  func.func @transform_7(%arg0: i32, %arg1: i32) -> (i32, i32, i32, i32) {
    %c0_i32 = arith.constant 0 : i32
    %c0_i32_0 = arith.constant 0 : i32
    %c0_i32_1 = arith.constant 0 : i32
    return %arg0, %arg1, %c0_i32, %c0_i32_0 : i32, i32, i32, i32
  }
  func.func @transform_8(%arg0: i32, %arg1: i32) -> (i32, i32, i32, i32) {
    %c0_i32 = arith.constant 0 : i32
    %c0_i32_0 = arith.constant 0 : i32
    %c0_i32_1 = arith.constant 0 : i32
    return %arg0, %arg1, %c0_i32, %c0_i32_0 : i32, i32, i32, i32
  }
}

module attributes {stable_mosaic.version = 11 : i64} {
  func.func @_conv_stats_kernel(%arg0: i32, %arg1: i32, %arg2: memref<1x8x16x8xf32, #tpu.memory_space<vmem>>, %arg3: memref<1x1x16x8xf32, #tpu.memory_space<vmem>>, %arg4: memref<1x1x16x8xf32, #tpu.memory_space<vmem>>, %arg5: memref<72x8xf32, #tpu.memory_space<vmem>>, %arg6: memref<1x8xf32, #tpu.memory_space<vmem>>, %arg7: memref<1x8xf32, #tpu.memory_space<vmem>>, %arg8: memref<1x8xf32, #tpu.memory_space<vmem>>, %arg9: memref<1x8x16x8xf32, #tpu.memory_space<vmem>>, %arg10: memref<1x1x2x8xf32, #tpu.memory_space<vmem>>) attributes {dimension_semantics = [#tpu.dimension_semantics<parallel>, #tpu.dimension_semantics<parallel>], iteration_bounds = array<i64: 2, 2>, scalar_prefetch = 0 : i64, scratch_operands = 0 : i64, tpu.core_type = #tpu.core_type<tc>, window_params = [{transform_indices = @transform_0, window_bounds = array<i64: 1, 8, 16, 8>}, {transform_indices = @transform_1, window_bounds = array<i64: 1, 1, 16, 8>}, {transform_indices = @transform_2, window_bounds = array<i64: 1, 1, 16, 8>}, {pipeline_mode = #tpu.pipeline_mode<synchronous>, transform_indices = @transform_3, window_bounds = array<i64: 72, 8>}, {pipeline_mode = #tpu.pipeline_mode<synchronous>, transform_indices = @transform_4, window_bounds = array<i64: 1, 8>}, {pipeline_mode = #tpu.pipeline_mode<synchronous>, transform_indices = @transform_5, window_bounds = array<i64: 1, 8>}, {pipeline_mode = #tpu.pipeline_mode<synchronous>, transform_indices = @transform_6, window_bounds = array<i64: 1, 8>}, {transform_indices = @transform_7, window_bounds = array<i64: 1, 8, 16, 8>}, {transform_indices = @transform_8, window_bounds = array<i64: 1, 1, 2, 8>}]} {
    %c0 = arith.constant 0 : index
    %c0_0 = arith.constant 0 : index
    %c0_1 = arith.constant 0 : index
    %c0_2 = arith.constant 0 : index
    %0 = vector.load %arg2[%c0, %c0_0, %c0_1, %c0_2] : memref<1x8x16x8xf32, #tpu.memory_space<vmem>>, vector<1x8x16x8xf32>
    %1 = vector.shape_cast %0 : vector<1x8x16x8xf32> to vector<8x16x8xf32>
    %c0_3 = arith.constant 0 : index
    %c0_4 = arith.constant 0 : index
    %2 = vector.load %arg7[%c0_3, %c0_4] : memref<1x8xf32, #tpu.memory_space<vmem>>, vector<1x8xf32>
    %3 = vector.shape_cast %2 : vector<1x8xf32> to vector<1x1x8xf32>
    %4 = vector.broadcast %3 : vector<1x1x8xf32> to vector<8x16x8xf32>
    %5 = arith.mulf %1, %4 : vector<8x16x8xf32>
    %c0_5 = arith.constant 0 : index
    %c0_6 = arith.constant 0 : index
    %6 = vector.load %arg8[%c0_5, %c0_6] : memref<1x8xf32, #tpu.memory_space<vmem>>, vector<1x8xf32>
    %7 = vector.shape_cast %6 : vector<1x8xf32> to vector<1x1x8xf32>
    %8 = vector.broadcast %7 : vector<1x1x8xf32> to vector<8x16x8xf32>
    %9 = arith.addf %5, %8 : vector<8x16x8xf32>
    %cst = arith.constant 0.000000e+00 : f32
    %10 = vector.broadcast %cst : f32 to vector<8x16x8xf32>
    %11 = arith.maximumf %9, %10 : vector<8x16x8xf32>
    %c0_7 = arith.constant 0 : index
    %c0_8 = arith.constant 0 : index
    %c0_9 = arith.constant 0 : index
    %c0_10 = arith.constant 0 : index
    %12 = vector.load %arg3[%c0_7, %c0_8, %c0_9, %c0_10] : memref<1x1x16x8xf32, #tpu.memory_space<vmem>>, vector<1x1x16x8xf32>
    %13 = vector.shape_cast %12 : vector<1x1x16x8xf32> to vector<16x8xf32>
    %c0_11 = arith.constant 0 : index
    %c0_12 = arith.constant 0 : index
    %14 = vector.load %arg7[%c0_11, %c0_12] : memref<1x8xf32, #tpu.memory_space<vmem>>, vector<1x8xf32>
    %15 = vector.broadcast %14 : vector<1x8xf32> to vector<16x8xf32>
    %16 = arith.mulf %13, %15 : vector<16x8xf32>
    %c0_13 = arith.constant 0 : index
    %c0_14 = arith.constant 0 : index
    %17 = vector.load %arg8[%c0_13, %c0_14] : memref<1x8xf32, #tpu.memory_space<vmem>>, vector<1x8xf32>
    %18 = vector.broadcast %17 : vector<1x8xf32> to vector<16x8xf32>
    %19 = arith.addf %16, %18 : vector<16x8xf32>
    %cst_15 = arith.constant 0.000000e+00 : f32
    %20 = vector.broadcast %cst_15 : f32 to vector<16x8xf32>
    %21 = arith.maximumf %19, %20 : vector<16x8xf32>
    %c0_16 = arith.constant 0 : index
    %c0_17 = arith.constant 0 : index
    %c0_18 = arith.constant 0 : index
    %c0_19 = arith.constant 0 : index
    %22 = vector.load %arg4[%c0_16, %c0_17, %c0_18, %c0_19] : memref<1x1x16x8xf32, #tpu.memory_space<vmem>>, vector<1x1x16x8xf32>
    %23 = vector.shape_cast %22 : vector<1x1x16x8xf32> to vector<16x8xf32>
    %c0_20 = arith.constant 0 : index
    %c0_21 = arith.constant 0 : index
    %24 = vector.load %arg7[%c0_20, %c0_21] : memref<1x8xf32, #tpu.memory_space<vmem>>, vector<1x8xf32>
    %25 = vector.broadcast %24 : vector<1x8xf32> to vector<16x8xf32>
    %26 = arith.mulf %23, %25 : vector<16x8xf32>
    %c0_22 = arith.constant 0 : index
    %c0_23 = arith.constant 0 : index
    %27 = vector.load %arg8[%c0_22, %c0_23] : memref<1x8xf32, #tpu.memory_space<vmem>>, vector<1x8xf32>
    %28 = vector.broadcast %27 : vector<1x8xf32> to vector<16x8xf32>
    %29 = arith.addf %26, %28 : vector<16x8xf32>
    %cst_24 = arith.constant 0.000000e+00 : f32
    %30 = vector.broadcast %cst_24 : f32 to vector<16x8xf32>
    %31 = arith.maximumf %29, %30 : vector<16x8xf32>
    %c0_i32 = arith.constant 0 : i32
    %32 = arith.cmpi sgt, %arg1, %c0_i32 : i32
    %cst_25 = arith.constant 1.000000e+00 : f32
    %cst_26 = arith.constant 0.000000e+00 : f32
    %33 = arith.select %32, %cst_25, %cst_26 : f32
    %34 = vector.broadcast %33 : f32 to vector<16x8xf32>
    %35 = arith.mulf %21, %34 : vector<16x8xf32>
    %c1_i32 = arith.constant 1 : i32
    %36 = arith.cmpi slt, %arg1, %c1_i32 : i32
    %cst_27 = arith.constant 1.000000e+00 : f32
    %cst_28 = arith.constant 0.000000e+00 : f32
    %37 = arith.select %36, %cst_27, %cst_28 : f32
    %38 = vector.broadcast %37 : f32 to vector<16x8xf32>
    %39 = arith.mulf %31, %38 : vector<16x8xf32>
    %40 = vector.shape_cast %35 : vector<16x8xf32> to vector<1x16x8xf32>
    %41 = vector.shape_cast %39 : vector<16x8xf32> to vector<1x16x8xf32>
    %42 = tpu.concatenate %40, %11, %41 in 0 : vector<1x16x8xf32>, vector<8x16x8xf32>, vector<1x16x8xf32> -> vector<10x16x8xf32>
    %cst_29 = arith.constant 0.000000e+00 : f32
    %43 = vector.broadcast %cst_29 : f32 to vector<10x1x8xf32>
    %44 = tpu.concatenate %43, %42, %43 in 1 : vector<10x1x8xf32>, vector<10x16x8xf32>, vector<10x1x8xf32> -> vector<10x18x8xf32>
    %45 = vector.extract_strided_slice %44 {offsets = [0, 0, 0], sizes = [8, 16, 8], strides = [1, 1, 1]} : vector<10x18x8xf32> to vector<8x16x8xf32>
    %46 = vector.extract_strided_slice %44 {offsets = [0, 1, 0], sizes = [8, 16, 8], strides = [1, 1, 1]} : vector<10x18x8xf32> to vector<8x16x8xf32>
    %47 = vector.extract_strided_slice %44 {offsets = [0, 2, 0], sizes = [8, 16, 8], strides = [1, 1, 1]} : vector<10x18x8xf32> to vector<8x16x8xf32>
    %48 = vector.extract_strided_slice %44 {offsets = [1, 0, 0], sizes = [8, 16, 8], strides = [1, 1, 1]} : vector<10x18x8xf32> to vector<8x16x8xf32>
    %49 = vector.extract_strided_slice %44 {offsets = [1, 1, 0], sizes = [8, 16, 8], strides = [1, 1, 1]} : vector<10x18x8xf32> to vector<8x16x8xf32>
    %50 = vector.extract_strided_slice %44 {offsets = [1, 2, 0], sizes = [8, 16, 8], strides = [1, 1, 1]} : vector<10x18x8xf32> to vector<8x16x8xf32>
    %51 = vector.extract_strided_slice %44 {offsets = [2, 0, 0], sizes = [8, 16, 8], strides = [1, 1, 1]} : vector<10x18x8xf32> to vector<8x16x8xf32>
    %52 = vector.extract_strided_slice %44 {offsets = [2, 1, 0], sizes = [8, 16, 8], strides = [1, 1, 1]} : vector<10x18x8xf32> to vector<8x16x8xf32>
    %53 = vector.extract_strided_slice %44 {offsets = [2, 2, 0], sizes = [8, 16, 8], strides = [1, 1, 1]} : vector<10x18x8xf32> to vector<8x16x8xf32>
    %54 = tpu.concatenate %45, %46, %47, %48, %49, %50, %51, %52, %53 in 2 : vector<8x16x8xf32>, vector<8x16x8xf32>, vector<8x16x8xf32>, vector<8x16x8xf32>, vector<8x16x8xf32>, vector<8x16x8xf32>, vector<8x16x8xf32>, vector<8x16x8xf32>, vector<8x16x8xf32> -> vector<8x16x72xf32>
    %55 = vector.shape_cast %54 : vector<8x16x72xf32> to vector<128x72xf32>
    %c0_30 = arith.constant 0 : index
    %c0_31 = arith.constant 0 : index
    %56 = vector.load %arg5[%c0_30, %c0_31] : memref<72x8xf32, #tpu.memory_space<vmem>>, vector<72x8xf32>
    %cst_32 = arith.constant dense<0.000000e+00> : vector<128x8xf32>
    %57 = tpu.matmul %55, %56, %cst_32 {dimension_numbers = #tpu.dot_dimension_numbers<[1], [0], [0], [1], [0, 0, 1, 1], [], []>} : vector<128x72xf32>, vector<72x8xf32>, vector<128x8xf32> -> vector<128x8xf32>
    %c0_33 = arith.constant 0 : index
    %c0_34 = arith.constant 0 : index
    %58 = vector.load %arg6[%c0_33, %c0_34] : memref<1x8xf32, #tpu.memory_space<vmem>>, vector<1x8xf32>
    %59 = vector.broadcast %58 : vector<1x8xf32> to vector<128x8xf32>
    %60 = arith.addf %57, %59 : vector<128x8xf32>
    %61 = vector.shape_cast %60 : vector<128x8xf32> to vector<1x8x16x8xf32>
    %c0_35 = arith.constant 0 : index
    %c0_36 = arith.constant 0 : index
    %c0_37 = arith.constant 0 : index
    %c0_38 = arith.constant 0 : index
    %62 = vector.load %arg9[%c0_35, %c0_36, %c0_37, %c0_38] : memref<1x8x16x8xf32, #tpu.memory_space<vmem>>, vector<1x8x16x8xf32>
    tpu.vector_store %arg9[%c0_35, %c0_36, %c0_37, %c0_38], %61 {strides = array<i32>} : memref<1x8x16x8xf32, #tpu.memory_space<vmem>>, vector<1x8x16x8xf32>,
    %cst_39 = arith.constant dense<0.000000e+00> : vector<8xf32>
    %63 = vector.multi_reduction <add>, %60, %cst_39 [0] : vector<128x8xf32> to vector<8xf32>
    %64 = vector.shape_cast %63 : vector<8xf32> to vector<1x8xf32>
    %65 = arith.mulf %60, %60 : vector<128x8xf32>
    %cst_40 = arith.constant dense<0.000000e+00> : vector<8xf32>
    %66 = vector.multi_reduction <add>, %65, %cst_40 [0] : vector<128x8xf32> to vector<8xf32>
    %67 = vector.shape_cast %66 : vector<8xf32> to vector<1x8xf32>
    %68 = tpu.concatenate %64, %67 in 0 : vector<1x8xf32>, vector<1x8xf32> -> vector<2x8xf32>
    %69 = vector.shape_cast %68 : vector<2x8xf32> to vector<1x1x2x8xf32>
    %c0_41 = arith.constant 0 : index
    %c0_42 = arith.constant 0 : index
    %c0_43 = arith.constant 0 : index
    %c0_44 = arith.constant 0 : index
    %70 = vector.load %arg10[%c0_41, %c0_42, %c0_43, %c0_44] : memref<1x1x2x8xf32, #tpu.memory_space<vmem>>, vector<1x1x2x8xf32>
    tpu.vector_store %arg10[%c0_41, %c0_42, %c0_43, %c0_44], %69 {strides = array<i32>} : memref<1x1x2x8xf32, #tpu.memory_space<vmem>>, vector<1x1x2x8xf32>,
    return
  }
  func.func @transform_0(%arg0: i32, %arg1: i32) -> (i32, i32, i32, i32) {
    %c0_i32 = arith.constant 0 : i32
    %c0_i32_0 = arith.constant 0 : i32
    %c0_i32_1 = arith.constant 0 : i32
    return %arg0, %arg1, %c0_i32, %c0_i32_0 : i32, i32, i32, i32
  }
  func.func @transform_1(%arg0: i32, %arg1: i32) -> (i32, i32, i32, i32) {
    %c8_i32 = arith.constant 8 : i32
    %0 = arith.muli %arg1, %c8_i32 : i32
    %c1_i32 = arith.constant 1 : i32
    %1 = arith.subi %0, %c1_i32 : i32
    %c0_i32 = arith.constant 0 : i32
    %2 = arith.maxsi %1, %c0_i32 : i32
    %c0_i32_0 = arith.constant 0 : i32
    %c0_i32_1 = arith.constant 0 : i32
    %c0_i32_2 = arith.constant 0 : i32
    return %arg0, %2, %c0_i32_0, %c0_i32_1 : i32, i32, i32, i32
  }
  func.func @transform_2(%arg0: i32, %arg1: i32) -> (i32, i32, i32, i32) {
    %c1_i32 = arith.constant 1 : i32
    %0 = arith.addi %arg1, %c1_i32 : i32
    %c8_i32 = arith.constant 8 : i32
    %1 = arith.muli %0, %c8_i32 : i32
    %c15_i32 = arith.constant 15 : i32
    %2 = arith.minsi %1, %c15_i32 : i32
    %c0_i32 = arith.constant 0 : i32
    %c0_i32_0 = arith.constant 0 : i32
    %c0_i32_1 = arith.constant 0 : i32
    return %arg0, %2, %c0_i32, %c0_i32_0 : i32, i32, i32, i32
  }
  func.func @transform_3(%arg0: i32, %arg1: i32) -> (i32, i32) {
    %c0_i32 = arith.constant 0 : i32
    %c0_i32_0 = arith.constant 0 : i32
    %c0_i32_1 = arith.constant 0 : i32
    return %c0_i32, %c0_i32_0 : i32, i32
  }
  func.func @transform_4(%arg0: i32, %arg1: i32) -> (i32, i32) {
    %c0_i32 = arith.constant 0 : i32
    %c0_i32_0 = arith.constant 0 : i32
    %c0_i32_1 = arith.constant 0 : i32
    return %c0_i32, %c0_i32_0 : i32, i32
  }
  func.func @transform_5(%arg0: i32, %arg1: i32) -> (i32, i32) {
    %c0_i32 = arith.constant 0 : i32
    %c0_i32_0 = arith.constant 0 : i32
    %c0_i32_1 = arith.constant 0 : i32
    return %c0_i32, %c0_i32_0 : i32, i32
  }
  func.func @transform_6(%arg0: i32, %arg1: i32) -> (i32, i32) {
    %c0_i32 = arith.constant 0 : i32
    %c0_i32_0 = arith.constant 0 : i32
    %c0_i32_1 = arith.constant 0 : i32
    return %c0_i32, %c0_i32_0 : i32, i32
  }
  func.func @transform_7(%arg0: i32, %arg1: i32) -> (i32, i32, i32, i32) {
    %c0_i32 = arith.constant 0 : i32
    %c0_i32_0 = arith.constant 0 : i32
    %c0_i32_1 = arith.constant 0 : i32
    return %arg0, %arg1, %c0_i32, %c0_i32_0 : i32, i32, i32, i32
  }
  func.func @transform_8(%arg0: i32, %arg1: i32) -> (i32, i32, i32, i32) {
    %c0_i32 = arith.constant 0 : i32
    %c0_i32_0 = arith.constant 0 : i32
    %c0_i32_1 = arith.constant 0 : i32
    return %arg0, %arg1, %c0_i32, %c0_i32_0 : i32, i32, i32, i32
  }
}

module attributes {stable_mosaic.version = 11 : i64} {
  func.func @_bn_relu_kernel(%arg0: i32, %arg1: i32, %arg2: memref<1x8x16x8xf32, #tpu.memory_space<vmem>>, %arg3: memref<1x8xf32, #tpu.memory_space<vmem>>, %arg4: memref<1x8xf32, #tpu.memory_space<vmem>>, %arg5: memref<1x8x16x8xf32, #tpu.memory_space<vmem>>) attributes {dimension_semantics = [#tpu.dimension_semantics<parallel>, #tpu.dimension_semantics<parallel>], iteration_bounds = array<i64: 2, 2>, scalar_prefetch = 0 : i64, scratch_operands = 0 : i64, tpu.core_type = #tpu.core_type<tc>, window_params = [{transform_indices = @transform_0, window_bounds = array<i64: 1, 8, 16, 8>}, {pipeline_mode = #tpu.pipeline_mode<synchronous>, transform_indices = @transform_1, window_bounds = array<i64: 1, 8>}, {pipeline_mode = #tpu.pipeline_mode<synchronous>, transform_indices = @transform_2, window_bounds = array<i64: 1, 8>}, {transform_indices = @transform_3, window_bounds = array<i64: 1, 8, 16, 8>}]} {
    %c0 = arith.constant 0 : index
    %c0_0 = arith.constant 0 : index
    %c0_1 = arith.constant 0 : index
    %c0_2 = arith.constant 0 : index
    %0 = vector.load %arg2[%c0, %c0_0, %c0_1, %c0_2] : memref<1x8x16x8xf32, #tpu.memory_space<vmem>>, vector<1x8x16x8xf32>
    %c0_3 = arith.constant 0 : index
    %c0_4 = arith.constant 0 : index
    %1 = vector.load %arg3[%c0_3, %c0_4] : memref<1x8xf32, #tpu.memory_space<vmem>>, vector<1x8xf32>
    %2 = vector.shape_cast %1 : vector<1x8xf32> to vector<1x1x1x8xf32>
    %3 = vector.broadcast %2 : vector<1x1x1x8xf32> to vector<1x8x16x8xf32>
    %4 = arith.mulf %0, %3 : vector<1x8x16x8xf32>
    %c0_5 = arith.constant 0 : index
    %c0_6 = arith.constant 0 : index
    %5 = vector.load %arg4[%c0_5, %c0_6] : memref<1x8xf32, #tpu.memory_space<vmem>>, vector<1x8xf32>
    %6 = vector.shape_cast %5 : vector<1x8xf32> to vector<1x1x1x8xf32>
    %7 = vector.broadcast %6 : vector<1x1x1x8xf32> to vector<1x8x16x8xf32>
    %8 = arith.addf %4, %7 : vector<1x8x16x8xf32>
    %cst = arith.constant 0.000000e+00 : f32
    %9 = vector.broadcast %cst : f32 to vector<1x8x16x8xf32>
    %10 = arith.maximumf %8, %9 : vector<1x8x16x8xf32>
    %c0_7 = arith.constant 0 : index
    %c0_8 = arith.constant 0 : index
    %c0_9 = arith.constant 0 : index
    %c0_10 = arith.constant 0 : index
    %11 = vector.load %arg5[%c0_7, %c0_8, %c0_9, %c0_10] : memref<1x8x16x8xf32, #tpu.memory_space<vmem>>, vector<1x8x16x8xf32>
    tpu.vector_store %arg5[%c0_7, %c0_8, %c0_9, %c0_10], %10 {strides = array<i32>} : memref<1x8x16x8xf32, #tpu.memory_space<vmem>>, vector<1x8x16x8xf32>,
    return
  }
  func.func @transform_0(%arg0: i32, %arg1: i32) -> (i32, i32, i32, i32) {
    %c0_i32 = arith.constant 0 : i32
    %c0_i32_0 = arith.constant 0 : i32
    %c0_i32_1 = arith.constant 0 : i32
    return %arg0, %arg1, %c0_i32, %c0_i32_0 : i32, i32, i32, i32
  }
  func.func @transform_1(%arg0: i32, %arg1: i32) -> (i32, i32) {
    %c0_i32 = arith.constant 0 : i32
    %c0_i32_0 = arith.constant 0 : i32
    %c0_i32_1 = arith.constant 0 : i32
    return %c0_i32, %c0_i32_0 : i32, i32
  }
  func.func @transform_2(%arg0: i32, %arg1: i32) -> (i32, i32) {
    %c0_i32 = arith.constant 0 : i32
    %c0_i32_0 = arith.constant 0 : i32
    %c0_i32_1 = arith.constant 0 : i32
    return %c0_i32, %c0_i32_0 : i32, i32
  }
  func.func @transform_3(%arg0: i32, %arg1: i32) -> (i32, i32, i32, i32) {
    %c0_i32 = arith.constant 0 : i32
    %c0_i32_0 = arith.constant 0 : i32
    %c0_i32_1 = arith.constant 0 : i32
    return %arg0, %arg1, %c0_i32, %c0_i32_0 : i32, i32, i32, i32
  }
}

</mosaic_0001>

<llo_original>
// kernel: double_conv.5
$region0: #{double_conv.5}
  #allocation0 [shape = 'u32[]', space=smem, size = 0x4, offset = 0x4, fixed_abs, tag = 'smem constant byte address 0x4 - core index']
  #allocation1 [shape = 'u32[144,128]{1,0:T(1,128)}', space=vmem, size = 0x12000, scoped, tag = 'internal scratch']
  %s0 = inlined_call_operand.vmem [shape: f32[2,16,16,8], index: 0, kind: input, shape index: {}]
  %s1 = inlined_call_operand.vmem [shape: f32[1,8], index: 1, kind: input, shape index: {}]
  %s2 = inlined_call_operand.vmem [shape: f32[1,8], index: 2, kind: input, shape index: {}]
  %s3 = inlined_call_operand.vmem [shape: f32[2,16,16,8], index: 3, kind: output, shape index: {}]
  %s4 = sld [smem:[#allocation0]]
  $region45: #{double_conv.5} parent=0
    _
  %s6 = ssub.s32 1, %s4
  %s7 = scalar_select 0, %s6, %s4
  loop: start=0, step=1, limit=6
  $region2: #{double_conv.5} parent=0 // loop_pre_header
    _
  $region3: #{double_conv.5} parent=0 // loop_header
    %s9 = sphi 0, %s13
    %p10 = scmp.ge.s32.totalorder %s9, 6
    %s16 = sphi 0, %s28
    %s17 = sphi 0, %s24
    %s18 = sphi 0, %s16
    %s19 = sphi 0, %s17
    %s20 = sphi 0, %s18
    %s21 = sphi 0, %s19
    %s33 = sphi 0, %s35
    %s36 = sphi 0, %s33
    %s37 = sphi 0, %s36
    %s53 = sphi 0, %s37
    %s57 = sphi 0, %s57
    %s59 = sphi 0, %s57
    %s60 = sphi 0, %s59
    %s74 = sphi 0, %s60
    %s78 = sphi 0, %s78
    %s80 = sphi 0, %s78
    %s81 = sphi 0, %s80
    %s95 = sphi 0, %s81
    %s103 = sphi 0, %s105
    %s106 = sphi 0, %s103
    %s107 = sphi 0, %s106
    %s123 = sphi 0, %s107
  $region4: #{double_conv.5} parent=0 // loop_header_branch
    %12 = sbr.rel (%p10) target = $region8
  $region5: #{double_conv.5} parent=0 // loop_body
    %s14 = ssub.s32 %s9, 1
    %s15 = ssub.s32 %s9, 2
    %s22 = sadd.s32 1, %s17
    %p23 = scmp.ge.s32.totalorder %s22, 2
    %s24 = scalar_select %p23, 0, %s22
    %s25 = sadd.s32 1, %s16
    %s26 = scalar_select %p23, %s25, %s16
    %p27 = scmp.ge.s32.totalorder %s26, 2
    %s28 = scalar_select %p27, 0, %s26
    %s29 = ssub.s32 %s16, %s28
    %s30 = ssub.s32 %s17, %s24
    %s31 = sor.u32 %s29, %s30
    %p32 = scmp.eq.s32.totalorder %s31, 0
    %s34 = sadd.s32 %s33, 1
    %s35 = scalar_select %p32, %s33, %s34
    %p38 = pneg %p32
    %p39 = scmp.eq.s32.totalorder %s9, 3
    %p40 = por %p38, %p39
    %p41 = scmp.ne.s32.totalorder %s33, %s36
    %p42 = scmp.eq.s32.totalorder %s9, 0
    %p43 = por %p41, %p42
    %p44 = scmp.ne.s32.totalorder %s33, %s36
    %p45 = scmp.eq.s32.totalorder %s14, 3
    %p46 = por %p44, %p45
    %p47 = scmp.ne.s32.totalorder %s36, %s37
    %p48 = scmp.eq.s32.totalorder %s14, 0
    %p49 = por %p47, %p48
    %p50 = scmp.ne.s32.totalorder %s36, %s37
    %p51 = scmp.eq.s32.totalorder %s15, 3
    %p52 = por %p50, %p51
    %p54 = scmp.ne.s32.totalorder %s37, %s53
    %p55 = scmp.eq.s32.totalorder %s15, 0
    %p56 = por %p54, %p55
    %s58 = sadd.s32 %s57, 1
    %p61 = scmp.eq.s32.totalorder %s9, 3
    %p62 = scmp.ne.s32.totalorder %s57, %s59
    %p63 = scmp.eq.s32.totalorder %s9, 0
    %p64 = por %p62, %p63
    %p65 = scmp.ne.s32.totalorder %s57, %s59
    %p66 = scmp.eq.s32.totalorder %s14, 3
    %p67 = por %p65, %p66
    %p68 = scmp.ne.s32.totalorder %s59, %s60
    %p69 = scmp.eq.s32.totalorder %s14, 0
    %p70 = por %p68, %p69
    %p71 = scmp.ne.s32.totalorder %s59, %s60
    %p72 = scmp.eq.s32.totalorder %s15, 3
    %p73 = por %p71, %p72
    %p75 = scmp.ne.s32.totalorder %s60, %s74
    %p76 = scmp.eq.s32.totalorder %s15, 0
    %p77 = por %p75, %p76
    %s79 = sadd.s32 %s78, 1
    %p82 = scmp.eq.s32.totalorder %s9, 3
    %p83 = scmp.ne.s32.totalorder %s78, %s80
    %p84 = scmp.eq.s32.totalorder %s9, 0
    %p85 = por %p83, %p84
    %p86 = scmp.ne.s32.totalorder %s78, %s80
    %p87 = scmp.eq.s32.totalorder %s14, 3
    %p88 = por %p86, %p87
    %p89 = scmp.ne.s32.totalorder %s80, %s81
    %p90 = scmp.eq.s32.totalorder %s14, 0
    %p91 = por %p89, %p90
    %p92 = scmp.ne.s32.totalorder %s80, %s81
    %p93 = scmp.eq.s32.totalorder %s15, 3
    %p94 = por %p92, %p93
    %p96 = scmp.ne.s32.totalorder %s81, %s95
    %p97 = scmp.eq.s32.totalorder %s15, 0
    %p98 = por %p96, %p97
    %s99 = ssub.s32 %s16, %s28
    %s100 = ssub.s32 %s17, %s24
    %s101 = sor.u32 %s99, %s100
    %p102 = scmp.eq.s32.totalorder %s101, 0
    %s104 = sadd.s32 %s103, 1
    %s105 = scalar_select %p102, %s103, %s104
    %p108 = pneg %p102
    %p109 = scmp.eq.s32.totalorder %s9, 3
    %p110 = por %p108, %p109
    %p111 = scmp.ne.s32.totalorder %s103, %s106
    %p112 = scmp.eq.s32.totalorder %s9, 0
    %p113 = por %p111, %p112
    %p114 = scmp.ne.s32.totalorder %s103, %s106
    %p115 = scmp.eq.s32.totalorder %s14, 3
    %p116 = por %p114, %p115
    %p117 = scmp.ne.s32.totalorder %s106, %s107
    %p118 = scmp.eq.s32.totalorder %s14, 0
    %p119 = por %p117, %p118
    %p120 = scmp.ne.s32.totalorder %s106, %s107
    %p121 = scmp.eq.s32.totalorder %s15, 3
    %p122 = por %p120, %p121
    %p124 = scmp.ne.s32.totalorder %s107, %s123
    %p125 = scmp.eq.s32.totalorder %s15, 0
    %p126 = por %p124, %p125
    %p127 = scmp.le.s32.totalorder 1, %s9
    %p128 = scmp.lt.s32.totalorder %s9, 5
    %p129 = pnand %p127, %p128
    %p130 = pneg %p129
    // Predicated region
    $region9: #{double_conv.5} parent=5 // pred_check
      _
    $region10: #{double_conv.5} parent=5 // pred_check_branch
      %132 = sbr.rel (%p129) target = $region12
    $region11: #{double_conv.5} parent=5 // pred_region
      %s133 = ssub.s32 %s9, 1
      // Predicated region
      $region13: #{double_conv.5} parent=11 // pred_check
        %p134 = pneg %p70
      $region14: #{double_conv.5} parent=11 // pred_check_branch
        %136 = sbr.rel (%p134) target = $region16
      $region15: #{double_conv.5} parent=11 // pred_region
        _
      $region16: #{double_conv.5} parent=11 // pred_fallthru
        _
      // Predicated region
      $region17: #{double_conv.5} parent=11 // pred_check
        %p137 = pneg %p91
      $region18: #{double_conv.5} parent=11 // pred_check_branch
        %139 = sbr.rel (%p137) target = $region20
      $region19: #{double_conv.5} parent=11 // pred_region
        _
      $region20: #{double_conv.5} parent=11 // pred_fallthru
        _
    $region12: #{double_conv.5} parent=5 // pred_fallthru
      _
    %p140 = scmp.lt.s32.totalorder %s9, 4
    // Predicated region
    $region21: #{double_conv.5} parent=5 // pred_check
      %p141 = pneg %p140
    $region22: #{double_conv.5} parent=5 // pred_check_branch
      %143 = sbr.rel (%p141) target = $region24
    $region23: #{double_conv.5} parent=5 // pred_region
      // Predicated region
      $region25: #{double_conv.5} parent=23 // pred_check
        %p144 = pneg %p43
      $region26: #{double_conv.5} parent=23 // pred_check_branch
        %146 = sbr.rel (%p144) target = $region28
      $region27: #{double_conv.5} parent=23 // pred_region
        %s147 = smul.u32 8, %s17
        %p148 = scmp.lt.s32.totalorder %s16, 1
        %s149 = scalar_select %p148, %s16, 1
        %p150 = scmp.lt.s32.totalorder %s147, 15
        %s151 = scalar_select %p150, %s147, 15
        %s152 = smul.addr %s151, 2
        %s153 = smul.addr %s149, 32
        %s154 = sadd.s32 %s152, %s153
        %s155 = smul.addr %s154, 8
        %s156 = scalar_lea.vmem %s0, %s155
        %s157 = smul.u32 8, %s17
      $region28: #{double_conv.5} parent=23 // pred_fallthru
        _
    $region24: #{double_conv.5} parent=5 // pred_fallthru
      _
    %p158 = scmp.le.s32.totalorder 1, %s9
    %p159 = scmp.lt.s32.totalorder %s9, 5
    %p160 = pnand %p158, %p159
    %p161 = pneg %p160
    // Predicated region
    $region29: #{double_conv.5} parent=5 // pred_check
      _
    $region30: #{double_conv.5} parent=5 // pred_check_branch
      %163 = sbr.rel (%p160) target = $region32
    $region31: #{double_conv.5} parent=5 // pred_region
      %s164 = ssub.s32 %s9, 1
      %s165 = smul.u32 8, %s19
      %p166 = scmp.lt.s32.totalorder %s18, 1
      %s167 = scalar_select %p166, %s18, 1
      %p168 = scmp.lt.s32.totalorder %s165, 15
      %s169 = scalar_select %p168, %s165, 15
      %s170 = smul.addr %s169, 2
      %s171 = smul.addr %s167, 32
      %s172 = sadd.s32 %s170, %s171
      %s173 = smul.addr %s172, 8
      %s174 = scalar_lea.vmem %s0, %s173
      %p175 = pneg %p49
      %p176 = pneg %p46
      %p177 = pneg %p70
      %p178 = pneg %p67
      %p179 = pneg %p91
      %p180 = pneg %p88
      %p181 = pneg %p119
      %p182 = pneg %p116
      %s183 = smul.u32 8, %s19
      %p184 = scmp.lt.s32.totalorder %s18, 1
      %s185 = scalar_select %p184, %s18, 1
      %p186 = scmp.lt.s32.totalorder %s183, 15
      %s187 = scalar_select %p186, %s183, 15
      %s188 = smul.addr %s187, 2
      %s189 = smul.addr %s185, 32
      %s190 = sadd.s32 %s188, %s189
      %s191 = smul.addr %s190, 8
      %s192 = scalar_lea.vmem %s3, %s191
      %s193 = smul.u32 8, %s19
      %p194 = scmp.lt.s32.totalorder %s18, 1
      %s195 = scalar_select %p194, %s18, 1
      %p196 = scmp.lt.s32.totalorder %s193, 15
      %s197 = scalar_select %p196, %s193, 15
      %s198 = smul.addr %s197, 2
      %s199 = smul.addr %s195, 32
      %s200 = sadd.s32 %s198, %s199
      %s201 = smul.addr %s200, 8
      %s202 = scalar_lea.vmem %s0, %s201
      %s203 = smul.u32 8, %s19
      %s204 = smul.u32 8, %s19
      %p205 = scmp.lt.s32.totalorder %s18, 1
      %s206 = scalar_select %p205, %s18, 1
      %p207 = scmp.lt.s32.totalorder %s204, 15
      %s208 = scalar_select %p207, %s204, 15
      %s209 = smul.addr %s208, 2
      %s210 = smul.addr %s206, 32
      %s211 = sadd.s32 %s209, %s210
      %s212 = smul.addr %s211, 8
      %s213 = scalar_lea.vmem %s3, %s212
      %s214 = smul.u32 8, %s19
      %v215 = vld [vmem:[%s202] sm:$0xff]
      %v216 = vld [vmem:[%s202 + $0x8] sm:$0xff]
      %v217 = vld [vmem:[%s202 + $0x10] sm:$0xff]
      %v218 = vld [vmem:[%s202 + $0x18] sm:$0xff]
      %v219 = vld [vmem:[%s202 + $0x20] sm:$0xff]
      %v220 = vld [vmem:[%s202 + $0x28] sm:$0xff]
      %v221 = vld [vmem:[%s202 + $0x30] sm:$0xff]
      %v222 = vld [vmem:[%s202 + $0x38] sm:$0xff]
      %v223 = vld [vmem:[%s202 + $0x40] sm:$0xff]
      %v224 = vld [vmem:[%s202 + $0x48] sm:$0xff]
      %v225 = vld [vmem:[%s202 + $0x50] sm:$0xff]
      %v226 = vld [vmem:[%s202 + $0x58] sm:$0xff]
      %v227 = vld [vmem:[%s202 + $0x60] sm:$0xff]
      %v228 = vld [vmem:[%s202 + $0x68] sm:$0xff]
      %v229 = vld [vmem:[%s202 + $0x70] sm:$0xff]
      %v230 = vld [vmem:[%s202 + $0x78] sm:$0xff]
      %v231 = vld [vmem:[%s1] sm:$0x1]
      %v233 = vlaneseq
      %v234 = vshrl.u32 %v233, 7
      %v235 = vsub.s32 0, %v234
      %v236 = vrot.slane %v231, %v235
      %v238 = vmul.f32 %v215, %v236
      %v239 = vmul.f32 %v216, %v236
      %v240 = vmul.f32 %v217, %v236
      %v241 = vmul.f32 %v218, %v236
      %v242 = vmul.f32 %v219, %v236
      %v243 = vmul.f32 %v220, %v236
      %v244 = vmul.f32 %v221, %v236
      %v245 = vmul.f32 %v222, %v236
      %v246 = vmul.f32 %v223, %v236
      %v247 = vmul.f32 %v224, %v236
      %v248 = vmul.f32 %v225, %v236
      %v249 = vmul.f32 %v226, %v236
      %v250 = vmul.f32 %v227, %v236
      %v251 = vmul.f32 %v228, %v236
      %v252 = vmul.f32 %v229, %v236
      %v253 = vmul.f32 %v230, %v236
      %v254 = vld [vmem:[%s2] sm:$0x1]
      %v256 = vlaneseq
      %v257 = vshrl.u32 %v256, 7
      %v258 = vsub.s32 0, %v257
      %v259 = vrot.slane %v254, %v258
      %v261 = vadd.f32 %v238, %v259
      %v262 = vadd.f32 %v239, %v259
      %v263 = vadd.f32 %v240, %v259
      %v264 = vadd.f32 %v241, %v259
      %v265 = vadd.f32 %v242, %v259
      %v266 = vadd.f32 %v243, %v259
      %v267 = vadd.f32 %v244, %v259
      %v268 = vadd.f32 %v245, %v259
      %v269 = vadd.f32 %v246, %v259
      %v270 = vadd.f32 %v247, %v259
      %v271 = vadd.f32 %v248, %v259
      %v272 = vadd.f32 %v249, %v259
      %v273 = vadd.f32 %v250, %v259
      %v274 = vadd.f32 %v251, %v259
      %v275 = vadd.f32 %v252, %v259
      %v276 = vadd.f32 %v253, %v259
      %v277 = vmax.f32 %v261, 0.0
      %v278 = vmax.f32 %v262, 0.0
      %v279 = vmax.f32 %v263, 0.0
      %v280 = vmax.f32 %v264, 0.0
      %v281 = vmax.f32 %v265, 0.0
      %v282 = vmax.f32 %v266, 0.0
      %v283 = vmax.f32 %v267, 0.0
      %v284 = vmax.f32 %v268, 0.0
      %v285 = vmax.f32 %v269, 0.0
      %v286 = vmax.f32 %v270, 0.0
      %v287 = vmax.f32 %v271, 0.0
      %v288 = vmax.f32 %v272, 0.0
      %v289 = vmax.f32 %v273, 0.0
      %v290 = vmax.f32 %v274, 0.0
      %v291 = vmax.f32 %v275, 0.0
      %v292 = vmax.f32 %v276, 0.0
      %vm293 = vcmask 64512
      %294 = vst.msk [vmem:[%s213] sm:$0xff] %vm293, %v277
      %295 = vst.msk [vmem:[%s213 + $0x8] sm:$0xff] %vm293, %v278
      %296 = vst.msk [vmem:[%s213 + $0x10] sm:$0xff] %vm293, %v279
      %297 = vst.msk [vmem:[%s213 + $0x18] sm:$0xff] %vm293, %v280
      %298 = vst.msk [vmem:[%s213 + $0x20] sm:$0xff] %vm293, %v281
      %299 = vst.msk [vmem:[%s213 + $0x28] sm:$0xff] %vm293, %v282
      %300 = vst.msk [vmem:[%s213 + $0x30] sm:$0xff] %vm293, %v283
      %301 = vst.msk [vmem:[%s213 + $0x38] sm:$0xff] %vm293, %v284
      %302 = vst.msk [vmem:[%s213 + $0x40] sm:$0xff] %vm293, %v285
      %303 = vst.msk [vmem:[%s213 + $0x48] sm:$0xff] %vm293, %v286
      %304 = vst.msk [vmem:[%s213 + $0x50] sm:$0xff] %vm293, %v287
      %305 = vst.msk [vmem:[%s213 + $0x58] sm:$0xff] %vm293, %v288
      %306 = vst.msk [vmem:[%s213 + $0x60] sm:$0xff] %vm293, %v289
      %307 = vst.msk [vmem:[%s213 + $0x68] sm:$0xff] %vm293, %v290
      %308 = vst.msk [vmem:[%s213 + $0x70] sm:$0xff] %vm293, %v291
      %309 = vst.msk [vmem:[%s213 + $0x78] sm:$0xff] %vm293, %v292
      %s310 = smul.u32 8, %s19
      %p311 = scmp.lt.s32.totalorder %s18, 1
      %s312 = scalar_select %p311, %s18, 1
      %p313 = scmp.lt.s32.totalorder %s310, 15
      %s314 = scalar_select %p313, %s310, 15
      %s315 = smul.addr %s314, 2
      %s316 = smul.addr %s312, 32
      %s317 = sadd.s32 %s315, %s316
      %s318 = smul.addr %s317, 8
      %s319 = scalar_lea.vmem %s3, %s318
      // Predicated region
      $region33: #{double_conv.5} parent=31 // pred_check
        %p320 = pneg %p116
      $region34: #{double_conv.5} parent=31 // pred_check_branch
        %322 = sbr.rel (%p320) target = $region36
      $region35: #{double_conv.5} parent=31 // pred_region
        %s323 = smul.u32 8, %s19
      $region36: #{double_conv.5} parent=31 // pred_fallthru
        _
    $region32: #{double_conv.5} parent=5 // pred_fallthru
      _
    %p324 = scmp.le.s32.totalorder 2, %s9
    // Predicated region
    $region37: #{double_conv.5} parent=5 // pred_check
      %p325 = pneg %p324
    $region38: #{double_conv.5} parent=5 // pred_check_branch
      %327 = sbr.rel (%p325) target = $region40
    $region39: #{double_conv.5} parent=5 // pred_region
      %s328 = ssub.s32 %s9, 2
      // Predicated region
      $region41: #{double_conv.5} parent=39 // pred_check
        %p329 = pneg %p122
      $region42: #{double_conv.5} parent=39 // pred_check_branch
        %331 = sbr.rel (%p329) target = $region44
      $region43: #{double_conv.5} parent=39 // pred_region
        %s332 = smul.u32 8, %s21
        %p333 = scmp.lt.s32.totalorder %s20, 1
        %s334 = scalar_select %p333, %s20, 1
        %p335 = scmp.lt.s32.totalorder %s332, 15
        %s336 = scalar_select %p335, %s332, 15
        %s337 = smul.addr %s336, 2
        %s338 = smul.addr %s334, 32
        %s339 = sadd.s32 %s337, %s338
        %s340 = smul.addr %s339, 8
        %s341 = scalar_lea.vmem %s3, %s340
      $region44: #{double_conv.5} parent=39 // pred_fallthru
        _
    $region40: #{double_conv.5} parent=5 // pred_fallthru
      _
  $region6: #{double_conv.5} parent=0 // loop_footer
    %s13 = sadd.s32 1, %s9
  $region7: #{double_conv.5} parent=0 // loop_footer_branch
    %8 = sbr.rel target = $region3
  $region8: #{double_conv.5} parent=0 // loop_exit
    _

// kernel: double_conv.3
$region0: #{double_conv.3}
  #allocation0 [shape = 'u32[]', space=smem, size = 0x4, offset = 0x4, fixed_abs, tag = 'smem constant byte address 0x4 - core index']
  #allocation1 [shape = 'u32[144,128]{1,0:T(1,128)}', space=vmem, size = 0x12000, scoped, tag = 'internal scratch']
  %s0 = inlined_call_operand.vmem [shape: f32[2,16,16,4], index: 0, kind: input, shape index: {}, may-alias: {0,1,2}]
  %s1 = inlined_call_operand.vmem [shape: f32[2,16,16,4], index: 1, kind: input, shape index: {}, may-alias: {0,1,2}]
  %s2 = inlined_call_operand.vmem [shape: f32[2,16,16,4], index: 2, kind: input, shape index: {}, may-alias: {0,1,2}]
  %s3 = inlined_call_operand.vmem [shape: f32[36,8], index: 3, kind: input, shape index: {}]
  %s4 = inlined_call_operand.vmem [shape: f32[1,8], index: 4, kind: input, shape index: {}]
  %s5 = inlined_call_operand.vmem [shape: f32[1,4], index: 5, kind: input, shape index: {}]
  %s6 = inlined_call_operand.vmem [shape: f32[1,4], index: 6, kind: input, shape index: {}]
  %s7 = inlined_call_operand.vmem [shape: f32[2,16,16,8], index: 7, kind: output, shape index: {0}]
  %s8 = inlined_call_operand.vmem [shape: f32[2,2,2,8], index: 8, kind: output, shape index: {1}]
  %9 = xla_tuple %s7, %s8
  %s10 = sld [smem:[#allocation0]]
  $region69: #{double_conv.3} parent=0
    _
  %s12 = ssub.s32 1, %s10
  %s13 = scalar_select 0, %s12, %s10
  loop: start=0, step=1, limit=6
  $region2: #{double_conv.3} parent=0 // loop_pre_header
    _
  $region3: #{double_conv.3} parent=0 // loop_header
    %s15 = sphi 0, %s19
    %p16 = scmp.ge.s32.totalorder %s15, 6
    %s22 = sphi 0, %s34
    %s23 = sphi 0, %s30
    %s24 = sphi 0, %s22
    %s25 = sphi 0, %s23
    %s26 = sphi 0, %s24
    %s27 = sphi 0, %s25
    %s39 = sphi 0, %s41
    %s42 = sphi 0, %s39
    %s43 = sphi 0, %s42
    %s59 = sphi 0, %s43
    %s75 = sphi 0, %s77
    %s78 = sphi 0, %s75
    %s79 = sphi 0, %s78
    %s95 = sphi 0, %s79
    %s111 = sphi 0, %s113
    %s114 = sphi 0, %s111
    %s115 = sphi 0, %s114
    %s131 = sphi 0, %s115
    %s135 = sphi 0, %s135
    %s137 = sphi 0, %s135
    %s138 = sphi 0, %s137
    %s152 = sphi 0, %s138
    %s156 = sphi 0, %s156
    %s158 = sphi 0, %s156
    %s159 = sphi 0, %s158
    %s173 = sphi 0, %s159
    %s177 = sphi 0, %s177
    %s179 = sphi 0, %s177
    %s180 = sphi 0, %s179
    %s194 = sphi 0, %s180
    %s198 = sphi 0, %s198
    %s200 = sphi 0, %s198
    %s201 = sphi 0, %s200
    %s215 = sphi 0, %s201
    %s223 = sphi 0, %s225
    %s226 = sphi 0, %s223
    %s227 = sphi 0, %s226
    %s243 = sphi 0, %s227
    %s251 = sphi 0, %s253
    %s254 = sphi 0, %s251
    %s255 = sphi 0, %s254
    %s271 = sphi 0, %s255
  $region4: #{double_conv.3} parent=0 // loop_header_branch
    %18 = sbr.rel (%p16) target = $region8
  $region5: #{double_conv.3} parent=0 // loop_body
    %s20 = ssub.s32 %s15, 1
    %s21 = ssub.s32 %s15, 2
    %s28 = sadd.s32 1, %s23
    %p29 = scmp.ge.s32.totalorder %s28, 2
    %s30 = scalar_select %p29, 0, %s28
    %s31 = sadd.s32 1, %s22
    %s32 = scalar_select %p29, %s31, %s22
    %p33 = scmp.ge.s32.totalorder %s32, 2
    %s34 = scalar_select %p33, 0, %s32
    %s35 = ssub.s32 %s22, %s34
    %s36 = ssub.s32 %s23, %s30
    %s37 = sor.u32 %s35, %s36
    %p38 = scmp.eq.s32.totalorder %s37, 0
    %s40 = sadd.s32 %s39, 1
    %s41 = scalar_select %p38, %s39, %s40
    %p44 = pneg %p38
    %p45 = scmp.eq.s32.totalorder %s15, 3
    %p46 = por %p44, %p45
    %p47 = scmp.ne.s32.totalorder %s39, %s42
    %p48 = scmp.eq.s32.totalorder %s15, 0
    %p49 = por %p47, %p48
    %p50 = scmp.ne.s32.totalorder %s39, %s42
    %p51 = scmp.eq.s32.totalorder %s20, 3
    %p52 = por %p50, %p51
    %p53 = scmp.ne.s32.totalorder %s42, %s43
    %p54 = scmp.eq.s32.totalorder %s20, 0
    %p55 = por %p53, %p54
    %p56 = scmp.ne.s32.totalorder %s42, %s43
    %p57 = scmp.eq.s32.totalorder %s21, 3
    %p58 = por %p56, %p57
    %p60 = scmp.ne.s32.totalorder %s43, %s59
    %p61 = scmp.eq.s32.totalorder %s21, 0
    %p62 = por %p60, %p61
    %s63 = smul.u32 %s23, 8
    %s64 = ssub.s32 %s63, 1
    %p65 = scmp.gt.s32.totalorder %s64, 0
    %s66 = scalar_select %p65, %s64, 0
    %s67 = smul.u32 %s30, 8
    %s68 = ssub.s32 %s67, 1
    %p69 = scmp.gt.s32.totalorder %s68, 0
    %s70 = scalar_select %p69, %s68, 0
    %s71 = ssub.s32 %s22, %s34
    %s72 = ssub.s32 %s66, %s70
    %s73 = sor.u32 %s71, %s72
    %p74 = scmp.eq.s32.totalorder %s73, 0
    %s76 = sadd.s32 %s75, 1
    %s77 = scalar_select %p74, %s75, %s76
    %p80 = pneg %p74
    %p81 = scmp.eq.s32.totalorder %s15, 3
    %p82 = por %p80, %p81
    %p83 = scmp.ne.s32.totalorder %s75, %s78
    %p84 = scmp.eq.s32.totalorder %s15, 0
    %p85 = por %p83, %p84
    %p86 = scmp.ne.s32.totalorder %s75, %s78
    %p87 = scmp.eq.s32.totalorder %s20, 3
    %p88 = por %p86, %p87
    %p89 = scmp.ne.s32.totalorder %s78, %s79
    %p90 = scmp.eq.s32.totalorder %s20, 0
    %p91 = por %p89, %p90
    %p92 = scmp.ne.s32.totalorder %s78, %s79
    %p93 = scmp.eq.s32.totalorder %s21, 3
    %p94 = por %p92, %p93
    %p96 = scmp.ne.s32.totalorder %s79, %s95
    %p97 = scmp.eq.s32.totalorder %s21, 0
    %p98 = por %p96, %p97
    %s99 = sadd.s32 %s23, 1
    %s100 = smul.u32 %s99, 8
    %p101 = scmp.lt.s32.totalorder %s100, 15
    %s102 = scalar_select %p101, %s100, 15
    %s103 = sadd.s32 %s30, 1
    %s104 = smul.u32 %s103, 8
    %p105 = scmp.lt.s32.totalorder %s104, 15
    %s106 = scalar_select %p105, %s104, 15
    %s107 = ssub.s32 %s22, %s34
    %s108 = ssub.s32 %s102, %s106
    %s109 = sor.u32 %s107, %s108
    %p110 = scmp.eq.s32.totalorder %s109, 0
    %s112 = sadd.s32 %s111, 1
    %s113 = scalar_select %p110, %s111, %s112
    %p116 = pneg %p110
    %p117 = scmp.eq.s32.totalorder %s15, 3
    %p118 = por %p116, %p117
    %p119 = scmp.ne.s32.totalorder %s111, %s114
    %p120 = scmp.eq.s32.totalorder %s15, 0
    %p121 = por %p119, %p120
    %p122 = scmp.ne.s32.totalorder %s111, %s114
    %p123 = scmp.eq.s32.totalorder %s20, 3
    %p124 = por %p122, %p123
    %p125 = scmp.ne.s32.totalorder %s114, %s115
    %p126 = scmp.eq.s32.totalorder %s20, 0
    %p127 = por %p125, %p126
    %p128 = scmp.ne.s32.totalorder %s114, %s115
    %p129 = scmp.eq.s32.totalorder %s21, 3
    %p130 = por %p128, %p129
    %p132 = scmp.ne.s32.totalorder %s115, %s131
    %p133 = scmp.eq.s32.totalorder %s21, 0
    %p134 = por %p132, %p133
    %s136 = sadd.s32 %s135, 1
    %p139 = scmp.eq.s32.totalorder %s15, 3
    %p140 = scmp.ne.s32.totalorder %s135, %s137
    %p141 = scmp.eq.s32.totalorder %s15, 0
    %p142 = por %p140, %p141
    %p143 = scmp.ne.s32.totalorder %s135, %s137
    %p144 = scmp.eq.s32.totalorder %s20, 3
    %p145 = por %p143, %p144
    %p146 = scmp.ne.s32.totalorder %s137, %s138
    %p147 = scmp.eq.s32.totalorder %s20, 0
    %p148 = por %p146, %p147
    %p149 = scmp.ne.s32.totalorder %s137, %s138
    %p150 = scmp.eq.s32.totalorder %s21, 3
    %p151 = por %p149, %p150
    %p153 = scmp.ne.s32.totalorder %s138, %s152
    %p154 = scmp.eq.s32.totalorder %s21, 0
    %p155 = por %p153, %p154
    %s157 = sadd.s32 %s156, 1
    %p160 = scmp.eq.s32.totalorder %s15, 3
    %p161 = scmp.ne.s32.totalorder %s156, %s158
    %p162 = scmp.eq.s32.totalorder %s15, 0
    %p163 = por %p161, %p162
    %p164 = scmp.ne.s32.totalorder %s156, %s158
    %p165 = scmp.eq.s32.totalorder %s20, 3
    %p166 = por %p164, %p165
    %p167 = scmp.ne.s32.totalorder %s158, %s159
    %p168 = scmp.eq.s32.totalorder %s20, 0
    %p169 = por %p167, %p168
    %p170 = scmp.ne.s32.totalorder %s158, %s159
    %p171 = scmp.eq.s32.totalorder %s21, 3
    %p172 = por %p170, %p171
    %p174 = scmp.ne.s32.totalorder %s159, %s173
    %p175 = scmp.eq.s32.totalorder %s21, 0
    %p176 = por %p174, %p175
    %s178 = sadd.s32 %s177, 1
    %p181 = scmp.eq.s32.totalorder %s15, 3
    %p182 = scmp.ne.s32.totalorder %s177, %s179
    %p183 = scmp.eq.s32.totalorder %s15, 0
    %p184 = por %p182, %p183
    %p185 = scmp.ne.s32.totalorder %s177, %s179
    %p186 = scmp.eq.s32.totalorder %s20, 3
    %p187 = por %p185, %p186
    %p188 = scmp.ne.s32.totalorder %s179, %s180
    %p189 = scmp.eq.s32.totalorder %s20, 0
    %p190 = por %p188, %p189
    %p191 = scmp.ne.s32.totalorder %s179, %s180
    %p192 = scmp.eq.s32.totalorder %s21, 3
    %p193 = por %p191, %p192
    %p195 = scmp.ne.s32.totalorder %s180, %s194
    %p196 = scmp.eq.s32.totalorder %s21, 0
    %p197 = por %p195, %p196
    %s199 = sadd.s32 %s198, 1
    %p202 = scmp.eq.s32.totalorder %s15, 3
    %p203 = scmp.ne.s32.totalorder %s198, %s200
    %p204 = scmp.eq.s32.totalorder %s15, 0
    %p205 = por %p203, %p204
    %p206 = scmp.ne.s32.totalorder %s198, %s200
    %p207 = scmp.eq.s32.totalorder %s20, 3
    %p208 = por %p206, %p207
    %p209 = scmp.ne.s32.totalorder %s200, %s201
    %p210 = scmp.eq.s32.totalorder %s20, 0
    %p211 = por %p209, %p210
    %p212 = scmp.ne.s32.totalorder %s200, %s201
    %p213 = scmp.eq.s32.totalorder %s21, 3
    %p214 = por %p212, %p213
    %p216 = scmp.ne.s32.totalorder %s201, %s215
    %p217 = scmp.eq.s32.totalorder %s21, 0
    %p218 = por %p216, %p217
    %s219 = ssub.s32 %s22, %s34
    %s220 = ssub.s32 %s23, %s30
    %s221 = sor.u32 %s219, %s220
    %p222 = scmp.eq.s32.totalorder %s221, 0
    %s224 = sadd.s32 %s223, 1
    %s225 = scalar_select %p222, %s223, %s224
    %p228 = pneg %p222
    %p229 = scmp.eq.s32.totalorder %s15, 3
    %p230 = por %p228, %p229
    %p231 = scmp.ne.s32.totalorder %s223, %s226
    %p232 = scmp.eq.s32.totalorder %s15, 0
    %p233 = por %p231, %p232
    %p234 = scmp.ne.s32.totalorder %s223, %s226
    %p235 = scmp.eq.s32.totalorder %s20, 3
    %p236 = por %p234, %p235
    %p237 = scmp.ne.s32.totalorder %s226, %s227
    %p238 = scmp.eq.s32.totalorder %s20, 0
    %p239 = por %p237, %p238
    %p240 = scmp.ne.s32.totalorder %s226, %s227
    %p241 = scmp.eq.s32.totalorder %s21, 3
    %p242 = por %p240, %p241
    %p244 = scmp.ne.s32.totalorder %s227, %s243
    %p245 = scmp.eq.s32.totalorder %s21, 0
    %p246 = por %p244, %p245
    %s247 = ssub.s32 %s22, %s34
    %s248 = ssub.s32 %s23, %s30
    %s249 = sor.u32 %s247, %s248
    %p250 = scmp.eq.s32.totalorder %s249, 0
    %s252 = sadd.s32 %s251, 1
    %s253 = scalar_select %p250, %s251, %s252
    %p256 = pneg %p250
    %p257 = scmp.eq.s32.totalorder %s15, 3
    %p258 = por %p256, %p257
    %p259 = scmp.ne.s32.totalorder %s251, %s254
    %p260 = scmp.eq.s32.totalorder %s15, 0
    %p261 = por %p259, %p260
    %p262 = scmp.ne.s32.totalorder %s251, %s254
    %p263 = scmp.eq.s32.totalorder %s20, 3
    %p264 = por %p262, %p263
    %p265 = scmp.ne.s32.totalorder %s254, %s255
    %p266 = scmp.eq.s32.totalorder %s20, 0
    %p267 = por %p265, %p266
    %p268 = scmp.ne.s32.totalorder %s254, %s255
    %p269 = scmp.eq.s32.totalorder %s21, 3
    %p270 = por %p268, %p269
    %p272 = scmp.ne.s32.totalorder %s255, %s271
    %p273 = scmp.eq.s32.totalorder %s21, 0
    %p274 = por %p272, %p273
    %p275 = scmp.le.s32.totalorder 1, %s15
    %p276 = scmp.lt.s32.totalorder %s15, 5
    %p277 = pnand %p275, %p276
    %p278 = pneg %p277
    // Predicated region
    $region9: #{double_conv.3} parent=5 // pred_check
      _
    $region10: #{double_conv.3} parent=5 // pred_check_branch
      %280 = sbr.rel (%p277) target = $region12
    $region11: #{double_conv.3} parent=5 // pred_region
      %s281 = ssub.s32 %s15, 1
      // Predicated region
      $region13: #{double_conv.3} parent=11 // pred_check
        %p282 = pneg %p148
      $region14: #{double_conv.3} parent=11 // pred_check_branch
        %284 = sbr.rel (%p282) target = $region16
      $region15: #{double_conv.3} parent=11 // pred_region
        _
      $region16: #{double_conv.3} parent=11 // pred_fallthru
        _
      // Predicated region
      $region17: #{double_conv.3} parent=11 // pred_check
        %p285 = pneg %p169
      $region18: #{double_conv.3} parent=11 // pred_check_branch
        %287 = sbr.rel (%p285) target = $region20
      $region19: #{double_conv.3} parent=11 // pred_region
        _
      $region20: #{double_conv.3} parent=11 // pred_fallthru
        _
      // Predicated region
      $region21: #{double_conv.3} parent=11 // pred_check
        %p288 = pneg %p190
      $region22: #{double_conv.3} parent=11 // pred_check_branch
        %290 = sbr.rel (%p288) target = $region24
      $region23: #{double_conv.3} parent=11 // pred_region
        _
      $region24: #{double_conv.3} parent=11 // pred_fallthru
        _
      // Predicated region
      $region25: #{double_conv.3} parent=11 // pred_check
        %p291 = pneg %p211
      $region26: #{double_conv.3} parent=11 // pred_check_branch
        %293 = sbr.rel (%p291) target = $region28
      $region27: #{double_conv.3} parent=11 // pred_region
        _
      $region28: #{double_conv.3} parent=11 // pred_fallthru
        _
    $region12: #{double_conv.3} parent=5 // pred_fallthru
      _
    %p294 = scmp.lt.s32.totalorder %s15, 4
    // Predicated region
    $region29: #{double_conv.3} parent=5 // pred_check
      %p295 = pneg %p294
    $region30: #{double_conv.3} parent=5 // pred_check_branch
      %297 = sbr.rel (%p295) target = $region32
    $region31: #{double_conv.3} parent=5 // pred_region
      // Predicated region
      $region33: #{double_conv.3} parent=31 // pred_check
        %p298 = pneg %p49
      $region34: #{double_conv.3} parent=31 // pred_check_branch
        %300 = sbr.rel (%p298) target = $region36
      $region35: #{double_conv.3} parent=31 // pred_region
        %s301 = smul.u32 8, %s23
        %p302 = scmp.lt.s32.totalorder %s22, 1
        %s303 = scalar_select %p302, %s22, 1
        %p304 = scmp.lt.s32.totalorder %s301, 15
        %s305 = scalar_select %p304, %s301, 15
        %s306 = smul.addr %s305, 2
        %s307 = smul.addr %s303, 32
        %s308 = sadd.s32 %s306, %s307
        %s309 = smul.addr %s308, 8
        %s310 = scalar_lea.vmem %s0, %s309
        %s311 = smul.u32 8, %s23
      $region36: #{double_conv.3} parent=31 // pred_fallthru
        _
      // Predicated region
      $region37: #{double_conv.3} parent=31 // pred_check
        %p312 = pneg %p85
      $region38: #{double_conv.3} parent=31 // pred_check_branch
        %314 = sbr.rel (%p312) target = $region40
      $region39: #{double_conv.3} parent=31 // pred_region
        %s315 = smul.u32 %s23, 8
        %s316 = ssub.s32 %s315, 1
        %p317 = scmp.gt.s32.totalorder %s316, 0
        %s318 = scalar_select %p317, %s316, 0
        %p319 = scmp.lt.s32.totalorder %s22, 1
        %s320 = scalar_select %p319, %s22, 1
        %p321 = scmp.lt.s32.totalorder %s318, 15
        %s322 = scalar_select %p321, %s318, 15
        %s323 = smul.addr %s322, 2
        %s324 = smul.addr %s320, 32
        %s325 = sadd.s32 %s323, %s324
        %s326 = smul.addr %s325, 8
        %s327 = scalar_lea.vmem %s1, %s326
        %s328 = smul.u32 %s23, 8
        %s329 = ssub.s32 %s328, 1
        %p330 = scmp.gt.s32.totalorder %s329, 0
        %s331 = scalar_select %p330, %s329, 0
      $region40: #{double_conv.3} parent=31 // pred_fallthru
        _
      // Predicated region
      $region41: #{double_conv.3} parent=31 // pred_check
        %p332 = pneg %p121
      $region42: #{double_conv.3} parent=31 // pred_check_branch
        %334 = sbr.rel (%p332) target = $region44
      $region43: #{double_conv.3} parent=31 // pred_region
        %s335 = sadd.s32 %s23, 1
        %s336 = smul.u32 %s335, 8
        %p337 = scmp.lt.s32.totalorder %s336, 15
        %s338 = scalar_select %p337, %s336, 15
        %p339 = scmp.lt.s32.totalorder %s22, 1
        %s340 = scalar_select %p339, %s22, 1
        %p341 = scmp.lt.s32.totalorder %s338, 15
        %s342 = scalar_select %p341, %s338, 15
        %s343 = smul.addr %s342, 2
        %s344 = smul.addr %s340, 32
        %s345 = sadd.s32 %s343, %s344
        %s346 = smul.addr %s345, 8
        %s347 = scalar_lea.vmem %s2, %s346
        %s348 = sadd.s32 %s23, 1
        %s349 = smul.u32 %s348, 8
        %p350 = scmp.lt.s32.totalorder %s349, 15
        %s351 = scalar_select %p350, %s349, 15
      $region44: #{double_conv.3} parent=31 // pred_fallthru
        _
    $region32: #{double_conv.3} parent=5 // pred_fallthru
      _
    %p352 = scmp.le.s32.totalorder 1, %s15
    %p353 = scmp.lt.s32.totalorder %s15, 5
    %p354 = pnand %p352, %p353
    %p355 = pneg %p354
    // Predicated region
    $region45: #{double_conv.3} parent=5 // pred_check
      _
    $region46: #{double_conv.3} parent=5 // pred_check_branch
      %357 = sbr.rel (%p354) target = $region48
    $region47: #{double_conv.3} parent=5 // pred_region
      %s358 = ssub.s32 %s15, 1
      %s359 = smul.u32 8, %s25
      %p360 = scmp.lt.s32.totalorder %s24, 1
      %s361 = scalar_select %p360, %s24, 1
      %p362 = scmp.lt.s32.totalorder %s359, 15
      %s363 = scalar_select %p362, %s359, 15
      %s364 = smul.addr %s363, 2
      %s365 = smul.addr %s361, 32
      %s366 = sadd.s32 %s364, %s365
      %s367 = smul.addr %s366, 8
      %s368 = scalar_lea.vmem %s0, %s367
      %p369 = pneg %p55
      %p370 = pneg %p52
      %s371 = smul.u32 %s25, 8
      %s372 = ssub.s32 %s371, 1
      %p373 = scmp.gt.s32.totalorder %s372, 0
      %s374 = scalar_select %p373, %s372, 0
      %p375 = scmp.lt.s32.totalorder %s24, 1
      %s376 = scalar_select %p375, %s24, 1
      %p377 = scmp.lt.s32.totalorder %s374, 15
      %s378 = scalar_select %p377, %s374, 15
      %s379 = smul.addr %s378, 2
      %s380 = smul.addr %s376, 32
      %s381 = sadd.s32 %s379, %s380
      %s382 = smul.addr %s381, 8
      %s383 = scalar_lea.vmem %s1, %s382
      %p384 = pneg %p91
      %p385 = pneg %p88
      %s386 = sadd.s32 %s25, 1
      %s387 = smul.u32 %s386, 8
      %p388 = scmp.lt.s32.totalorder %s387, 15
      %s389 = scalar_select %p388, %s387, 15
      %p390 = scmp.lt.s32.totalorder %s24, 1
      %s391 = scalar_select %p390, %s24, 1
      %p392 = scmp.lt.s32.totalorder %s389, 15
      %s393 = scalar_select %p392, %s389, 15
      %s394 = smul.addr %s393, 2
      %s395 = smul.addr %s391, 32
      %s396 = sadd.s32 %s394, %s395
      %s397 = smul.addr %s396, 8
      %s398 = scalar_lea.vmem %s2, %s397
      %p399 = pneg %p127
      %p400 = pneg %p124
      %p401 = pneg %p148
      %p402 = pneg %p145
      %p403 = pneg %p169
      %p404 = pneg %p166
      %p405 = pneg %p190
      %p406 = pneg %p187
      %p407 = pneg %p211
      %p408 = pneg %p208
      %p409 = pneg %p239
      %p410 = pneg %p236
      %s411 = smul.u32 8, %s25
      %p412 = scmp.lt.s32.totalorder %s24, 1
      %s413 = scalar_select %p412, %s24, 1
      %p414 = scmp.lt.s32.totalorder %s411, 15
      %s415 = scalar_select %p414, %s411, 15
      %s416 = smul.addr %s415, 2
      %s417 = smul.addr %s413, 32
      %s418 = sadd.s32 %s416, %s417
      %s419 = smul.addr %s418, 8
      %s420 = scalar_lea.vmem %s7, %s419
      %p421 = pneg %p267
      %p422 = pneg %p264
      %p423 = scmp.lt.s32.totalorder %s24, 1
      %s424 = scalar_select %p423, %s24, 1
      %p425 = scmp.lt.s32.totalorder %s25, 1
      %s426 = scalar_select %p425, %s25, 1
      %s427 = smul.addr %s424, 2
      %s428 = sadd.s32 %s426, %s427
      %s429 = smul.addr %s428, 2
      %s430 = scalar_lea.vmem %s8, %s429
      %s431 = smul.u32 8, %s25
      %p432 = scmp.lt.s32.totalorder %s24, 1
      %s433 = scalar_select %p432, %s24, 1
      %p434 = scmp.lt.s32.totalorder %s431, 15
      %s435 = scalar_select %p434, %s431, 15
      %s436 = smul.addr %s435, 2
      %s437 = smul.addr %s433, 32
      %s438 = sadd.s32 %s436, %s437
      %s439 = smul.addr %s438, 8
      %s440 = scalar_lea.vmem %s0, %s439
      %s441 = smul.u32 8, %s25
      %s442 = smul.u32 %s25, 8
      %s443 = ssub.s32 %s442, 1
      %p444 = scmp.gt.s32.totalorder %s443, 0
      %s445 = scalar_select %p444, %s443, 0
      %p446 = scmp.lt.s32.totalorder %s24, 1
      %s447 = scalar_select %p446, %s24, 1
      %p448 = scmp.lt.s32.totalorder %s445, 15
      %s449 = scalar_select %p448, %s445, 15
      %s450 = smul.addr %s449, 2
      %s451 = smul.addr %s447, 32
      %s452 = sadd.s32 %s450, %s451
      %s453 = smul.addr %s452, 8
      %s454 = scalar_lea.vmem %s1, %s453
      %s455 = smul.u32 %s25, 8
      %s456 = ssub.s32 %s455, 1
      %p457 = scmp.gt.s32.totalorder %s456, 0
      %s458 = scalar_select %p457, %s456, 0
      %s459 = sadd.s32 %s25, 1
      %s460 = smul.u32 %s459, 8
      %p461 = scmp.lt.s32.totalorder %s460, 15
      %s462 = scalar_select %p461, %s460, 15
      %p463 = scmp.lt.s32.totalorder %s24, 1
      %s464 = scalar_select %p463, %s24, 1
      %p465 = scmp.lt.s32.totalorder %s462, 15
      %s466 = scalar_select %p465, %s462, 15
      %s467 = smul.addr %s466, 2
      %s468 = smul.addr %s464, 32
      %s469 = sadd.s32 %s467, %s468
      %s470 = smul.addr %s469, 8
      %s471 = scalar_lea.vmem %s2, %s470
      %s472 = sadd.s32 %s25, 1
      %s473 = smul.u32 %s472, 8
      %p474 = scmp.lt.s32.totalorder %s473, 15
      %s475 = scalar_select %p474, %s473, 15
      %s476 = smul.u32 8, %s25
      %p477 = scmp.lt.s32.totalorder %s24, 1
      %s478 = scalar_select %p477, %s24, 1
      %p479 = scmp.lt.s32.totalorder %s476, 15
      %s480 = scalar_select %p479, %s476, 15
      %s481 = smul.addr %s480, 2
      %s482 = smul.addr %s478, 32
      %s483 = sadd.s32 %s481, %s482
      %s484 = smul.addr %s483, 8
      %s485 = scalar_lea.vmem %s7, %s484
      %s486 = smul.u32 8, %s25
      %p487 = scmp.lt.s32.totalorder %s24, 1
      %s488 = scalar_select %p487, %s24, 1
      %p489 = scmp.lt.s32.totalorder %s25, 1
      %s490 = scalar_select %p489, %s25, 1
      %s491 = smul.addr %s488, 2
      %s492 = sadd.s32 %s490, %s491
      %s493 = smul.addr %s492, 2
      %s494 = scalar_lea.vmem %s8, %s493
      %v495 = vld [vmem:[%s440] sm:$0xff]
      %v496 = vld [vmem:[%s440 + $0x8] sm:$0xff]
      %v497 = vld [vmem:[%s440 + $0x10] sm:$0xff]
      %v498 = vld [vmem:[%s440 + $0x18] sm:$0xff]
      %v499 = vld [vmem:[%s440 + $0x20] sm:$0xff]
      %v500 = vld [vmem:[%s440 + $0x28] sm:$0xff]
      %v501 = vld [vmem:[%s440 + $0x30] sm:$0xff]
      %v502 = vld [vmem:[%s440 + $0x38] sm:$0xff]
      %v503 = vld [vmem:[%s440 + $0x40] sm:$0xff]
      %v504 = vld [vmem:[%s440 + $0x48] sm:$0xff]
      %v505 = vld [vmem:[%s440 + $0x50] sm:$0xff]
      %v506 = vld [vmem:[%s440 + $0x58] sm:$0xff]
      %v507 = vld [vmem:[%s440 + $0x60] sm:$0xff]
      %v508 = vld [vmem:[%s440 + $0x68] sm:$0xff]
      %v509 = vld [vmem:[%s440 + $0x70] sm:$0xff]
      %v510 = vld [vmem:[%s440 + $0x78] sm:$0xff]
      %v511 = vld [vmem:[%s454] sm:$0xff]
      %v512 = vld [vmem:[%s454 + $0x8] sm:$0xff]
      %v513 = vld [vmem:[%s471] sm:$0xff]
      %v514 = vld [vmem:[%s471 + $0x8] sm:$0xff]
      %p515 = scmp.gt.s32.totalorder %s25, 0
      %s516 = scalar_select %p515, 1.0, 0.0
      %v517 = vstv %s516
      %v518 = vmul.f32 %v511, %v517
      %v519 = vmul.f32 %v512, %v517
      %p520 = scmp.lt.s32.totalorder %s25, 1
      %s521 = scalar_select %p520, 1.0, 0.0
      %v522 = vstv %s521
      %v523 = vmul.f32 %v513, %v522
      %v524 = vmul.f32 %v514, %v522
      %vm545 = vcmask 1040384
      %v546 = vrot.slane %v518, 7
      %v547 = vrot.slane %v519, 7
      %v548 = vsel %vm545, %v546, %v547
      %v549 = vrot.slane %v495, 7
      %v550 = vrot.slane %v496, 7
      %v551 = vsel %vm545, %v549, %v550
      %v552 = vrot.slane %v497, 7
      %v553 = vrot.slane %v498, 7
      %v554 = vsel %vm545, %v552, %v553
      %v555 = vrot.slane %v499, 7
      %v556 = vrot.slane %v500, 7
      %v557 = vsel %vm545, %v555, %v556
      %v558 = vrot.slane %v501, 7
      %v559 = vrot.slane %v502, 7
      %v560 = vsel %vm545, %v558, %v559
      %v561 = vrot.slane %v503, 7
      %v562 = vrot.slane %v504, 7
      %v563 = vsel %vm545, %v561, %v562
      %v564 = vrot.slane %v505, 7
      %v565 = vrot.slane %v506, 7
      %v566 = vsel %vm545, %v564, %v565
      %v567 = vrot.slane %v507, 7
      %v568 = vrot.slane %v508, 7
      %v569 = vsel %vm545, %v567, %v568
      %v570 = vrot.slane %v509, 7
      %v571 = vrot.slane %v510, 7
      %v572 = vsel %vm545, %v570, %v571
      %v573 = vrot.slane %v523, 7
      %v574 = vrot.slane %v524, 7
      %v575 = vsel %vm545, %v573, %v574
      %v604 = vsel %vm545, 0.0, %v546
      %v605 = vsel %vm545, 0.0, %v549
      %v606 = vsel %vm545, 0.0, %v552
      %v607 = vsel %vm545, 0.0, %v555
      %v608 = vsel %vm545, 0.0, %v558
      %v609 = vsel %vm545, 0.0, %v561
      %v610 = vsel %vm545, 0.0, %v564
      %v611 = vsel %vm545, 0.0, %v567
      %v612 = vsel %vm545, 0.0, %v570
      %v613 = vsel %vm545, 0.0, %v573
      %v614 = vsel %vm545, %v547, 0.0
      %v615 = vsel %vm545, %v550, 0.0
      %v616 = vsel %vm545, %v553, 0.0
      %v617 = vsel %vm545, %v556, 0.0
      %v618 = vsel %vm545, %v559, 0.0
      %v619 = vsel %vm545, %v562, 0.0
      %v620 = vsel %vm545, %v565, 0.0
      %v621 = vsel %vm545, %v568, 0.0
      %v622 = vsel %vm545, %v571, 0.0
      %v623 = vsel %vm545, %v574, 0.0
      %vm640 = vcmask 1046528
      %v641 = vrot.slane %v604, 1
      %v642 = vrot.slane %v548, 1
      %v643 = vsel %vm640, %v641, %v642
      %v644 = vrot.slane %v614, 1
      %v645 = vsel %vm640, %v642, %v644
      %v646 = vrot.slane %v605, 1
      %v647 = vrot.slane %v551, 1
      %v648 = vsel %vm640, %v646, %v647
      %v649 = vrot.slane %v615, 1
      %v650 = vsel %vm640, %v647, %v649
      %v651 = vrot.slane %v606, 1
      %v652 = vrot.slane %v554, 1
      %v653 = vsel %vm640, %v651, %v652
      %v654 = vrot.slane %v616, 1
      %v655 = vsel %vm640, %v652, %v654
      %v656 = vrot.slane %v607, 1
      %v657 = vrot.slane %v557, 1
      %v658 = vsel %vm640, %v656, %v657
      %v659 = vrot.slane %v617, 1
      %v660 = vsel %vm640, %v657, %v659
      %v661 = vrot.slane %v608, 1
      %v662 = vrot.slane %v560, 1
      %v663 = vsel %vm640, %v661, %v662
      %v664 = vrot.slane %v618, 1
      %v665 = vsel %vm640, %v662, %v664
      %v666 = vrot.slane %v609, 1
      %v667 = vrot.slane %v563, 1
      %v668 = vsel %vm640, %v666, %v667
      %v669 = vrot.slane %v619, 1
      %v670 = vsel %vm640, %v667, %v669
      %v671 = vrot.slane %v610, 1
      %v672 = vrot.slane %v566, 1
      %v673 = vsel %vm640, %v671, %v672
      %v674 = vrot.slane %v620, 1
      %v675 = vsel %vm640, %v672, %v674
      %v676 = vrot.slane %v611, 1
      %v677 = vrot.slane %v569, 1
      %v678 = vsel %vm640, %v676, %v677
      %v679 = vrot.slane %v621, 1
      %v680 = vsel %vm640, %v677, %v679
      %681 = vrot.lane.b32.xlu0 %v643, 4
      %v682 = vpop.permute.xlu0 %681
      %683 = vrot.lane.b32.xlu0 %v645, 4
      %v684 = vpop.permute.xlu0 %683
      %685 = vrot.lane.b32.xlu0 %v648, 4
      %v686 = vpop.permute.xlu0 %685
      %687 = vrot.lane.b32.xlu0 %v650, 4
      %v688 = vpop.permute.xlu0 %687
      %689 = vrot.lane.b32.xlu0 %v653, 4
      %v690 = vpop.permute.xlu0 %689
      %691 = vrot.lane.b32.xlu0 %v655, 4
      %v692 = vpop.permute.xlu0 %691
      %693 = vrot.lane.b32.xlu0 %v658, 4
      %v694 = vpop.permute.xlu0 %693
      %695 = vrot.lane.b32.xlu0 %v660, 4
      %v696 = vpop.permute.xlu0 %695
      %697 = vrot.lane.b32.xlu0 %v663, 4
      %v698 = vpop.permute.xlu0 %697
      %699 = vrot.lane.b32.xlu0 %v665, 4
      %v700 = vpop.permute.xlu0 %699
      %701 = vrot.lane.b32.xlu0 %v668, 4
      %v702 = vpop.permute.xlu0 %701
      %703 = vrot.lane.b32.xlu0 %v670, 4
      %v704 = vpop.permute.xlu0 %703
      %705 = vrot.lane.b32.xlu0 %v673, 4
      %v706 = vpop.permute.xlu0 %705
      %707 = vrot.lane.b32.xlu0 %v675, 4
      %v708 = vpop.permute.xlu0 %707
      %709 = vrot.lane.b32.xlu0 %v678, 4
      %v710 = vpop.permute.xlu0 %709
      %711 = vrot.lane.b32.xlu0 %v680, 4
      %v712 = vpop.permute.xlu0 %711
      %vm729 = vcmask 1045504
      %v730 = vrot.slane %v604, 2
      %v731 = vrot.slane %v548, 2
      %v732 = vsel %vm729, %v730, %v731
      %v733 = vrot.slane %v614, 2
      %v734 = vsel %vm729, %v731, %v733
      %v735 = vrot.slane %v605, 2
      %v736 = vrot.slane %v551, 2
      %v737 = vsel %vm729, %v735, %v736
      %v738 = vrot.slane %v615, 2
      %v739 = vsel %vm729, %v736, %v738
      %v740 = vrot.slane %v606, 2
      %v741 = vrot.slane %v554, 2
      %v742 = vsel %vm729, %v740, %v741
      %v743 = vrot.slane %v616, 2
      %v744 = vsel %vm729, %v741, %v743
      %v745 = vrot.slane %v607, 2
      %v746 = vrot.slane %v557, 2
      %v747 = vsel %vm729, %v745, %v746
      %v748 = vrot.slane %v617, 2
      %v749 = vsel %vm729, %v746, %v748
      %v750 = vrot.slane %v608, 2
      %v751 = vrot.slane %v560, 2
      %v752 = vsel %vm729, %v750, %v751
      %v753 = vrot.slane %v618, 2
      %v754 = vsel %vm729, %v751, %v753
      %v755 = vrot.slane %v609, 2
      %v756 = vrot.slane %v563, 2
      %v757 = vsel %vm729, %v755, %v756
      %v758 = vrot.slane %v619, 2
      %v759 = vsel %vm729, %v756, %v758
      %v760 = vrot.slane %v610, 2
      %v761 = vrot.slane %v566, 2
      %v762 = vsel %vm729, %v760, %v761
      %v763 = vrot.slane %v620, 2
      %v764 = vsel %vm729, %v761, %v763
      %v765 = vrot.slane %v611, 2
      %v766 = vrot.slane %v569, 2
      %v767 = vsel %vm729, %v765, %v766
      %v768 = vrot.slane %v621, 2
      %v769 = vsel %vm729, %v766, %v768
      %770 = vrot.lane.b32.xlu0 %v732, 8
      %v771 = vpop.permute.xlu0 %770
      %772 = vrot.lane.b32.xlu0 %v734, 8
      %v773 = vpop.permute.xlu0 %772
      %774 = vrot.lane.b32.xlu0 %v737, 8
      %v775 = vpop.permute.xlu0 %774
      %776 = vrot.lane.b32.xlu0 %v739, 8
      %v777 = vpop.permute.xlu0 %776
      %778 = vrot.lane.b32.xlu0 %v742, 8
      %v779 = vpop.permute.xlu0 %778
      %780 = vrot.lane.b32.xlu0 %v744, 8
      %v781 = vpop.permute.xlu0 %780
      %782 = vrot.lane.b32.xlu0 %v747, 8
      %v783 = vpop.permute.xlu0 %782
      %784 = vrot.lane.b32.xlu0 %v749, 8
      %v785 = vpop.permute.xlu0 %784
      %786 = vrot.lane.b32.xlu0 %v752, 8
      %v787 = vpop.permute.xlu0 %786
      %788 = vrot.lane.b32.xlu0 %v754, 8
      %v789 = vpop.permute.xlu0 %788
      %790 = vrot.lane.b32.xlu0 %v757, 8
      %v791 = vpop.permute.xlu0 %790
      %792 = vrot.lane.b32.xlu0 %v759, 8
      %v793 = vpop.permute.xlu0 %792
      %794 = vrot.lane.b32.xlu0 %v762, 8
      %v795 = vpop.permute.xlu0 %794
      %796 = vrot.lane.b32.xlu0 %v764, 8
      %v797 = vpop.permute.xlu0 %796
      %798 = vrot.lane.b32.xlu0 %v767, 8
      %v799 = vpop.permute.xlu0 %798
      %800 = vrot.lane.b32.xlu0 %v769, 8
      %v801 = vpop.permute.xlu0 %800
      %819 = vrot.lane.b32.xlu0 %v605, 12
      %v820 = vpop.permute.xlu0 %819
      %821 = vrot.lane.b32.xlu0 %v551, 12
      %v822 = vpop.permute.xlu0 %821
      %823 = vrot.lane.b32.xlu0 %v606, 12
      %v824 = vpop.permute.xlu0 %823
      %825 = vrot.lane.b32.xlu0 %v554, 12
      %v826 = vpop.permute.xlu0 %825
      %827 = vrot.lane.b32.xlu0 %v607, 12
      %v828 = vpop.permute.xlu0 %827
      %829 = vrot.lane.b32.xlu0 %v557, 12
      %v830 = vpop.permute.xlu0 %829
      %831 = vrot.lane.b32.xlu0 %v608, 12
      %v832 = vpop.permute.xlu0 %831
      %833 = vrot.lane.b32.xlu0 %v560, 12
      %v834 = vpop.permute.xlu0 %833
      %835 = vrot.lane.b32.xlu0 %v609, 12
      %v836 = vpop.permute.xlu0 %835
      %837 = vrot.lane.b32.xlu0 %v563, 12
      %v838 = vpop.permute.xlu0 %837
      %839 = vrot.lane.b32.xlu0 %v610, 12
      %v840 = vpop.permute.xlu0 %839
      %841 = vrot.lane.b32.xlu0 %v566, 12
      %v842 = vpop.permute.xlu0 %841
      %843 = vrot.lane.b32.xlu0 %v611, 12
      %v844 = vpop.permute.xlu0 %843
      %845 = vrot.lane.b32.xlu0 %v569, 12
      %v846 = vpop.permute.xlu0 %845
      %847 = vrot.lane.b32.xlu0 %v612, 12
      %v848 = vpop.permute.xlu0 %847
      %849 = vrot.lane.b32.xlu0 %v572, 12
      %v850 = vpop.permute.xlu0 %849
      %v868 = vrot.slane %v612, 1
      %v869 = vrot.slane %v572, 1
      %v870 = vsel %vm640, %v868, %v869
      %v871 = vrot.slane %v622, 1
      %v872 = vsel %vm640, %v869, %v871
      %873 = vrot.lane.b32.xlu0 %v648, 16
      %v874 = vpop.permute.xlu0 %873
      %875 = vrot.lane.b32.xlu0 %v650, 16
      %v876 = vpop.permute.xlu0 %875
      %877 = vrot.lane.b32.xlu0 %v653, 16
      %v878 = vpop.permute.xlu0 %877
      %879 = vrot.lane.b32.xlu0 %v655, 16
      %v880 = vpop.permute.xlu0 %879
      %881 = vrot.lane.b32.xlu0 %v658, 16
      %v882 = vpop.permute.xlu0 %881
      %883 = vrot.lane.b32.xlu0 %v660, 16
      %v884 = vpop.permute.xlu0 %883
      %885 = vrot.lane.b32.xlu0 %v663, 16
      %v886 = vpop.permute.xlu0 %885
      %887 = vrot.lane.b32.xlu0 %v665, 16
      %v888 = vpop.permute.xlu0 %887
      %889 = vrot.lane.b32.xlu0 %v668, 16
      %v890 = vpop.permute.xlu0 %889
      %891 = vrot.lane.b32.xlu0 %v670, 16
      %v892 = vpop.permute.xlu0 %891
      %893 = vrot.lane.b32.xlu0 %v673, 16
      %v894 = vpop.permute.xlu0 %893
      %895 = vrot.lane.b32.xlu0 %v675, 16
      %v896 = vpop.permute.xlu0 %895
      %897 = vrot.lane.b32.xlu0 %v678, 16
      %v898 = vpop.permute.xlu0 %897
      %899 = vrot.lane.b32.xlu0 %v680, 16
      %v900 = vpop.permute.xlu0 %899
      %901 = vrot.lane.b32.xlu0 %v870, 16
      %v902 = vpop.permute.xlu0 %901
      %903 = vrot.lane.b32.xlu0 %v872, 16
      %v904 = vpop.permute.xlu0 %903
      %v921 = vrot.slane %v612, 2
      %v922 = vrot.slane %v572, 2
      %v923 = vsel %vm729, %v921, %v922
      %v924 = vrot.slane %v622, 2
      %v925 = vsel %vm729, %v922, %v924
      %926 = vrot.lane.b32.xlu0 %v737, 20
      %v927 = vpop.permute.xlu0 %926
      %928 = vrot.lane.b32.xlu0 %v739, 20
      %v929 = vpop.permute.xlu0 %928
      %930 = vrot.lane.b32.xlu0 %v742, 20
      %v931 = vpop.permute.xlu0 %930
      %932 = vrot.lane.b32.xlu0 %v744, 20
      %v933 = vpop.permute.xlu0 %932
      %934 = vrot.lane.b32.xlu0 %v747, 20
      %v935 = vpop.permute.xlu0 %934
      %936 = vrot.lane.b32.xlu0 %v749, 20
      %v937 = vpop.permute.xlu0 %936
      %938 = vrot.lane.b32.xlu0 %v752, 20
      %v939 = vpop.permute.xlu0 %938
      %940 = vrot.lane.b32.xlu0 %v754, 20
      %v941 = vpop.permute.xlu0 %940
      %942 = vrot.lane.b32.xlu0 %v757, 20
      %v943 = vpop.permute.xlu0 %942
      %944 = vrot.lane.b32.xlu0 %v759, 20
      %v945 = vpop.permute.xlu0 %944
      %946 = vrot.lane.b32.xlu0 %v762, 20
      %v947 = vpop.permute.xlu0 %946
      %948 = vrot.lane.b32.xlu0 %v764, 20
      %v949 = vpop.permute.xlu0 %948
      %950 = vrot.lane.b32.xlu0 %v767, 20
      %v951 = vpop.permute.xlu0 %950
      %952 = vrot.lane.b32.xlu0 %v769, 20
      %v953 = vpop.permute.xlu0 %952
      %954 = vrot.lane.b32.xlu0 %v923, 20
      %v955 = vpop.permute.xlu0 %954
      %956 = vrot.lane.b32.xlu0 %v925, 20
      %v957 = vpop.permute.xlu0 %956
      %975 = vrot.lane.b32.xlu0 %v606, 24
      %v976 = vpop.permute.xlu0 %975
      %977 = vrot.lane.b32.xlu0 %v554, 24
      %v978 = vpop.permute.xlu0 %977
      %979 = vrot.lane.b32.xlu0 %v607, 24
      %v980 = vpop.permute.xlu0 %979
      %981 = vrot.lane.b32.xlu0 %v557, 24
      %v982 = vpop.permute.xlu0 %981
      %983 = vrot.lane.b32.xlu0 %v608, 24
      %v984 = vpop.permute.xlu0 %983
      %985 = vrot.lane.b32.xlu0 %v560, 24
      %v986 = vpop.permute.xlu0 %985
      %987 = vrot.lane.b32.xlu0 %v609, 24
      %v988 = vpop.permute.xlu0 %987
      %989 = vrot.lane.b32.xlu0 %v563, 24
      %v990 = vpop.permute.xlu0 %989
      %991 = vrot.lane.b32.xlu0 %v610, 24
      %v992 = vpop.permute.xlu0 %991
      %993 = vrot.lane.b32.xlu0 %v566, 24
      %v994 = vpop.permute.xlu0 %993
      %995 = vrot.lane.b32.xlu0 %v611, 24
      %v996 = vpop.permute.xlu0 %995
      %997 = vrot.lane.b32.xlu0 %v569, 24
      %v998 = vpop.permute.xlu0 %997
      %999 = vrot.lane.b32.xlu0 %v612, 24
      %v1000 = vpop.permute.xlu0 %999
      %1001 = vrot.lane.b32.xlu0 %v572, 24
      %v1002 = vpop.permute.xlu0 %1001
      %1003 = vrot.lane.b32.xlu0 %v613, 24
      %v1004 = vpop.permute.xlu0 %1003
      %1005 = vrot.lane.b32.xlu0 %v575, 24
      %v1006 = vpop.permute.xlu0 %1005
      %v1024 = vrot.slane %v613, 1
      %v1025 = vrot.slane %v575, 1
      %v1026 = vsel %vm640, %v1024, %v1025
      %v1027 = vrot.slane %v623, 1
      %v1028 = vsel %vm640, %v1025, %v1027
      %1029 = vrot.lane.b32.xlu0 %v653, 28
      %v1030 = vpop.permute.xlu0 %1029
      %1031 = vrot.lane.b32.xlu0 %v655, 28
      %v1032 = vpop.permute.xlu0 %1031
      %1033 = vrot.lane.b32.xlu0 %v658, 28
      %v1034 = vpop.permute.xlu0 %1033
      %1035 = vrot.lane.b32.xlu0 %v660, 28
      %v1036 = vpop.permute.xlu0 %1035
      %1037 = vrot.lane.b32.xlu0 %v663, 28
      %v1038 = vpop.permute.xlu0 %1037
      %1039 = vrot.lane.b32.xlu0 %v665, 28
      %v1040 = vpop.permute.xlu0 %1039
      %1041 = vrot.lane.b32.xlu0 %v668, 28
      %v1042 = vpop.permute.xlu0 %1041
      %1043 = vrot.lane.b32.xlu0 %v670, 28
      %v1044 = vpop.permute.xlu0 %1043
      %1045 = vrot.lane.b32.xlu0 %v673, 28
      %v1046 = vpop.permute.xlu0 %1045
      %1047 = vrot.lane.b32.xlu0 %v675, 28
      %v1048 = vpop.permute.xlu0 %1047
      %1049 = vrot.lane.b32.xlu0 %v678, 28
      %v1050 = vpop.permute.xlu0 %1049
      %1051 = vrot.lane.b32.xlu0 %v680, 28
      %v1052 = vpop.permute.xlu0 %1051
      %1053 = vrot.lane.b32.xlu0 %v870, 28
      %v1054 = vpop.permute.xlu0 %1053
      %1055 = vrot.lane.b32.xlu0 %v872, 28
      %v1056 = vpop.permute.xlu0 %1055
      %1057 = vrot.lane.b32.xlu0 %v1026, 28
      %v1058 = vpop.permute.xlu0 %1057
      %1059 = vrot.lane.b32.xlu0 %v1028, 28
      %v1060 = vpop.permute.xlu0 %1059
      %v1077 = vrot.slane %v613, 2
      %v1078 = vrot.slane %v575, 2
      %v1079 = vsel %vm729, %v1077, %v1078
      %v1080 = vrot.slane %v623, 2
      %v1081 = vsel %vm729, %v1078, %v1080
      %1082 = vrot.lane.b32.xlu0 %v742, 32
      %v1083 = vpop.permute.xlu0 %1082
      %1084 = vrot.lane.b32.xlu0 %v744, 32
      %v1085 = vpop.permute.xlu0 %1084
      %1086 = vrot.lane.b32.xlu0 %v747, 32
      %v1087 = vpop.permute.xlu0 %1086
      %1088 = vrot.lane.b32.xlu0 %v749, 32
      %v1089 = vpop.permute.xlu0 %1088
      %1090 = vrot.lane.b32.xlu0 %v752, 32
      %v1091 = vpop.permute.xlu0 %1090
      %1092 = vrot.lane.b32.xlu0 %v754, 32
      %v1093 = vpop.permute.xlu0 %1092
      %1094 = vrot.lane.b32.xlu0 %v757, 32
      %v1095 = vpop.permute.xlu0 %1094
      %1096 = vrot.lane.b32.xlu0 %v759, 32
      %v1097 = vpop.permute.xlu0 %1096
      %1098 = vrot.lane.b32.xlu0 %v762, 32
      %v1099 = vpop.permute.xlu0 %1098
      %1100 = vrot.lane.b32.xlu0 %v764, 32
      %v1101 = vpop.permute.xlu0 %1100
      %1102 = vrot.lane.b32.xlu0 %v767, 32
      %v1103 = vpop.permute.xlu0 %1102
      %1104 = vrot.lane.b32.xlu0 %v769, 32
      %v1105 = vpop.permute.xlu0 %1104
      %1106 = vrot.lane.b32.xlu0 %v923, 32
      %v1107 = vpop.permute.xlu0 %1106
      %1108 = vrot.lane.b32.xlu0 %v925, 32
      %v1109 = vpop.permute.xlu0 %1108
      %1110 = vrot.lane.b32.xlu0 %v1079, 32
      %v1111 = vpop.permute.xlu0 %1110
      %1112 = vrot.lane.b32.xlu0 %v1081, 32
      %v1113 = vpop.permute.xlu0 %1112
      %vm1130 = vcmask 31744
      %v1131 = vsel %vm1130, %v604, %v682
      %v1132 = vsel %vm1130, %v548, %v684
      %v1133 = vsel %vm1130, %v605, %v686
      %v1134 = vsel %vm1130, %v551, %v688
      %v1135 = vsel %vm1130, %v606, %v690
      %v1136 = vsel %vm1130, %v554, %v692
      %v1137 = vsel %vm1130, %v607, %v694
      %v1138 = vsel %vm1130, %v557, %v696
      %v1139 = vsel %vm1130, %v608, %v698
      %v1140 = vsel %vm1130, %v560, %v700
      %v1141 = vsel %vm1130, %v609, %v702
      %v1142 = vsel %vm1130, %v563, %v704
      %v1143 = vsel %vm1130, %v610, %v706
      %v1144 = vsel %vm1130, %v566, %v708
      %v1145 = vsel %vm1130, %v611, %v710
      %v1146 = vsel %vm1130, %v569, %v712
      %vm1147 = vcmask 64512
      %v1148 = vsel %vm1147, %v1131, %v771
      %v1149 = vsel %vm1147, %v1132, %v773
      %v1150 = vsel %vm1147, %v1133, %v775
      %v1151 = vsel %vm1147, %v1134, %v777
      %v1152 = vsel %vm1147, %v1135, %v779
      %v1153 = vsel %vm1147, %v1136, %v781
      %v1154 = vsel %vm1147, %v1137, %v783
      %v1155 = vsel %vm1147, %v1138, %v785
      %v1156 = vsel %vm1147, %v1139, %v787
      %v1157 = vsel %vm1147, %v1140, %v789
      %v1158 = vsel %vm1147, %v1141, %v791
      %v1159 = vsel %vm1147, %v1142, %v793
      %v1160 = vsel %vm1147, %v1143, %v795
      %v1161 = vsel %vm1147, %v1144, %v797
      %v1162 = vsel %vm1147, %v1145, %v799
      %v1163 = vsel %vm1147, %v1146, %v801
      %vm1164 = vcmask 97280
      %v1165 = vsel %vm1164, %v1148, %v820
      %v1166 = vsel %vm1164, %v1149, %v822
      %v1167 = vsel %vm1164, %v1150, %v824
      %v1168 = vsel %vm1164, %v1151, %v826
      %v1169 = vsel %vm1164, %v1152, %v828
      %v1170 = vsel %vm1164, %v1153, %v830
      %v1171 = vsel %vm1164, %v1154, %v832
      %v1172 = vsel %vm1164, %v1155, %v834
      %v1173 = vsel %vm1164, %v1156, %v836
      %v1174 = vsel %vm1164, %v1157, %v838
      %v1175 = vsel %vm1164, %v1158, %v840
      %v1176 = vsel %vm1164, %v1159, %v842
      %v1177 = vsel %vm1164, %v1160, %v844
      %v1178 = vsel %vm1164, %v1161, %v846
      %v1179 = vsel %vm1164, %v1162, %v848
      %v1180 = vsel %vm1164, %v1163, %v850
      %vm1181 = vcmask 130048
      %v1182 = vsel %vm1181, %v1165, %v874
      %v1183 = vsel %vm1181, %v1166, %v876
      %v1184 = vsel %vm1181, %v1167, %v878
      %v1185 = vsel %vm1181, %v1168, %v880
      %v1186 = vsel %vm1181, %v1169, %v882
      %v1187 = vsel %vm1181, %v1170, %v884
      %v1188 = vsel %vm1181, %v1171, %v886
      %v1189 = vsel %vm1181, %v1172, %v888
      %v1190 = vsel %vm1181, %v1173, %v890
      %v1191 = vsel %vm1181, %v1174, %v892
      %v1192 = vsel %vm1181, %v1175, %v894
      %v1193 = vsel %vm1181, %v1176, %v896
      %v1194 = vsel %vm1181, %v1177, %v898
      %v1195 = vsel %vm1181, %v1178, %v900
      %v1196 = vsel %vm1181, %v1179, %v902
      %v1197 = vsel %vm1181, %v1180, %v904
      %vm1198 = vcmask 162816
      %v1199 = vsel %vm1198, %v1182, %v927
      %v1200 = vsel %vm1198, %v1183, %v929
      %v1201 = vsel %vm1198, %v1184, %v931
      %v1202 = vsel %vm1198, %v1185, %v933
      %v1203 = vsel %vm1198, %v1186, %v935
      %v1204 = vsel %vm1198, %v1187, %v937
      %v1205 = vsel %vm1198, %v1188, %v939
      %v1206 = vsel %vm1198, %v1189, %v941
      %v1207 = vsel %vm1198, %v1190, %v943
      %v1208 = vsel %vm1198, %v1191, %v945
      %v1209 = vsel %vm1198, %v1192, %v947
      %v1210 = vsel %vm1198, %v1193, %v949
      %v1211 = vsel %vm1198, %v1194, %v951
      %v1212 = vsel %vm1198, %v1195, %v953
      %v1213 = vsel %vm1198, %v1196, %v955
      %v1214 = vsel %vm1198, %v1197, %v957
      %vm1215 = vcmask 195584
      %v1216 = vsel %vm1215, %v1199, %v976
      %v1217 = vsel %vm1215, %v1200, %v978
      %v1218 = vsel %vm1215, %v1201, %v980
      %v1219 = vsel %vm1215, %v1202, %v982
      %v1220 = vsel %vm1215, %v1203, %v984
      %v1221 = vsel %vm1215, %v1204, %v986
      %v1222 = vsel %vm1215, %v1205, %v988
      %v1223 = vsel %vm1215, %v1206, %v990
      %v1224 = vsel %vm1215, %v1207, %v992
      %v1225 = vsel %vm1215, %v1208, %v994
      %v1226 = vsel %vm1215, %v1209, %v996
      %v1227 = vsel %vm1215, %v1210, %v998
      %v1228 = vsel %vm1215, %v1211, %v1000
      %v1229 = vsel %vm1215, %v1212, %v1002
      %v1230 = vsel %vm1215, %v1213, %v1004
      %v1231 = vsel %vm1215, %v1214, %v1006
      %vm1232 = vcmask 228352
      %v1233 = vsel %vm1232, %v1216, %v1030
      %v1234 = vsel %vm1232, %v1217, %v1032
      %v1235 = vsel %vm1232, %v1218, %v1034
      %v1236 = vsel %vm1232, %v1219, %v1036
      %v1237 = vsel %vm1232, %v1220, %v1038
      %v1238 = vsel %vm1232, %v1221, %v1040
      %v1239 = vsel %vm1232, %v1222, %v1042
      %v1240 = vsel %vm1232, %v1223, %v1044
      %v1241 = vsel %vm1232, %v1224, %v1046
      %v1242 = vsel %vm1232, %v1225, %v1048
      %v1243 = vsel %vm1232, %v1226, %v1050
      %v1244 = vsel %vm1232, %v1227, %v1052
      %v1245 = vsel %vm1232, %v1228, %v1054
      %v1246 = vsel %vm1232, %v1229, %v1056
      %v1247 = vsel %vm1232, %v1230, %v1058
      %v1248 = vsel %vm1232, %v1231, %v1060
      %vm1249 = vcmask 261120
      %v1250 = vsel %vm1249, %v1233, %v1083
      %v1251 = vsel %vm1249, %v1234, %v1085
      %v1252 = vsel %vm1249, %v1235, %v1087
      %v1253 = vsel %vm1249, %v1236, %v1089
      %v1254 = vsel %vm1249, %v1237, %v1091
      %v1255 = vsel %vm1249, %v1238, %v1093
      %v1256 = vsel %vm1249, %v1239, %v1095
      %v1257 = vsel %vm1249, %v1240, %v1097
      %v1258 = vsel %vm1249, %v1241, %v1099
      %v1259 = vsel %vm1249, %v1242, %v1101
      %v1260 = vsel %vm1249, %v1243, %v1103
      %v1261 = vsel %vm1249, %v1244, %v1105
      %v1262 = vsel %vm1249, %v1245, %v1107
      %v1263 = vsel %vm1249, %v1246, %v1109
      %v1264 = vsel %vm1249, %v1247, %v1111
      %v1265 = vsel %vm1249, %v1248, %v1113
      %v1266 = vld [vmem:[%s3] sm:$0xff]
      %v1267 = vld [vmem:[%s3 + $0x8] sm:$0xff]
      %v1268 = vld [vmem:[%s3 + $0x10] sm:$0xff]
      %v1269 = vld [vmem:[%s3 + $0x18] sm:$0xff]
      %v1270 = vld [vmem:[%s3 + $0x20] sm:$0xf]
      %v1271 = vld [vmem:[%s4] sm:$0x1]
      %v1273 = vlaneseq
      %v1274 = vshrl.u32 %v1273, 7
      %v1275 = vsub.s32 0, %v1274
      %v1276 = vrot.slane %v1271, %v1275
      %vm1278 = vcmask 293888
      %v1280 = vsel %vm1278, %v1250, 0
      %v1283 = vsel %vm1278, %v1251, 0
      %v1286 = vsel %vm1278, %v1252, 0
      %v1289 = vsel %vm1278, %v1253, 0
      %v1292 = vsel %vm1278, %v1254, 0
      %v1295 = vsel %vm1278, %v1255, 0
      %v1298 = vsel %vm1278, %v1256, 0
      %v1301 = vsel %vm1278, %v1257, 0
      %v1304 = vsel %vm1278, %v1258, 0
      %v1307 = vsel %vm1278, %v1259, 0
      %v1310 = vsel %vm1278, %v1260, 0
      %v1313 = vsel %vm1278, %v1261, 0
      %v1316 = vsel %vm1278, %v1262, 0
      %v1319 = vsel %vm1278, %v1263, 0
      %v1322 = vsel %vm1278, %v1264, 0
      %v1325 = vsel %vm1278, %v1265, 0
      %vm1327 = vcmask 1043456
      %v1329 = vsel %vm1327, %v1270, 0
      %1331 = vmatprep.subr.mxu0 0.0
      %1332 = vmatpush1.msra.mxu0 0.0
      %1333 = vmatprep.subr.mxu0 0.0
      %1334 = vmatpush1.msra.mxu0 0.0
      %1335 = vmatprep.subr.mxu0 0.0
      %1336 = vmatpush1.msra.mxu0 0.0
      %1337 = vmatprep.subr.mxu0 0.0
      %1338 = vmatpush1.msra.mxu0 0.0
      %1339 = vmatprep.subr.mxu0 0.0
      %1340 = vmatpush1.msra.mxu0 0.0
      %1341 = vmatprep.subr.mxu0 0.0
      %1342 = vmatpush1.msra.mxu0 0.0
      %1343 = vmatprep.subr.mxu0 0.0
      %1344 = vmatpush1.msra.mxu0 0.0
      %1345 = vmatprep.subr.mxu0 0.0
      %1346 = vmatpush1.msra.mxu0 0.0
      %1347 = vmatprep.subr.mxu0 0.0
      %1348 = vmatpush1.msra.mxu0 0.0
      %1349 = vmatprep.subr.mxu0 0.0
      %1350 = vmatpush1.msra.mxu0 0.0
      %1351 = vmatprep.subr.mxu0 0.0
      %1352 = vmatpush1.msra.mxu0 0.0
      %1353 = vmatprep.subr.mxu0 0.0
      %1354 = vmatpush1.msra.mxu0 %v1329
      %1355 = vmatprep.subr.mxu0 0.0
      %1356 = vmatpush1.msra.mxu0 %v1269
      %1357 = vmatprep.subr.mxu0 0.0
      %1358 = vmatpush1.msra.mxu0 %v1268
      %1359 = vmatprep.subr.mxu0 0.0
      %1360 = vmatpush1.msra.mxu0 %v1267
      %1361 = vmatprep.subr.mxu0 0.0
      %1362 = vmatpush1.msra.mxu0 %v1266
      %1363 = vmatprep.subr.mxu0 0.0
      %1364 = vmatpush2.msra.mxu0 0.0
      %1365 = vmatprep.subr.mxu0 0.0
      %1366 = vmatpush2.msra.mxu0 0.0
      %1367 = vmatprep.subr.mxu0 0.0
      %1368 = vmatpush2.msra.mxu0 0.0
      %1369 = vmatprep.subr.mxu0 0.0
      %1370 = vmatpush2.msra.mxu0 0.0
      %1371 = vmatprep.subr.mxu0 0.0
      %1372 = vmatpush2.msra.mxu0 0.0
      %1373 = vmatprep.subr.mxu0 0.0
      %1374 = vmatpush2.msra.mxu0 0.0
      %1375 = vmatprep.subr.mxu0 0.0
      %1376 = vmatpush2.msra.mxu0 0.0
      %1377 = vmatprep.subr.mxu0 0.0
      %1378 = vmatpush2.msra.mxu0 0.0
      %1379 = vmatprep.subr.mxu0 0.0
      %1380 = vmatpush2.msra.mxu0 0.0
      %1381 = vmatprep.subr.mxu0 0.0
      %1382 = vmatpush2.msra.mxu0 0.0
      %1383 = vmatprep.subr.mxu0 0.0
      %1384 = vmatpush2.msra.mxu0 0.0
      %1385 = vmatprep.subr.mxu0 0.0
      %1386 = vmatpush2.msra.mxu0 0.0
      %1387 = vmatprep.subr.mxu0 0.0
      %1388 = vmatpush2.msra.mxu0 0.0
      %1389 = vmatprep.subr.mxu0 0.0
      %1390 = vmatpush2.msra.mxu0 0.0
      %1391 = vmatprep.subr.mxu0 0.0
      %1392 = vmatpush2.msra.mxu0 0.0
      %1393 = vmatprep.subr.mxu0 0.0
      %1394 = vmatpush2.msra.mxu0 0.0
      %1395 = vmatprep.mubr.f32.mxu0 0.0
      %1396 = vmatmul.mubr.f32.gmra.mxu0 %v1280
      %v1397 = vpop.f32.mrf.mxu0
      %v1398 = vadd.f32 %v1276, %v1397
      %v1399 = vpop.f32.mrf.mxu0
      %1400 = vmatprep.mubr.f32.mxu0 0.0
      %1401 = vmatmul.mubr.f32.gmra.mxu0 %v1283
      %v1402 = vpop.f32.mrf.mxu0
      %v1403 = vadd.f32 %v1276, %v1402
      %v1404 = vpop.f32.mrf.mxu0
      %1405 = vmatprep.mubr.f32.mxu0 0.0
      %1406 = vmatmul.mubr.f32.gmra.mxu0 %v1286
      %v1407 = vpop.f32.mrf.mxu0
      %v1408 = vadd.f32 %v1276, %v1407
      %v1409 = vpop.f32.mrf.mxu0
      %1410 = vmatprep.mubr.f32.mxu0 0.0
      %1411 = vmatmul.mubr.f32.gmra.mxu0 %v1289
      %v1412 = vpop.f32.mrf.mxu0
      %v1413 = vadd.f32 %v1276, %v1412
      %v1414 = vpop.f32.mrf.mxu0
      %1415 = vmatprep.mubr.f32.mxu0 0.0
      %1416 = vmatmul.mubr.f32.gmra.mxu0 %v1292
      %v1417 = vpop.f32.mrf.mxu0
      %v1418 = vadd.f32 %v1276, %v1417
      %v1419 = vpop.f32.mrf.mxu0
      %1420 = vmatprep.mubr.f32.mxu0 0.0
      %1421 = vmatmul.mubr.f32.gmra.mxu0 %v1295
      %v1422 = vpop.f32.mrf.mxu0
      %v1423 = vadd.f32 %v1276, %v1422
      %v1424 = vpop.f32.mrf.mxu0
      %1425 = vmatprep.mubr.f32.mxu0 0.0
      %1426 = vmatmul.mubr.f32.gmra.mxu0 %v1298
      %v1427 = vpop.f32.mrf.mxu0
      %v1428 = vadd.f32 %v1276, %v1427
      %v1429 = vpop.f32.mrf.mxu0
      %1430 = vmatprep.mubr.f32.mxu0 0.0
      %1431 = vmatmul.mubr.f32.gmra.mxu0 %v1301
      %v1432 = vpop.f32.mrf.mxu0
      %v1433 = vadd.f32 %v1276, %v1432
      %v1434 = vpop.f32.mrf.mxu0
      %1435 = vmatprep.mubr.f32.mxu0 0.0
      %1436 = vmatmul.mubr.f32.gmra.mxu0 %v1304
      %v1437 = vpop.f32.mrf.mxu0
      %v1438 = vadd.f32 %v1276, %v1437
      %v1439 = vpop.f32.mrf.mxu0
      %1440 = vmatprep.mubr.f32.mxu0 0.0
      %1441 = vmatmul.mubr.f32.gmra.mxu0 %v1307
      %v1442 = vpop.f32.mrf.mxu0
      %v1443 = vadd.f32 %v1276, %v1442
      %v1444 = vpop.f32.mrf.mxu0
      %1445 = vmatprep.mubr.f32.mxu0 0.0
      %1446 = vmatmul.mubr.f32.gmra.mxu0 %v1310
      %v1447 = vpop.f32.mrf.mxu0
      %v1448 = vadd.f32 %v1276, %v1447
      %v1449 = vpop.f32.mrf.mxu0
      %1450 = vmatprep.mubr.f32.mxu0 0.0
      %1451 = vmatmul.mubr.f32.gmra.mxu0 %v1313
      %v1452 = vpop.f32.mrf.mxu0
      %v1453 = vadd.f32 %v1276, %v1452
      %v1454 = vpop.f32.mrf.mxu0
      %1455 = vmatprep.mubr.f32.mxu0 0.0
      %1456 = vmatmul.mubr.f32.gmra.mxu0 %v1316
      %v1457 = vpop.f32.mrf.mxu0
      %v1458 = vadd.f32 %v1276, %v1457
      %v1459 = vpop.f32.mrf.mxu0
      %1460 = vmatprep.mubr.f32.mxu0 0.0
      %1461 = vmatmul.mubr.f32.gmra.mxu0 %v1319
      %v1462 = vpop.f32.mrf.mxu0
      %v1463 = vadd.f32 %v1276, %v1462
      %v1464 = vpop.f32.mrf.mxu0
      %1465 = vmatprep.mubr.f32.mxu0 0.0
      %1466 = vmatmul.mubr.f32.gmra.mxu0 %v1322
      %v1467 = vpop.f32.mrf.mxu0
      %v1468 = vadd.f32 %v1276, %v1467
      %v1469 = vpop.f32.mrf.mxu0
      %1470 = vmatprep.mubr.f32.mxu0 0.0
      %1471 = vmatmul.mubr.f32.gmra.mxu0 %v1325
      %v1472 = vpop.f32.mrf.mxu0
      %v1473 = vadd.f32 %v1276, %v1472
      %v1474 = vpop.f32.mrf.mxu0
      %1475 = vdwg.mxu0
      %1476 = vst.msk [vmem:[%s485] sm:$0xff] %vm1147, %v1398
      %1477 = vst.msk [vmem:[%s485 + $0x8] sm:$0xff] %vm1147, %v1403
      %1478 = vst.msk [vmem:[%s485 + $0x10] sm:$0xff] %vm1147, %v1408
      %1479 = vst.msk [vmem:[%s485 + $0x18] sm:$0xff] %vm1147, %v1413
      %1480 = vst.msk [vmem:[%s485 + $0x20] sm:$0xff] %vm1147, %v1418
      %1481 = vst.msk [vmem:[%s485 + $0x28] sm:$0xff] %vm1147, %v1423
      %1482 = vst.msk [vmem:[%s485 + $0x30] sm:$0xff] %vm1147, %v1428
      %1483 = vst.msk [vmem:[%s485 + $0x38] sm:$0xff] %vm1147, %v1433
      %1484 = vst.msk [vmem:[%s485 + $0x40] sm:$0xff] %vm1147, %v1438
      %1485 = vst.msk [vmem:[%s485 + $0x48] sm:$0xff] %vm1147, %v1443
      %1486 = vst.msk [vmem:[%s485 + $0x50] sm:$0xff] %vm1147, %v1448
      %1487 = vst.msk [vmem:[%s485 + $0x58] sm:$0xff] %vm1147, %v1453
      %1488 = vst.msk [vmem:[%s485 + $0x60] sm:$0xff] %vm1147, %v1458
      %1489 = vst.msk [vmem:[%s485 + $0x68] sm:$0xff] %vm1147, %v1463
      %1490 = vst.msk [vmem:[%s485 + $0x70] sm:$0xff] %vm1147, %v1468
      %1491 = vst.msk [vmem:[%s485 + $0x78] sm:$0xff] %vm1147, %v1473
      %v1492 = vsel %vm1147, %v1398, 0.0
      %v1493 = vsel %vm1147, %v1403, 0.0
      %v1494 = vadd.f32 %v1492, %v1493
      %v1495 = vsel %vm1147, %v1408, 0.0
      %v1496 = vadd.f32 %v1494, %v1495
      %v1497 = vsel %vm1147, %v1413, 0.0
      %v1498 = vadd.f32 %v1496, %v1497
      %v1499 = vsel %vm1147, %v1418, 0.0
      %v1500 = vadd.f32 %v1498, %v1499
      %v1501 = vsel %vm1147, %v1423, 0.0
      %v1502 = vadd.f32 %v1500, %v1501
      %v1503 = vsel %vm1147, %v1428, 0.0
      %v1504 = vadd.f32 %v1502, %v1503
      %v1505 = vsel %vm1147, %v1433, 0.0
      %v1506 = vadd.f32 %v1504, %v1505
      %v1507 = vsel %vm1147, %v1438, 0.0
      %v1508 = vadd.f32 %v1506, %v1507
      %v1509 = vsel %vm1147, %v1443, 0.0
      %v1510 = vadd.f32 %v1508, %v1509
      %v1511 = vsel %vm1147, %v1448, 0.0
      %v1512 = vadd.f32 %v1510, %v1511
      %v1513 = vsel %vm1147, %v1453, 0.0
      %v1514 = vadd.f32 %v1512, %v1513
      %v1515 = vsel %vm1147, %v1458, 0.0
      %v1516 = vadd.f32 %v1514, %v1515
      %v1517 = vsel %vm1147, %v1463, 0.0
      %v1518 = vadd.f32 %v1516, %v1517
      %v1519 = vsel %vm1147, %v1468, 0.0
      %v1520 = vadd.f32 %v1518, %v1519
      %v1521 = vsel %vm1147, %v1473, 0.0
      %v1522 = vadd.f32 %v1520, %v1521
      %v1523 = vrot.slane %v1522, 4
      %v1524 = vadd.f32 %v1522, %v1523
      %v1525 = vrot.slane %v1524, 2
      %v1526 = vadd.f32 %v1524, %v1525
      %v1527 = vrot.slane %v1526, 1
      %v1528 = vadd.f32 %v1526, %v1527
      %v1529 = vmul.f32 %v1398, %v1398
      %v1530 = vmul.f32 %v1403, %v1403
      %v1531 = vmul.f32 %v1408, %v1408
      %v1532 = vmul.f32 %v1413, %v1413
      %v1533 = vmul.f32 %v1418, %v1418
      %v1534 = vmul.f32 %v1423, %v1423
      %v1535 = vmul.f32 %v1428, %v1428
      %v1536 = vmul.f32 %v1433, %v1433
      %v1537 = vmul.f32 %v1438, %v1438
      %v1538 = vmul.f32 %v1443, %v1443
      %v1539 = vmul.f32 %v1448, %v1448
      %v1540 = vmul.f32 %v1453, %v1453
      %v1541 = vmul.f32 %v1458, %v1458
      %v1542 = vmul.f32 %v1463, %v1463
      %v1543 = vmul.f32 %v1468, %v1468
      %v1544 = vmul.f32 %v1473, %v1473
      %v1545 = vsel %vm1147, %v1529, 0.0
      %v1546 = vsel %vm1147, %v1530, 0.0
      %v1547 = vadd.f32 %v1545, %v1546
      %v1548 = vsel %vm1147, %v1531, 0.0
      %v1549 = vadd.f32 %v1547, %v1548
      %v1550 = vsel %vm1147, %v1532, 0.0
      %v1551 = vadd.f32 %v1549, %v1550
      %v1552 = vsel %vm1147, %v1533, 0.0
      %v1553 = vadd.f32 %v1551, %v1552
      %v1554 = vsel %vm1147, %v1534, 0.0
      %v1555 = vadd.f32 %v1553, %v1554
      %v1556 = vsel %vm1147, %v1535, 0.0
      %v1557 = vadd.f32 %v1555, %v1556
      %v1558 = vsel %vm1147, %v1536, 0.0
      %v1559 = vadd.f32 %v1557, %v1558
      %v1560 = vsel %vm1147, %v1537, 0.0
      %v1561 = vadd.f32 %v1559, %v1560
      %v1562 = vsel %vm1147, %v1538, 0.0
      %v1563 = vadd.f32 %v1561, %v1562
      %v1564 = vsel %vm1147, %v1539, 0.0
      %v1565 = vadd.f32 %v1563, %v1564
      %v1566 = vsel %vm1147, %v1540, 0.0
      %v1567 = vadd.f32 %v1565, %v1566
      %v1568 = vsel %vm1147, %v1541, 0.0
      %v1569 = vadd.f32 %v1567, %v1568
      %v1570 = vsel %vm1147, %v1542, 0.0
      %v1571 = vadd.f32 %v1569, %v1570
      %v1572 = vsel %vm1147, %v1543, 0.0
      %v1573 = vadd.f32 %v1571, %v1572
      %v1574 = vsel %vm1147, %v1544, 0.0
      %v1575 = vadd.f32 %v1573, %v1574
      %v1576 = vrot.slane %v1575, 4
      %v1577 = vadd.f32 %v1575, %v1576
      %v1578 = vrot.slane %v1577, 2
      %v1579 = vadd.f32 %v1577, %v1578
      %v1580 = vrot.slane %v1579, 1
      %v1581 = vadd.f32 %v1579, %v1580
      %v1582 = vsel %vm545, %v1528, %v1581
      %vm1583 = vcmask 58368
      %1584 = vst.msk [vmem:[%s494] sm:$0x3] %vm1583, %v1582
      %s1585 = smul.u32 8, %s25
      %p1586 = scmp.lt.s32.totalorder %s24, 1
      %s1587 = scalar_select %p1586, %s24, 1
      %p1588 = scmp.lt.s32.totalorder %s1585, 15
      %s1589 = scalar_select %p1588, %s1585, 15
      %s1590 = smul.addr %s1589, 2
      %s1591 = smul.addr %s1587, 32
      %s1592 = sadd.s32 %s1590, %s1591
      %s1593 = smul.addr %s1592, 8
      %s1594 = scalar_lea.vmem %s7, %s1593
      %p1595 = scmp.lt.s32.totalorder %s24, 1
      %s1596 = scalar_select %p1595, %s24, 1
      %p1597 = scmp.lt.s32.totalorder %s25, 1
      %s1598 = scalar_select %p1597, %s25, 1
      %s1599 = smul.addr %s1596, 2
      %s1600 = sadd.s32 %s1598, %s1599
      %s1601 = smul.addr %s1600, 2
      %s1602 = scalar_lea.vmem %s8, %s1601
      // Predicated region
      $region49: #{double_conv.3} parent=47 // pred_check
        %p1603 = pneg %p236
      $region50: #{double_conv.3} parent=47 // pred_check_branch
        %1605 = sbr.rel (%p1603) target = $region52
      $region51: #{double_conv.3} parent=47 // pred_region
        %s1606 = smul.u32 8, %s25
      $region52: #{double_conv.3} parent=47 // pred_fallthru
        _
      // Predicated region
      $region53: #{double_conv.3} parent=47 // pred_check
        %p1607 = pneg %p264
      $region54: #{double_conv.3} parent=47 // pred_check_branch
        %1609 = sbr.rel (%p1607) target = $region56
      $region55: #{double_conv.3} parent=47 // pred_region
        _
      $region56: #{double_conv.3} parent=47 // pred_fallthru
        _
    $region48: #{double_conv.3} parent=5 // pred_fallthru
      _
    %p1610 = scmp.le.s32.totalorder 2, %s15
    // Predicated region
    $region57: #{double_conv.3} parent=5 // pred_check
      %p1611 = pneg %p1610
    $region58: #{double_conv.3} parent=5 // pred_check_branch
      %1613 = sbr.rel (%p1611) target = $region60
    $region59: #{double_conv.3} parent=5 // pred_region
      %s1614 = ssub.s32 %s15, 2
      // Predicated region
      $region61: #{double_conv.3} parent=59 // pred_check
        %p1615 = pneg %p242
      $region62: #{double_conv.3} parent=59 // pred_check_branch
        %1617 = sbr.rel (%p1615) target = $region64
      $region63: #{double_conv.3} parent=59 // pred_region
        %s1618 = smul.u32 8, %s27
        %p1619 = scmp.lt.s32.totalorder %s26, 1
        %s1620 = scalar_select %p1619, %s26, 1
        %p1621 = scmp.lt.s32.totalorder %s1618, 15
        %s1622 = scalar_select %p1621, %s1618, 15
        %s1623 = smul.addr %s1622, 2
        %s1624 = smul.addr %s1620, 32
        %s1625 = sadd.s32 %s1623, %s1624
        %s1626 = smul.addr %s1625, 8
        %s1627 = scalar_lea.vmem %s7, %s1626
      $region64: #{double_conv.3} parent=59 // pred_fallthru
        _
      // Predicated region
      $region65: #{double_conv.3} parent=59 // pred_check
        %p1628 = pneg %p270
      $region66: #{double_conv.3} parent=59 // pred_check_branch
        %1630 = sbr.rel (%p1628) target = $region68
      $region67: #{double_conv.3} parent=59 // pred_region
        %p1631 = scmp.lt.s32.totalorder %s26, 1
        %s1632 = scalar_select %p1631, %s26, 1
        %p1633 = scmp.lt.s32.totalorder %s27, 1
        %s1634 = scalar_select %p1633, %s27, 1
        %s1635 = smul.addr %s1632, 2
        %s1636 = sadd.s32 %s1634, %s1635
        %s1637 = smul.addr %s1636, 2
        %s1638 = scalar_lea.vmem %s8, %s1637
      $region68: #{double_conv.3} parent=59 // pred_fallthru
        _
    $region60: #{double_conv.3} parent=5 // pred_fallthru
      _
  $region6: #{double_conv.3} parent=0 // loop_footer
    %s19 = sadd.s32 1, %s15
  $region7: #{double_conv.3} parent=0 // loop_footer_branch
    %14 = sbr.rel target = $region3
  $region8: #{double_conv.3} parent=0 // loop_exit
    _

// kernel: double_conv.4
$region0: #{double_conv.4}
  #allocation0 [shape = 'u32[]', space=smem, size = 0x4, offset = 0x4, fixed_abs, tag = 'smem constant byte address 0x4 - core index']
  #allocation1 [shape = 'u32[144,128]{1,0:T(1,128)}', space=vmem, size = 0x12000, scoped, tag = 'internal scratch']
  %s0 = inlined_call_operand.vmem [shape: f32[2,16,16,8], index: 0, kind: input, shape index: {}, may-alias: {0,1,2}]
  %s1 = inlined_call_operand.vmem [shape: f32[2,16,16,8], index: 1, kind: input, shape index: {}, may-alias: {0,1,2}]
  %s2 = inlined_call_operand.vmem [shape: f32[2,16,16,8], index: 2, kind: input, shape index: {}, may-alias: {0,1,2}]
  %s3 = inlined_call_operand.vmem [shape: f32[72,8], index: 3, kind: input, shape index: {}]
  %s4 = inlined_call_operand.vmem [shape: f32[1,8], index: 4, kind: input, shape index: {}]
  %s5 = inlined_call_operand.vmem [shape: f32[1,8], index: 5, kind: input, shape index: {}]
  %s6 = inlined_call_operand.vmem [shape: f32[1,8], index: 6, kind: input, shape index: {}]
  %s7 = inlined_call_operand.vmem [shape: f32[2,16,16,8], index: 7, kind: output, shape index: {0}]
  %s8 = inlined_call_operand.vmem [shape: f32[2,2,2,8], index: 8, kind: output, shape index: {1}]
  %9 = xla_tuple %s7, %s8
  %s10 = sld [smem:[#allocation0]]
  $region69: #{double_conv.4} parent=0
    _
  %s12 = ssub.s32 1, %s10
  %s13 = scalar_select 0, %s12, %s10
  loop: start=0, step=1, limit=6
  $region2: #{double_conv.4} parent=0 // loop_pre_header
    _
  $region3: #{double_conv.4} parent=0 // loop_header
    %s15 = sphi 0, %s19
    %p16 = scmp.ge.s32.totalorder %s15, 6
    %s22 = sphi 0, %s34
    %s23 = sphi 0, %s30
    %s24 = sphi 0, %s22
    %s25 = sphi 0, %s23
    %s26 = sphi 0, %s24
    %s27 = sphi 0, %s25
    %s39 = sphi 0, %s41
    %s42 = sphi 0, %s39
    %s43 = sphi 0, %s42
    %s59 = sphi 0, %s43
    %s75 = sphi 0, %s77
    %s78 = sphi 0, %s75
    %s79 = sphi 0, %s78
    %s95 = sphi 0, %s79
    %s111 = sphi 0, %s113
    %s114 = sphi 0, %s111
    %s115 = sphi 0, %s114
    %s131 = sphi 0, %s115
    %s135 = sphi 0, %s135
    %s137 = sphi 0, %s135
    %s138 = sphi 0, %s137
    %s152 = sphi 0, %s138
    %s156 = sphi 0, %s156
    %s158 = sphi 0, %s156
    %s159 = sphi 0, %s158
    %s173 = sphi 0, %s159
    %s177 = sphi 0, %s177
    %s179 = sphi 0, %s177
    %s180 = sphi 0, %s179
    %s194 = sphi 0, %s180
    %s198 = sphi 0, %s198
    %s200 = sphi 0, %s198
    %s201 = sphi 0, %s200
    %s215 = sphi 0, %s201
    %s223 = sphi 0, %s225
    %s226 = sphi 0, %s223
    %s227 = sphi 0, %s226
    %s243 = sphi 0, %s227
    %s251 = sphi 0, %s253
    %s254 = sphi 0, %s251
    %s255 = sphi 0, %s254
    %s271 = sphi 0, %s255
  $region4: #{double_conv.4} parent=0 // loop_header_branch
    %18 = sbr.rel (%p16) target = $region8
  $region5: #{double_conv.4} parent=0 // loop_body
    %s20 = ssub.s32 %s15, 1
    %s21 = ssub.s32 %s15, 2
    %s28 = sadd.s32 1, %s23
    %p29 = scmp.ge.s32.totalorder %s28, 2
    %s30 = scalar_select %p29, 0, %s28
    %s31 = sadd.s32 1, %s22
    %s32 = scalar_select %p29, %s31, %s22
    %p33 = scmp.ge.s32.totalorder %s32, 2
    %s34 = scalar_select %p33, 0, %s32
    %s35 = ssub.s32 %s22, %s34
    %s36 = ssub.s32 %s23, %s30
    %s37 = sor.u32 %s35, %s36
    %p38 = scmp.eq.s32.totalorder %s37, 0
    %s40 = sadd.s32 %s39, 1
    %s41 = scalar_select %p38, %s39, %s40
    %p44 = pneg %p38
    %p45 = scmp.eq.s32.totalorder %s15, 3
    %p46 = por %p44, %p45
    %p47 = scmp.ne.s32.totalorder %s39, %s42
    %p48 = scmp.eq.s32.totalorder %s15, 0
    %p49 = por %p47, %p48
    %p50 = scmp.ne.s32.totalorder %s39, %s42
    %p51 = scmp.eq.s32.totalorder %s20, 3
    %p52 = por %p50, %p51
    %p53 = scmp.ne.s32.totalorder %s42, %s43
    %p54 = scmp.eq.s32.totalorder %s20, 0
    %p55 = por %p53, %p54
    %p56 = scmp.ne.s32.totalorder %s42, %s43
    %p57 = scmp.eq.s32.totalorder %s21, 3
    %p58 = por %p56, %p57
    %p60 = scmp.ne.s32.totalorder %s43, %s59
    %p61 = scmp.eq.s32.totalorder %s21, 0
    %p62 = por %p60, %p61
    %s63 = smul.u32 %s23, 8
    %s64 = ssub.s32 %s63, 1
    %p65 = scmp.gt.s32.totalorder %s64, 0
    %s66 = scalar_select %p65, %s64, 0
    %s67 = smul.u32 %s30, 8
    %s68 = ssub.s32 %s67, 1
    %p69 = scmp.gt.s32.totalorder %s68, 0
    %s70 = scalar_select %p69, %s68, 0
    %s71 = ssub.s32 %s22, %s34
    %s72 = ssub.s32 %s66, %s70
    %s73 = sor.u32 %s71, %s72
    %p74 = scmp.eq.s32.totalorder %s73, 0
    %s76 = sadd.s32 %s75, 1
    %s77 = scalar_select %p74, %s75, %s76
    %p80 = pneg %p74
    %p81 = scmp.eq.s32.totalorder %s15, 3
    %p82 = por %p80, %p81
    %p83 = scmp.ne.s32.totalorder %s75, %s78
    %p84 = scmp.eq.s32.totalorder %s15, 0
    %p85 = por %p83, %p84
    %p86 = scmp.ne.s32.totalorder %s75, %s78
    %p87 = scmp.eq.s32.totalorder %s20, 3
    %p88 = por %p86, %p87
    %p89 = scmp.ne.s32.totalorder %s78, %s79
    %p90 = scmp.eq.s32.totalorder %s20, 0
    %p91 = por %p89, %p90
    %p92 = scmp.ne.s32.totalorder %s78, %s79
    %p93 = scmp.eq.s32.totalorder %s21, 3
    %p94 = por %p92, %p93
    %p96 = scmp.ne.s32.totalorder %s79, %s95
    %p97 = scmp.eq.s32.totalorder %s21, 0
    %p98 = por %p96, %p97
    %s99 = sadd.s32 %s23, 1
    %s100 = smul.u32 %s99, 8
    %p101 = scmp.lt.s32.totalorder %s100, 15
    %s102 = scalar_select %p101, %s100, 15
    %s103 = sadd.s32 %s30, 1
    %s104 = smul.u32 %s103, 8
    %p105 = scmp.lt.s32.totalorder %s104, 15
    %s106 = scalar_select %p105, %s104, 15
    %s107 = ssub.s32 %s22, %s34
    %s108 = ssub.s32 %s102, %s106
    %s109 = sor.u32 %s107, %s108
    %p110 = scmp.eq.s32.totalorder %s109, 0
    %s112 = sadd.s32 %s111, 1
    %s113 = scalar_select %p110, %s111, %s112
    %p116 = pneg %p110
    %p117 = scmp.eq.s32.totalorder %s15, 3
    %p118 = por %p116, %p117
    %p119 = scmp.ne.s32.totalorder %s111, %s114
    %p120 = scmp.eq.s32.totalorder %s15, 0
    %p121 = por %p119, %p120
    %p122 = scmp.ne.s32.totalorder %s111, %s114
    %p123 = scmp.eq.s32.totalorder %s20, 3
    %p124 = por %p122, %p123
    %p125 = scmp.ne.s32.totalorder %s114, %s115
    %p126 = scmp.eq.s32.totalorder %s20, 0
    %p127 = por %p125, %p126
    %p128 = scmp.ne.s32.totalorder %s114, %s115
    %p129 = scmp.eq.s32.totalorder %s21, 3
    %p130 = por %p128, %p129
    %p132 = scmp.ne.s32.totalorder %s115, %s131
    %p133 = scmp.eq.s32.totalorder %s21, 0
    %p134 = por %p132, %p133
    %s136 = sadd.s32 %s135, 1
    %p139 = scmp.eq.s32.totalorder %s15, 3
    %p140 = scmp.ne.s32.totalorder %s135, %s137
    %p141 = scmp.eq.s32.totalorder %s15, 0
    %p142 = por %p140, %p141
    %p143 = scmp.ne.s32.totalorder %s135, %s137
    %p144 = scmp.eq.s32.totalorder %s20, 3
    %p145 = por %p143, %p144
    %p146 = scmp.ne.s32.totalorder %s137, %s138
    %p147 = scmp.eq.s32.totalorder %s20, 0
    %p148 = por %p146, %p147
    %p149 = scmp.ne.s32.totalorder %s137, %s138
    %p150 = scmp.eq.s32.totalorder %s21, 3
    %p151 = por %p149, %p150
    %p153 = scmp.ne.s32.totalorder %s138, %s152
    %p154 = scmp.eq.s32.totalorder %s21, 0
    %p155 = por %p153, %p154
    %s157 = sadd.s32 %s156, 1
    %p160 = scmp.eq.s32.totalorder %s15, 3
    %p161 = scmp.ne.s32.totalorder %s156, %s158
    %p162 = scmp.eq.s32.totalorder %s15, 0
    %p163 = por %p161, %p162
    %p164 = scmp.ne.s32.totalorder %s156, %s158
    %p165 = scmp.eq.s32.totalorder %s20, 3
    %p166 = por %p164, %p165
    %p167 = scmp.ne.s32.totalorder %s158, %s159
    %p168 = scmp.eq.s32.totalorder %s20, 0
    %p169 = por %p167, %p168
    %p170 = scmp.ne.s32.totalorder %s158, %s159
    %p171 = scmp.eq.s32.totalorder %s21, 3
    %p172 = por %p170, %p171
    %p174 = scmp.ne.s32.totalorder %s159, %s173
    %p175 = scmp.eq.s32.totalorder %s21, 0
    %p176 = por %p174, %p175
    %s178 = sadd.s32 %s177, 1
    %p181 = scmp.eq.s32.totalorder %s15, 3
    %p182 = scmp.ne.s32.totalorder %s177, %s179
    %p183 = scmp.eq.s32.totalorder %s15, 0
    %p184 = por %p182, %p183
    %p185 = scmp.ne.s32.totalorder %s177, %s179
    %p186 = scmp.eq.s32.totalorder %s20, 3
    %p187 = por %p185, %p186
    %p188 = scmp.ne.s32.totalorder %s179, %s180
    %p189 = scmp.eq.s32.totalorder %s20, 0
    %p190 = por %p188, %p189
    %p191 = scmp.ne.s32.totalorder %s179, %s180
    %p192 = scmp.eq.s32.totalorder %s21, 3
    %p193 = por %p191, %p192
    %p195 = scmp.ne.s32.totalorder %s180, %s194
    %p196 = scmp.eq.s32.totalorder %s21, 0
    %p197 = por %p195, %p196
    %s199 = sadd.s32 %s198, 1
    %p202 = scmp.eq.s32.totalorder %s15, 3
    %p203 = scmp.ne.s32.totalorder %s198, %s200
    %p204 = scmp.eq.s32.totalorder %s15, 0
    %p205 = por %p203, %p204
    %p206 = scmp.ne.s32.totalorder %s198, %s200
    %p207 = scmp.eq.s32.totalorder %s20, 3
    %p208 = por %p206, %p207
    %p209 = scmp.ne.s32.totalorder %s200, %s201
    %p210 = scmp.eq.s32.totalorder %s20, 0
    %p211 = por %p209, %p210
    %p212 = scmp.ne.s32.totalorder %s200, %s201
    %p213 = scmp.eq.s32.totalorder %s21, 3
    %p214 = por %p212, %p213
    %p216 = scmp.ne.s32.totalorder %s201, %s215
    %p217 = scmp.eq.s32.totalorder %s21, 0
    %p218 = por %p216, %p217
    %s219 = ssub.s32 %s22, %s34
    %s220 = ssub.s32 %s23, %s30
    %s221 = sor.u32 %s219, %s220
    %p222 = scmp.eq.s32.totalorder %s221, 0
    %s224 = sadd.s32 %s223, 1
    %s225 = scalar_select %p222, %s223, %s224
    %p228 = pneg %p222
    %p229 = scmp.eq.s32.totalorder %s15, 3
    %p230 = por %p228, %p229
    %p231 = scmp.ne.s32.totalorder %s223, %s226
    %p232 = scmp.eq.s32.totalorder %s15, 0
    %p233 = por %p231, %p232
    %p234 = scmp.ne.s32.totalorder %s223, %s226
    %p235 = scmp.eq.s32.totalorder %s20, 3
    %p236 = por %p234, %p235
    %p237 = scmp.ne.s32.totalorder %s226, %s227
    %p238 = scmp.eq.s32.totalorder %s20, 0
    %p239 = por %p237, %p238
    %p240 = scmp.ne.s32.totalorder %s226, %s227
    %p241 = scmp.eq.s32.totalorder %s21, 3
    %p242 = por %p240, %p241
    %p244 = scmp.ne.s32.totalorder %s227, %s243
    %p245 = scmp.eq.s32.totalorder %s21, 0
    %p246 = por %p244, %p245
    %s247 = ssub.s32 %s22, %s34
    %s248 = ssub.s32 %s23, %s30
    %s249 = sor.u32 %s247, %s248
    %p250 = scmp.eq.s32.totalorder %s249, 0
    %s252 = sadd.s32 %s251, 1
    %s253 = scalar_select %p250, %s251, %s252
    %p256 = pneg %p250
    %p257 = scmp.eq.s32.totalorder %s15, 3
    %p258 = por %p256, %p257
    %p259 = scmp.ne.s32.totalorder %s251, %s254
    %p260 = scmp.eq.s32.totalorder %s15, 0
    %p261 = por %p259, %p260
    %p262 = scmp.ne.s32.totalorder %s251, %s254
    %p263 = scmp.eq.s32.totalorder %s20, 3
    %p264 = por %p262, %p263
    %p265 = scmp.ne.s32.totalorder %s254, %s255
    %p266 = scmp.eq.s32.totalorder %s20, 0
    %p267 = por %p265, %p266
    %p268 = scmp.ne.s32.totalorder %s254, %s255
    %p269 = scmp.eq.s32.totalorder %s21, 3
    %p270 = por %p268, %p269
    %p272 = scmp.ne.s32.totalorder %s255, %s271
    %p273 = scmp.eq.s32.totalorder %s21, 0
    %p274 = por %p272, %p273
    %p275 = scmp.le.s32.totalorder 1, %s15
    %p276 = scmp.lt.s32.totalorder %s15, 5
    %p277 = pnand %p275, %p276
    %p278 = pneg %p277
    // Predicated region
    $region9: #{double_conv.4} parent=5 // pred_check
      _
    $region10: #{double_conv.4} parent=5 // pred_check_branch
      %280 = sbr.rel (%p277) target = $region12
    $region11: #{double_conv.4} parent=5 // pred_region
      %s281 = ssub.s32 %s15, 1
      // Predicated region
      $region13: #{double_conv.4} parent=11 // pred_check
        %p282 = pneg %p148
      $region14: #{double_conv.4} parent=11 // pred_check_branch
        %284 = sbr.rel (%p282) target = $region16
      $region15: #{double_conv.4} parent=11 // pred_region
        _
      $region16: #{double_conv.4} parent=11 // pred_fallthru
        _
      // Predicated region
      $region17: #{double_conv.4} parent=11 // pred_check
        %p285 = pneg %p169
      $region18: #{double_conv.4} parent=11 // pred_check_branch
        %287 = sbr.rel (%p285) target = $region20
      $region19: #{double_conv.4} parent=11 // pred_region
        _
      $region20: #{double_conv.4} parent=11 // pred_fallthru
        _
      // Predicated region
      $region21: #{double_conv.4} parent=11 // pred_check
        %p288 = pneg %p190
      $region22: #{double_conv.4} parent=11 // pred_check_branch
        %290 = sbr.rel (%p288) target = $region24
      $region23: #{double_conv.4} parent=11 // pred_region
        _
      $region24: #{double_conv.4} parent=11 // pred_fallthru
        _
      // Predicated region
      $region25: #{double_conv.4} parent=11 // pred_check
        %p291 = pneg %p211
      $region26: #{double_conv.4} parent=11 // pred_check_branch
        %293 = sbr.rel (%p291) target = $region28
      $region27: #{double_conv.4} parent=11 // pred_region
        _
      $region28: #{double_conv.4} parent=11 // pred_fallthru
        _
    $region12: #{double_conv.4} parent=5 // pred_fallthru
      _
    %p294 = scmp.lt.s32.totalorder %s15, 4
    // Predicated region
    $region29: #{double_conv.4} parent=5 // pred_check
      %p295 = pneg %p294
    $region30: #{double_conv.4} parent=5 // pred_check_branch
      %297 = sbr.rel (%p295) target = $region32
    $region31: #{double_conv.4} parent=5 // pred_region
      // Predicated region
      $region33: #{double_conv.4} parent=31 // pred_check
        %p298 = pneg %p49
      $region34: #{double_conv.4} parent=31 // pred_check_branch
        %300 = sbr.rel (%p298) target = $region36
      $region35: #{double_conv.4} parent=31 // pred_region
        %s301 = smul.u32 8, %s23
        %p302 = scmp.lt.s32.totalorder %s22, 1
        %s303 = scalar_select %p302, %s22, 1
        %p304 = scmp.lt.s32.totalorder %s301, 15
        %s305 = scalar_select %p304, %s301, 15
        %s306 = smul.addr %s305, 2
        %s307 = smul.addr %s303, 32
        %s308 = sadd.s32 %s306, %s307
        %s309 = smul.addr %s308, 8
        %s310 = scalar_lea.vmem %s0, %s309
        %s311 = smul.u32 8, %s23
      $region36: #{double_conv.4} parent=31 // pred_fallthru
        _
      // Predicated region
      $region37: #{double_conv.4} parent=31 // pred_check
        %p312 = pneg %p85
      $region38: #{double_conv.4} parent=31 // pred_check_branch
        %314 = sbr.rel (%p312) target = $region40
      $region39: #{double_conv.4} parent=31 // pred_region
        %s315 = smul.u32 %s23, 8
        %s316 = ssub.s32 %s315, 1
        %p317 = scmp.gt.s32.totalorder %s316, 0
        %s318 = scalar_select %p317, %s316, 0
        %p319 = scmp.lt.s32.totalorder %s22, 1
        %s320 = scalar_select %p319, %s22, 1
        %p321 = scmp.lt.s32.totalorder %s318, 15
        %s322 = scalar_select %p321, %s318, 15
        %s323 = smul.addr %s322, 2
        %s324 = smul.addr %s320, 32
        %s325 = sadd.s32 %s323, %s324
        %s326 = smul.addr %s325, 8
        %s327 = scalar_lea.vmem %s1, %s326
        %s328 = smul.u32 %s23, 8
        %s329 = ssub.s32 %s328, 1
        %p330 = scmp.gt.s32.totalorder %s329, 0
        %s331 = scalar_select %p330, %s329, 0
      $region40: #{double_conv.4} parent=31 // pred_fallthru
        _
      // Predicated region
      $region41: #{double_conv.4} parent=31 // pred_check
        %p332 = pneg %p121
      $region42: #{double_conv.4} parent=31 // pred_check_branch
        %334 = sbr.rel (%p332) target = $region44
      $region43: #{double_conv.4} parent=31 // pred_region
        %s335 = sadd.s32 %s23, 1
        %s336 = smul.u32 %s335, 8
        %p337 = scmp.lt.s32.totalorder %s336, 15
        %s338 = scalar_select %p337, %s336, 15
        %p339 = scmp.lt.s32.totalorder %s22, 1
        %s340 = scalar_select %p339, %s22, 1
        %p341 = scmp.lt.s32.totalorder %s338, 15
        %s342 = scalar_select %p341, %s338, 15
        %s343 = smul.addr %s342, 2
        %s344 = smul.addr %s340, 32
        %s345 = sadd.s32 %s343, %s344
        %s346 = smul.addr %s345, 8
        %s347 = scalar_lea.vmem %s2, %s346
        %s348 = sadd.s32 %s23, 1
        %s349 = smul.u32 %s348, 8
        %p350 = scmp.lt.s32.totalorder %s349, 15
        %s351 = scalar_select %p350, %s349, 15
      $region44: #{double_conv.4} parent=31 // pred_fallthru
        _
    $region32: #{double_conv.4} parent=5 // pred_fallthru
      _
    %p352 = scmp.le.s32.totalorder 1, %s15
    %p353 = scmp.lt.s32.totalorder %s15, 5
    %p354 = pnand %p352, %p353
    %p355 = pneg %p354
    // Predicated region
    $region45: #{double_conv.4} parent=5 // pred_check
      _
    $region46: #{double_conv.4} parent=5 // pred_check_branch
      %357 = sbr.rel (%p354) target = $region48
    $region47: #{double_conv.4} parent=5 // pred_region
      %s358 = ssub.s32 %s15, 1
      %s359 = smul.u32 8, %s25
      %p360 = scmp.lt.s32.totalorder %s24, 1
      %s361 = scalar_select %p360, %s24, 1
      %p362 = scmp.lt.s32.totalorder %s359, 15
      %s363 = scalar_select %p362, %s359, 15
      %s364 = smul.addr %s363, 2
      %s365 = smul.addr %s361, 32
      %s366 = sadd.s32 %s364, %s365
      %s367 = smul.addr %s366, 8
      %s368 = scalar_lea.vmem %s0, %s367
      %p369 = pneg %p55
      %p370 = pneg %p52
      %s371 = smul.u32 %s25, 8
      %s372 = ssub.s32 %s371, 1
      %p373 = scmp.gt.s32.totalorder %s372, 0
      %s374 = scalar_select %p373, %s372, 0
      %p375 = scmp.lt.s32.totalorder %s24, 1
      %s376 = scalar_select %p375, %s24, 1
      %p377 = scmp.lt.s32.totalorder %s374, 15
      %s378 = scalar_select %p377, %s374, 15
      %s379 = smul.addr %s378, 2
      %s380 = smul.addr %s376, 32
      %s381 = sadd.s32 %s379, %s380
      %s382 = smul.addr %s381, 8
      %s383 = scalar_lea.vmem %s1, %s382
      %p384 = pneg %p91
      %p385 = pneg %p88
      %s386 = sadd.s32 %s25, 1
      %s387 = smul.u32 %s386, 8
      %p388 = scmp.lt.s32.totalorder %s387, 15
      %s389 = scalar_select %p388, %s387, 15
      %p390 = scmp.lt.s32.totalorder %s24, 1
      %s391 = scalar_select %p390, %s24, 1
      %p392 = scmp.lt.s32.totalorder %s389, 15
      %s393 = scalar_select %p392, %s389, 15
      %s394 = smul.addr %s393, 2
      %s395 = smul.addr %s391, 32
      %s396 = sadd.s32 %s394, %s395
      %s397 = smul.addr %s396, 8
      %s398 = scalar_lea.vmem %s2, %s397
      %p399 = pneg %p127
      %p400 = pneg %p124
      %p401 = pneg %p148
      %p402 = pneg %p145
      %p403 = pneg %p169
      %p404 = pneg %p166
      %p405 = pneg %p190
      %p406 = pneg %p187
      %p407 = pneg %p211
      %p408 = pneg %p208
      %p409 = pneg %p239
      %p410 = pneg %p236
      %s411 = smul.u32 8, %s25
      %p412 = scmp.lt.s32.totalorder %s24, 1
      %s413 = scalar_select %p412, %s24, 1
      %p414 = scmp.lt.s32.totalorder %s411, 15
      %s415 = scalar_select %p414, %s411, 15
      %s416 = smul.addr %s415, 2
      %s417 = smul.addr %s413, 32
      %s418 = sadd.s32 %s416, %s417
      %s419 = smul.addr %s418, 8
      %s420 = scalar_lea.vmem %s7, %s419
      %p421 = pneg %p267
      %p422 = pneg %p264
      %p423 = scmp.lt.s32.totalorder %s24, 1
      %s424 = scalar_select %p423, %s24, 1
      %p425 = scmp.lt.s32.totalorder %s25, 1
      %s426 = scalar_select %p425, %s25, 1
      %s427 = smul.addr %s424, 2
      %s428 = sadd.s32 %s426, %s427
      %s429 = smul.addr %s428, 2
      %s430 = scalar_lea.vmem %s8, %s429
      %s431 = smul.u32 8, %s25
      %p432 = scmp.lt.s32.totalorder %s24, 1
      %s433 = scalar_select %p432, %s24, 1
      %p434 = scmp.lt.s32.totalorder %s431, 15
      %s435 = scalar_select %p434, %s431, 15
      %s436 = smul.addr %s435, 2
      %s437 = smul.addr %s433, 32
      %s438 = sadd.s32 %s436, %s437
      %s439 = smul.addr %s438, 8
      %s440 = scalar_lea.vmem %s0, %s439
      %s441 = smul.u32 8, %s25
      %s442 = smul.u32 %s25, 8
      %s443 = ssub.s32 %s442, 1
      %p444 = scmp.gt.s32.totalorder %s443, 0
      %s445 = scalar_select %p444, %s443, 0
      %p446 = scmp.lt.s32.totalorder %s24, 1
      %s447 = scalar_select %p446, %s24, 1
      %p448 = scmp.lt.s32.totalorder %s445, 15
      %s449 = scalar_select %p448, %s445, 15
      %s450 = smul.addr %s449, 2
      %s451 = smul.addr %s447, 32
      %s452 = sadd.s32 %s450, %s451
      %s453 = smul.addr %s452, 8
      %s454 = scalar_lea.vmem %s1, %s453
      %s455 = smul.u32 %s25, 8
      %s456 = ssub.s32 %s455, 1
      %p457 = scmp.gt.s32.totalorder %s456, 0
      %s458 = scalar_select %p457, %s456, 0
      %s459 = sadd.s32 %s25, 1
      %s460 = smul.u32 %s459, 8
      %p461 = scmp.lt.s32.totalorder %s460, 15
      %s462 = scalar_select %p461, %s460, 15
      %p463 = scmp.lt.s32.totalorder %s24, 1
      %s464 = scalar_select %p463, %s24, 1
      %p465 = scmp.lt.s32.totalorder %s462, 15
      %s466 = scalar_select %p465, %s462, 15
      %s467 = smul.addr %s466, 2
      %s468 = smul.addr %s464, 32
      %s469 = sadd.s32 %s467, %s468
      %s470 = smul.addr %s469, 8
      %s471 = scalar_lea.vmem %s2, %s470
      %s472 = sadd.s32 %s25, 1
      %s473 = smul.u32 %s472, 8
      %p474 = scmp.lt.s32.totalorder %s473, 15
      %s475 = scalar_select %p474, %s473, 15
      %s476 = smul.u32 8, %s25
      %p477 = scmp.lt.s32.totalorder %s24, 1
      %s478 = scalar_select %p477, %s24, 1
      %p479 = scmp.lt.s32.totalorder %s476, 15
      %s480 = scalar_select %p479, %s476, 15
      %s481 = smul.addr %s480, 2
      %s482 = smul.addr %s478, 32
      %s483 = sadd.s32 %s481, %s482
      %s484 = smul.addr %s483, 8
      %s485 = scalar_lea.vmem %s7, %s484
      %s486 = smul.u32 8, %s25
      %p487 = scmp.lt.s32.totalorder %s24, 1
      %s488 = scalar_select %p487, %s24, 1
      %p489 = scmp.lt.s32.totalorder %s25, 1
      %s490 = scalar_select %p489, %s25, 1
      %s491 = smul.addr %s488, 2
      %s492 = sadd.s32 %s490, %s491
      %s493 = smul.addr %s492, 2
      %s494 = scalar_lea.vmem %s8, %s493
      %v495 = vld [vmem:[%s440] sm:$0xff]
      %v496 = vld [vmem:[%s440 + $0x8] sm:$0xff]
      %v497 = vld [vmem:[%s440 + $0x10] sm:$0xff]
      %v498 = vld [vmem:[%s440 + $0x18] sm:$0xff]
      %v499 = vld [vmem:[%s440 + $0x20] sm:$0xff]
      %v500 = vld [vmem:[%s440 + $0x28] sm:$0xff]
      %v501 = vld [vmem:[%s440 + $0x30] sm:$0xff]
      %v502 = vld [vmem:[%s440 + $0x38] sm:$0xff]
      %v503 = vld [vmem:[%s440 + $0x40] sm:$0xff]
      %v504 = vld [vmem:[%s440 + $0x48] sm:$0xff]
      %v505 = vld [vmem:[%s440 + $0x50] sm:$0xff]
      %v506 = vld [vmem:[%s440 + $0x58] sm:$0xff]
      %v507 = vld [vmem:[%s440 + $0x60] sm:$0xff]
      %v508 = vld [vmem:[%s440 + $0x68] sm:$0xff]
      %v509 = vld [vmem:[%s440 + $0x70] sm:$0xff]
      %v510 = vld [vmem:[%s440 + $0x78] sm:$0xff]
      %v511 = vld [vmem:[%s5] sm:$0x1]
      %v513 = vlaneseq
      %v514 = vshrl.u32 %v513, 7
      %v515 = vsub.s32 0, %v514
      %v516 = vrot.slane %v511, %v515
      %v518 = vmul.f32 %v495, %v516
      %v519 = vmul.f32 %v496, %v516
      %v520 = vmul.f32 %v497, %v516
      %v521 = vmul.f32 %v498, %v516
      %v522 = vmul.f32 %v499, %v516
      %v523 = vmul.f32 %v500, %v516
      %v524 = vmul.f32 %v501, %v516
      %v525 = vmul.f32 %v502, %v516
      %v526 = vmul.f32 %v503, %v516
      %v527 = vmul.f32 %v504, %v516
      %v528 = vmul.f32 %v505, %v516
      %v529 = vmul.f32 %v506, %v516
      %v530 = vmul.f32 %v507, %v516
      %v531 = vmul.f32 %v508, %v516
      %v532 = vmul.f32 %v509, %v516
      %v533 = vmul.f32 %v510, %v516
      %v534 = vld [vmem:[%s6] sm:$0x1]
      %v536 = vlaneseq
      %v537 = vshrl.u32 %v536, 7
      %v538 = vsub.s32 0, %v537
      %v539 = vrot.slane %v534, %v538
      %v541 = vadd.f32 %v518, %v539
      %v542 = vadd.f32 %v519, %v539
      %v543 = vadd.f32 %v520, %v539
      %v544 = vadd.f32 %v521, %v539
      %v545 = vadd.f32 %v522, %v539
      %v546 = vadd.f32 %v523, %v539
      %v547 = vadd.f32 %v524, %v539
      %v548 = vadd.f32 %v525, %v539
      %v549 = vadd.f32 %v526, %v539
      %v550 = vadd.f32 %v527, %v539
      %v551 = vadd.f32 %v528, %v539
      %v552 = vadd.f32 %v529, %v539
      %v553 = vadd.f32 %v530, %v539
      %v554 = vadd.f32 %v531, %v539
      %v555 = vadd.f32 %v532, %v539
      %v556 = vadd.f32 %v533, %v539
      %v557 = vmax.f32 %v541, 0.0
      %v558 = vmax.f32 %v542, 0.0
      %v559 = vmax.f32 %v543, 0.0
      %v560 = vmax.f32 %v544, 0.0
      %v561 = vmax.f32 %v545, 0.0
      %v562 = vmax.f32 %v546, 0.0
      %v563 = vmax.f32 %v547, 0.0
      %v564 = vmax.f32 %v548, 0.0
      %v565 = vmax.f32 %v549, 0.0
      %v566 = vmax.f32 %v550, 0.0
      %v567 = vmax.f32 %v551, 0.0
      %v568 = vmax.f32 %v552, 0.0
      %v569 = vmax.f32 %v553, 0.0
      %v570 = vmax.f32 %v554, 0.0
      %v571 = vmax.f32 %v555, 0.0
      %v572 = vmax.f32 %v556, 0.0
      %v573 = vld [vmem:[%s454] sm:$0xff]
      %v574 = vld [vmem:[%s454 + $0x8] sm:$0xff]
      %v575 = vmul.f32 %v573, %v516
      %v576 = vmul.f32 %v574, %v516
      %v577 = vadd.f32 %v575, %v539
      %v578 = vadd.f32 %v576, %v539
      %v579 = vmax.f32 %v577, 0.0
      %v580 = vmax.f32 %v578, 0.0
      %v581 = vld [vmem:[%s471] sm:$0xff]
      %v582 = vld [vmem:[%s471 + $0x8] sm:$0xff]
      %v583 = vmul.f32 %v581, %v516
      %v584 = vmul.f32 %v582, %v516
      %v585 = vadd.f32 %v583, %v539
      %v586 = vadd.f32 %v584, %v539
      %v587 = vmax.f32 %v585, 0.0
      %v588 = vmax.f32 %v586, 0.0
      %p589 = scmp.gt.s32.totalorder %s25, 0
      %s590 = scalar_select %p589, 1.0, 0.0
      %v591 = vstv %s590
      %v592 = vmul.f32 %v579, %v591
      %v593 = vmul.f32 %v580, %v591
      %p594 = scmp.lt.s32.totalorder %s25, 1
      %s595 = scalar_select %p594, 1.0, 0.0
      %v596 = vstv %s595
      %v597 = vmul.f32 %v587, %v596
      %v598 = vmul.f32 %v588, %v596
      %vm619 = vcmask 1040384
      %v620 = vrot.slane %v592, 7
      %v621 = vrot.slane %v593, 7
      %v622 = vsel %vm619, %v620, %v621
      %v623 = vrot.slane %v557, 7
      %v624 = vrot.slane %v558, 7
      %v625 = vsel %vm619, %v623, %v624
      %v626 = vrot.slane %v559, 7
      %v627 = vrot.slane %v560, 7
      %v628 = vsel %vm619, %v626, %v627
      %v629 = vrot.slane %v561, 7
      %v630 = vrot.slane %v562, 7
      %v631 = vsel %vm619, %v629, %v630
      %v632 = vrot.slane %v563, 7
      %v633 = vrot.slane %v564, 7
      %v634 = vsel %vm619, %v632, %v633
      %v635 = vrot.slane %v565, 7
      %v636 = vrot.slane %v566, 7
      %v637 = vsel %vm619, %v635, %v636
      %v638 = vrot.slane %v567, 7
      %v639 = vrot.slane %v568, 7
      %v640 = vsel %vm619, %v638, %v639
      %v641 = vrot.slane %v569, 7
      %v642 = vrot.slane %v570, 7
      %v643 = vsel %vm619, %v641, %v642
      %v644 = vrot.slane %v571, 7
      %v645 = vrot.slane %v572, 7
      %v646 = vsel %vm619, %v644, %v645
      %v647 = vrot.slane %v597, 7
      %v648 = vrot.slane %v598, 7
      %v649 = vsel %vm619, %v647, %v648
      %v678 = vsel %vm619, 0.0, %v620
      %v679 = vsel %vm619, 0.0, %v623
      %v680 = vsel %vm619, 0.0, %v626
      %v681 = vsel %vm619, 0.0, %v629
      %v682 = vsel %vm619, 0.0, %v632
      %v683 = vsel %vm619, 0.0, %v635
      %v684 = vsel %vm619, 0.0, %v638
      %v685 = vsel %vm619, 0.0, %v641
      %v686 = vsel %vm619, 0.0, %v644
      %v687 = vsel %vm619, 0.0, %v647
      %v688 = vsel %vm619, %v621, 0.0
      %v689 = vsel %vm619, %v624, 0.0
      %v690 = vsel %vm619, %v627, 0.0
      %v691 = vsel %vm619, %v630, 0.0
      %v692 = vsel %vm619, %v633, 0.0
      %v693 = vsel %vm619, %v636, 0.0
      %v694 = vsel %vm619, %v639, 0.0
      %v695 = vsel %vm619, %v642, 0.0
      %v696 = vsel %vm619, %v645, 0.0
      %v697 = vsel %vm619, %v648, 0.0
      %vm714 = vcmask 1046528
      %v715 = vrot.slane %v678, 1
      %v716 = vrot.slane %v622, 1
      %v717 = vsel %vm714, %v715, %v716
      %v718 = vrot.slane %v688, 1
      %v719 = vsel %vm714, %v716, %v718
      %v720 = vrot.slane %v679, 1
      %v721 = vrot.slane %v625, 1
      %v722 = vsel %vm714, %v720, %v721
      %v723 = vrot.slane %v689, 1
      %v724 = vsel %vm714, %v721, %v723
      %v725 = vrot.slane %v680, 1
      %v726 = vrot.slane %v628, 1
      %v727 = vsel %vm714, %v725, %v726
      %v728 = vrot.slane %v690, 1
      %v729 = vsel %vm714, %v726, %v728
      %v730 = vrot.slane %v681, 1
      %v731 = vrot.slane %v631, 1
      %v732 = vsel %vm714, %v730, %v731
      %v733 = vrot.slane %v691, 1
      %v734 = vsel %vm714, %v731, %v733
      %v735 = vrot.slane %v682, 1
      %v736 = vrot.slane %v634, 1
      %v737 = vsel %vm714, %v735, %v736
      %v738 = vrot.slane %v692, 1
      %v739 = vsel %vm714, %v736, %v738
      %v740 = vrot.slane %v683, 1
      %v741 = vrot.slane %v637, 1
      %v742 = vsel %vm714, %v740, %v741
      %v743 = vrot.slane %v693, 1
      %v744 = vsel %vm714, %v741, %v743
      %v745 = vrot.slane %v684, 1
      %v746 = vrot.slane %v640, 1
      %v747 = vsel %vm714, %v745, %v746
      %v748 = vrot.slane %v694, 1
      %v749 = vsel %vm714, %v746, %v748
      %v750 = vrot.slane %v685, 1
      %v751 = vrot.slane %v643, 1
      %v752 = vsel %vm714, %v750, %v751
      %v753 = vrot.slane %v695, 1
      %v754 = vsel %vm714, %v751, %v753
      %755 = vrot.lane.b32.xlu0 %v717, 8
      %v756 = vpop.permute.xlu0 %755
      %757 = vrot.lane.b32.xlu0 %v719, 8
      %v758 = vpop.permute.xlu0 %757
      %759 = vrot.lane.b32.xlu0 %v722, 8
      %v760 = vpop.permute.xlu0 %759
      %761 = vrot.lane.b32.xlu0 %v724, 8
      %v762 = vpop.permute.xlu0 %761
      %763 = vrot.lane.b32.xlu0 %v727, 8
      %v764 = vpop.permute.xlu0 %763
      %765 = vrot.lane.b32.xlu0 %v729, 8
      %v766 = vpop.permute.xlu0 %765
      %767 = vrot.lane.b32.xlu0 %v732, 8
      %v768 = vpop.permute.xlu0 %767
      %769 = vrot.lane.b32.xlu0 %v734, 8
      %v770 = vpop.permute.xlu0 %769
      %771 = vrot.lane.b32.xlu0 %v737, 8
      %v772 = vpop.permute.xlu0 %771
      %773 = vrot.lane.b32.xlu0 %v739, 8
      %v774 = vpop.permute.xlu0 %773
      %775 = vrot.lane.b32.xlu0 %v742, 8
      %v776 = vpop.permute.xlu0 %775
      %777 = vrot.lane.b32.xlu0 %v744, 8
      %v778 = vpop.permute.xlu0 %777
      %779 = vrot.lane.b32.xlu0 %v747, 8
      %v780 = vpop.permute.xlu0 %779
      %781 = vrot.lane.b32.xlu0 %v749, 8
      %v782 = vpop.permute.xlu0 %781
      %783 = vrot.lane.b32.xlu0 %v752, 8
      %v784 = vpop.permute.xlu0 %783
      %785 = vrot.lane.b32.xlu0 %v754, 8
      %v786 = vpop.permute.xlu0 %785
      %vm803 = vcmask 1045504
      %v804 = vrot.slane %v678, 2
      %v805 = vrot.slane %v622, 2
      %v806 = vsel %vm803, %v804, %v805
      %v807 = vrot.slane %v688, 2
      %v808 = vsel %vm803, %v805, %v807
      %v809 = vrot.slane %v679, 2
      %v810 = vrot.slane %v625, 2
      %v811 = vsel %vm803, %v809, %v810
      %v812 = vrot.slane %v689, 2
      %v813 = vsel %vm803, %v810, %v812
      %v814 = vrot.slane %v680, 2
      %v815 = vrot.slane %v628, 2
      %v816 = vsel %vm803, %v814, %v815
      %v817 = vrot.slane %v690, 2
      %v818 = vsel %vm803, %v815, %v817
      %v819 = vrot.slane %v681, 2
      %v820 = vrot.slane %v631, 2
      %v821 = vsel %vm803, %v819, %v820
      %v822 = vrot.slane %v691, 2
      %v823 = vsel %vm803, %v820, %v822
      %v824 = vrot.slane %v682, 2
      %v825 = vrot.slane %v634, 2
      %v826 = vsel %vm803, %v824, %v825
      %v827 = vrot.slane %v692, 2
      %v828 = vsel %vm803, %v825, %v827
      %v829 = vrot.slane %v683, 2
      %v830 = vrot.slane %v637, 2
      %v831 = vsel %vm803, %v829, %v830
      %v832 = vrot.slane %v693, 2
      %v833 = vsel %vm803, %v830, %v832
      %v834 = vrot.slane %v684, 2
      %v835 = vrot.slane %v640, 2
      %v836 = vsel %vm803, %v834, %v835
      %v837 = vrot.slane %v694, 2
      %v838 = vsel %vm803, %v835, %v837
      %v839 = vrot.slane %v685, 2
      %v840 = vrot.slane %v643, 2
      %v841 = vsel %vm803, %v839, %v840
      %v842 = vrot.slane %v695, 2
      %v843 = vsel %vm803, %v840, %v842
      %844 = vrot.lane.b32.xlu0 %v806, 16
      %v845 = vpop.permute.xlu0 %844
      %846 = vrot.lane.b32.xlu0 %v808, 16
      %v847 = vpop.permute.xlu0 %846
      %848 = vrot.lane.b32.xlu0 %v811, 16
      %v849 = vpop.permute.xlu0 %848
      %850 = vrot.lane.b32.xlu0 %v813, 16
      %v851 = vpop.permute.xlu0 %850
      %852 = vrot.lane.b32.xlu0 %v816, 16
      %v853 = vpop.permute.xlu0 %852
      %854 = vrot.lane.b32.xlu0 %v818, 16
      %v855 = vpop.permute.xlu0 %854
      %856 = vrot.lane.b32.xlu0 %v821, 16
      %v857 = vpop.permute.xlu0 %856
      %858 = vrot.lane.b32.xlu0 %v823, 16
      %v859 = vpop.permute.xlu0 %858
      %860 = vrot.lane.b32.xlu0 %v826, 16
      %v861 = vpop.permute.xlu0 %860
      %862 = vrot.lane.b32.xlu0 %v828, 16
      %v863 = vpop.permute.xlu0 %862
      %864 = vrot.lane.b32.xlu0 %v831, 16
      %v865 = vpop.permute.xlu0 %864
      %866 = vrot.lane.b32.xlu0 %v833, 16
      %v867 = vpop.permute.xlu0 %866
      %868 = vrot.lane.b32.xlu0 %v836, 16
      %v869 = vpop.permute.xlu0 %868
      %870 = vrot.lane.b32.xlu0 %v838, 16
      %v871 = vpop.permute.xlu0 %870
      %872 = vrot.lane.b32.xlu0 %v841, 16
      %v873 = vpop.permute.xlu0 %872
      %874 = vrot.lane.b32.xlu0 %v843, 16
      %v875 = vpop.permute.xlu0 %874
      %893 = vrot.lane.b32.xlu0 %v679, 24
      %v894 = vpop.permute.xlu0 %893
      %895 = vrot.lane.b32.xlu0 %v625, 24
      %v896 = vpop.permute.xlu0 %895
      %897 = vrot.lane.b32.xlu0 %v680, 24
      %v898 = vpop.permute.xlu0 %897
      %899 = vrot.lane.b32.xlu0 %v628, 24
      %v900 = vpop.permute.xlu0 %899
      %901 = vrot.lane.b32.xlu0 %v681, 24
      %v902 = vpop.permute.xlu0 %901
      %903 = vrot.lane.b32.xlu0 %v631, 24
      %v904 = vpop.permute.xlu0 %903
      %905 = vrot.lane.b32.xlu0 %v682, 24
      %v906 = vpop.permute.xlu0 %905
      %907 = vrot.lane.b32.xlu0 %v634, 24
      %v908 = vpop.permute.xlu0 %907
      %909 = vrot.lane.b32.xlu0 %v683, 24
      %v910 = vpop.permute.xlu0 %909
      %911 = vrot.lane.b32.xlu0 %v637, 24
      %v912 = vpop.permute.xlu0 %911
      %913 = vrot.lane.b32.xlu0 %v684, 24
      %v914 = vpop.permute.xlu0 %913
      %915 = vrot.lane.b32.xlu0 %v640, 24
      %v916 = vpop.permute.xlu0 %915
      %917 = vrot.lane.b32.xlu0 %v685, 24
      %v918 = vpop.permute.xlu0 %917
      %919 = vrot.lane.b32.xlu0 %v643, 24
      %v920 = vpop.permute.xlu0 %919
      %921 = vrot.lane.b32.xlu0 %v686, 24
      %v922 = vpop.permute.xlu0 %921
      %923 = vrot.lane.b32.xlu0 %v646, 24
      %v924 = vpop.permute.xlu0 %923
      %v942 = vrot.slane %v686, 1
      %v943 = vrot.slane %v646, 1
      %v944 = vsel %vm714, %v942, %v943
      %v945 = vrot.slane %v696, 1
      %v946 = vsel %vm714, %v943, %v945
      %947 = vrot.lane.b32.xlu0 %v722, 32
      %v948 = vpop.permute.xlu0 %947
      %949 = vrot.lane.b32.xlu0 %v724, 32
      %v950 = vpop.permute.xlu0 %949
      %951 = vrot.lane.b32.xlu0 %v727, 32
      %v952 = vpop.permute.xlu0 %951
      %953 = vrot.lane.b32.xlu0 %v729, 32
      %v954 = vpop.permute.xlu0 %953
      %955 = vrot.lane.b32.xlu0 %v732, 32
      %v956 = vpop.permute.xlu0 %955
      %957 = vrot.lane.b32.xlu0 %v734, 32
      %v958 = vpop.permute.xlu0 %957
      %959 = vrot.lane.b32.xlu0 %v737, 32
      %v960 = vpop.permute.xlu0 %959
      %961 = vrot.lane.b32.xlu0 %v739, 32
      %v962 = vpop.permute.xlu0 %961
      %963 = vrot.lane.b32.xlu0 %v742, 32
      %v964 = vpop.permute.xlu0 %963
      %965 = vrot.lane.b32.xlu0 %v744, 32
      %v966 = vpop.permute.xlu0 %965
      %967 = vrot.lane.b32.xlu0 %v747, 32
      %v968 = vpop.permute.xlu0 %967
      %969 = vrot.lane.b32.xlu0 %v749, 32
      %v970 = vpop.permute.xlu0 %969
      %971 = vrot.lane.b32.xlu0 %v752, 32
      %v972 = vpop.permute.xlu0 %971
      %973 = vrot.lane.b32.xlu0 %v754, 32
      %v974 = vpop.permute.xlu0 %973
      %975 = vrot.lane.b32.xlu0 %v944, 32
      %v976 = vpop.permute.xlu0 %975
      %977 = vrot.lane.b32.xlu0 %v946, 32
      %v978 = vpop.permute.xlu0 %977
      %v995 = vrot.slane %v686, 2
      %v996 = vrot.slane %v646, 2
      %v997 = vsel %vm803, %v995, %v996
      %v998 = vrot.slane %v696, 2
      %v999 = vsel %vm803, %v996, %v998
      %1000 = vrot.lane.b32.xlu0 %v811, 40
      %v1001 = vpop.permute.xlu0 %1000
      %1002 = vrot.lane.b32.xlu0 %v813, 40
      %v1003 = vpop.permute.xlu0 %1002
      %1004 = vrot.lane.b32.xlu0 %v816, 40
      %v1005 = vpop.permute.xlu0 %1004
      %1006 = vrot.lane.b32.xlu0 %v818, 40
      %v1007 = vpop.permute.xlu0 %1006
      %1008 = vrot.lane.b32.xlu0 %v821, 40
      %v1009 = vpop.permute.xlu0 %1008
      %1010 = vrot.lane.b32.xlu0 %v823, 40
      %v1011 = vpop.permute.xlu0 %1010
      %1012 = vrot.lane.b32.xlu0 %v826, 40
      %v1013 = vpop.permute.xlu0 %1012
      %1014 = vrot.lane.b32.xlu0 %v828, 40
      %v1015 = vpop.permute.xlu0 %1014
      %1016 = vrot.lane.b32.xlu0 %v831, 40
      %v1017 = vpop.permute.xlu0 %1016
      %1018 = vrot.lane.b32.xlu0 %v833, 40
      %v1019 = vpop.permute.xlu0 %1018
      %1020 = vrot.lane.b32.xlu0 %v836, 40
      %v1021 = vpop.permute.xlu0 %1020
      %1022 = vrot.lane.b32.xlu0 %v838, 40
      %v1023 = vpop.permute.xlu0 %1022
      %1024 = vrot.lane.b32.xlu0 %v841, 40
      %v1025 = vpop.permute.xlu0 %1024
      %1026 = vrot.lane.b32.xlu0 %v843, 40
      %v1027 = vpop.permute.xlu0 %1026
      %1028 = vrot.lane.b32.xlu0 %v997, 40
      %v1029 = vpop.permute.xlu0 %1028
      %1030 = vrot.lane.b32.xlu0 %v999, 40
      %v1031 = vpop.permute.xlu0 %1030
      %1049 = vrot.lane.b32.xlu0 %v680, 48
      %v1050 = vpop.permute.xlu0 %1049
      %1051 = vrot.lane.b32.xlu0 %v628, 48
      %v1052 = vpop.permute.xlu0 %1051
      %1053 = vrot.lane.b32.xlu0 %v681, 48
      %v1054 = vpop.permute.xlu0 %1053
      %1055 = vrot.lane.b32.xlu0 %v631, 48
      %v1056 = vpop.permute.xlu0 %1055
      %1057 = vrot.lane.b32.xlu0 %v682, 48
      %v1058 = vpop.permute.xlu0 %1057
      %1059 = vrot.lane.b32.xlu0 %v634, 48
      %v1060 = vpop.permute.xlu0 %1059
      %1061 = vrot.lane.b32.xlu0 %v683, 48
      %v1062 = vpop.permute.xlu0 %1061
      %1063 = vrot.lane.b32.xlu0 %v637, 48
      %v1064 = vpop.permute.xlu0 %1063
      %1065 = vrot.lane.b32.xlu0 %v684, 48
      %v1066 = vpop.permute.xlu0 %1065
      %1067 = vrot.lane.b32.xlu0 %v640, 48
      %v1068 = vpop.permute.xlu0 %1067
      %1069 = vrot.lane.b32.xlu0 %v685, 48
      %v1070 = vpop.permute.xlu0 %1069
      %1071 = vrot.lane.b32.xlu0 %v643, 48
      %v1072 = vpop.permute.xlu0 %1071
      %1073 = vrot.lane.b32.xlu0 %v686, 48
      %v1074 = vpop.permute.xlu0 %1073
      %1075 = vrot.lane.b32.xlu0 %v646, 48
      %v1076 = vpop.permute.xlu0 %1075
      %1077 = vrot.lane.b32.xlu0 %v687, 48
      %v1078 = vpop.permute.xlu0 %1077
      %1079 = vrot.lane.b32.xlu0 %v649, 48
      %v1080 = vpop.permute.xlu0 %1079
      %v1098 = vrot.slane %v687, 1
      %v1099 = vrot.slane %v649, 1
      %v1100 = vsel %vm714, %v1098, %v1099
      %v1101 = vrot.slane %v697, 1
      %v1102 = vsel %vm714, %v1099, %v1101
      %1103 = vrot.lane.b32.xlu0 %v727, 56
      %v1104 = vpop.permute.xlu0 %1103
      %1105 = vrot.lane.b32.xlu0 %v729, 56
      %v1106 = vpop.permute.xlu0 %1105
      %1107 = vrot.lane.b32.xlu0 %v732, 56
      %v1108 = vpop.permute.xlu0 %1107
      %1109 = vrot.lane.b32.xlu0 %v734, 56
      %v1110 = vpop.permute.xlu0 %1109
      %1111 = vrot.lane.b32.xlu0 %v737, 56
      %v1112 = vpop.permute.xlu0 %1111
      %1113 = vrot.lane.b32.xlu0 %v739, 56
      %v1114 = vpop.permute.xlu0 %1113
      %1115 = vrot.lane.b32.xlu0 %v742, 56
      %v1116 = vpop.permute.xlu0 %1115
      %1117 = vrot.lane.b32.xlu0 %v744, 56
      %v1118 = vpop.permute.xlu0 %1117
      %1119 = vrot.lane.b32.xlu0 %v747, 56
      %v1120 = vpop.permute.xlu0 %1119
      %1121 = vrot.lane.b32.xlu0 %v749, 56
      %v1122 = vpop.permute.xlu0 %1121
      %1123 = vrot.lane.b32.xlu0 %v752, 56
      %v1124 = vpop.permute.xlu0 %1123
      %1125 = vrot.lane.b32.xlu0 %v754, 56
      %v1126 = vpop.permute.xlu0 %1125
      %1127 = vrot.lane.b32.xlu0 %v944, 56
      %v1128 = vpop.permute.xlu0 %1127
      %1129 = vrot.lane.b32.xlu0 %v946, 56
      %v1130 = vpop.permute.xlu0 %1129
      %1131 = vrot.lane.b32.xlu0 %v1100, 56
      %v1132 = vpop.permute.xlu0 %1131
      %1133 = vrot.lane.b32.xlu0 %v1102, 56
      %v1134 = vpop.permute.xlu0 %1133
      %v1151 = vrot.slane %v687, 2
      %v1152 = vrot.slane %v649, 2
      %v1153 = vsel %vm803, %v1151, %v1152
      %v1154 = vrot.slane %v697, 2
      %v1155 = vsel %vm803, %v1152, %v1154
      %1156 = vrot.lane.b32.xlu0 %v816, 64
      %v1157 = vpop.permute.xlu0 %1156
      %1158 = vrot.lane.b32.xlu0 %v818, 64
      %v1159 = vpop.permute.xlu0 %1158
      %1160 = vrot.lane.b32.xlu0 %v821, 64
      %v1161 = vpop.permute.xlu0 %1160
      %1162 = vrot.lane.b32.xlu0 %v823, 64
      %v1163 = vpop.permute.xlu0 %1162
      %1164 = vrot.lane.b32.xlu0 %v826, 64
      %v1165 = vpop.permute.xlu0 %1164
      %1166 = vrot.lane.b32.xlu0 %v828, 64
      %v1167 = vpop.permute.xlu0 %1166
      %1168 = vrot.lane.b32.xlu0 %v831, 64
      %v1169 = vpop.permute.xlu0 %1168
      %1170 = vrot.lane.b32.xlu0 %v833, 64
      %v1171 = vpop.permute.xlu0 %1170
      %1172 = vrot.lane.b32.xlu0 %v836, 64
      %v1173 = vpop.permute.xlu0 %1172
      %1174 = vrot.lane.b32.xlu0 %v838, 64
      %v1175 = vpop.permute.xlu0 %1174
      %1176 = vrot.lane.b32.xlu0 %v841, 64
      %v1177 = vpop.permute.xlu0 %1176
      %1178 = vrot.lane.b32.xlu0 %v843, 64
      %v1179 = vpop.permute.xlu0 %1178
      %1180 = vrot.lane.b32.xlu0 %v997, 64
      %v1181 = vpop.permute.xlu0 %1180
      %1182 = vrot.lane.b32.xlu0 %v999, 64
      %v1183 = vpop.permute.xlu0 %1182
      %1184 = vrot.lane.b32.xlu0 %v1153, 64
      %v1185 = vpop.permute.xlu0 %1184
      %1186 = vrot.lane.b32.xlu0 %v1155, 64
      %v1187 = vpop.permute.xlu0 %1186
      %vm1204 = vcmask 64512
      %v1205 = vsel %vm1204, %v678, %v756
      %v1206 = vsel %vm1204, %v622, %v758
      %v1207 = vsel %vm1204, %v679, %v760
      %v1208 = vsel %vm1204, %v625, %v762
      %v1209 = vsel %vm1204, %v680, %v764
      %v1210 = vsel %vm1204, %v628, %v766
      %v1211 = vsel %vm1204, %v681, %v768
      %v1212 = vsel %vm1204, %v631, %v770
      %v1213 = vsel %vm1204, %v682, %v772
      %v1214 = vsel %vm1204, %v634, %v774
      %v1215 = vsel %vm1204, %v683, %v776
      %v1216 = vsel %vm1204, %v637, %v778
      %v1217 = vsel %vm1204, %v684, %v780
      %v1218 = vsel %vm1204, %v640, %v782
      %v1219 = vsel %vm1204, %v685, %v784
      %v1220 = vsel %vm1204, %v643, %v786
      %vm1221 = vcmask 130048
      %v1222 = vsel %vm1221, %v1205, %v845
      %v1223 = vsel %vm1221, %v1206, %v847
      %v1224 = vsel %vm1221, %v1207, %v849
      %v1225 = vsel %vm1221, %v1208, %v851
      %v1226 = vsel %vm1221, %v1209, %v853
      %v1227 = vsel %vm1221, %v1210, %v855
      %v1228 = vsel %vm1221, %v1211, %v857
      %v1229 = vsel %vm1221, %v1212, %v859
      %v1230 = vsel %vm1221, %v1213, %v861
      %v1231 = vsel %vm1221, %v1214, %v863
      %v1232 = vsel %vm1221, %v1215, %v865
      %v1233 = vsel %vm1221, %v1216, %v867
      %v1234 = vsel %vm1221, %v1217, %v869
      %v1235 = vsel %vm1221, %v1218, %v871
      %v1236 = vsel %vm1221, %v1219, %v873
      %v1237 = vsel %vm1221, %v1220, %v875
      %vm1238 = vcmask 195584
      %v1239 = vsel %vm1238, %v1222, %v894
      %v1240 = vsel %vm1238, %v1223, %v896
      %v1241 = vsel %vm1238, %v1224, %v898
      %v1242 = vsel %vm1238, %v1225, %v900
      %v1243 = vsel %vm1238, %v1226, %v902
      %v1244 = vsel %vm1238, %v1227, %v904
      %v1245 = vsel %vm1238, %v1228, %v906
      %v1246 = vsel %vm1238, %v1229, %v908
      %v1247 = vsel %vm1238, %v1230, %v910
      %v1248 = vsel %vm1238, %v1231, %v912
      %v1249 = vsel %vm1238, %v1232, %v914
      %v1250 = vsel %vm1238, %v1233, %v916
      %v1251 = vsel %vm1238, %v1234, %v918
      %v1252 = vsel %vm1238, %v1235, %v920
      %v1253 = vsel %vm1238, %v1236, %v922
      %v1254 = vsel %vm1238, %v1237, %v924
      %vm1255 = vcmask 261120
      %v1256 = vsel %vm1255, %v1239, %v948
      %v1257 = vsel %vm1255, %v1240, %v950
      %v1258 = vsel %vm1255, %v1241, %v952
      %v1259 = vsel %vm1255, %v1242, %v954
      %v1260 = vsel %vm1255, %v1243, %v956
      %v1261 = vsel %vm1255, %v1244, %v958
      %v1262 = vsel %vm1255, %v1245, %v960
      %v1263 = vsel %vm1255, %v1246, %v962
      %v1264 = vsel %vm1255, %v1247, %v964
      %v1265 = vsel %vm1255, %v1248, %v966
      %v1266 = vsel %vm1255, %v1249, %v968
      %v1267 = vsel %vm1255, %v1250, %v970
      %v1268 = vsel %vm1255, %v1251, %v972
      %v1269 = vsel %vm1255, %v1252, %v974
      %v1270 = vsel %vm1255, %v1253, %v976
      %v1271 = vsel %vm1255, %v1254, %v978
      %vm1272 = vcmask 326656
      %v1273 = vsel %vm1272, %v1256, %v1001
      %v1274 = vsel %vm1272, %v1257, %v1003
      %v1275 = vsel %vm1272, %v1258, %v1005
      %v1276 = vsel %vm1272, %v1259, %v1007
      %v1277 = vsel %vm1272, %v1260, %v1009
      %v1278 = vsel %vm1272, %v1261, %v1011
      %v1279 = vsel %vm1272, %v1262, %v1013
      %v1280 = vsel %vm1272, %v1263, %v1015
      %v1281 = vsel %vm1272, %v1264, %v1017
      %v1282 = vsel %vm1272, %v1265, %v1019
      %v1283 = vsel %vm1272, %v1266, %v1021
      %v1284 = vsel %vm1272, %v1267, %v1023
      %v1285 = vsel %vm1272, %v1268, %v1025
      %v1286 = vsel %vm1272, %v1269, %v1027
      %v1287 = vsel %vm1272, %v1270, %v1029
      %v1288 = vsel %vm1272, %v1271, %v1031
      %vm1289 = vcmask 392192
      %v1290 = vsel %vm1289, %v1273, %v1050
      %v1291 = vsel %vm1289, %v1274, %v1052
      %v1292 = vsel %vm1289, %v1275, %v1054
      %v1293 = vsel %vm1289, %v1276, %v1056
      %v1294 = vsel %vm1289, %v1277, %v1058
      %v1295 = vsel %vm1289, %v1278, %v1060
      %v1296 = vsel %vm1289, %v1279, %v1062
      %v1297 = vsel %vm1289, %v1280, %v1064
      %v1298 = vsel %vm1289, %v1281, %v1066
      %v1299 = vsel %vm1289, %v1282, %v1068
      %v1300 = vsel %vm1289, %v1283, %v1070
      %v1301 = vsel %vm1289, %v1284, %v1072
      %v1302 = vsel %vm1289, %v1285, %v1074
      %v1303 = vsel %vm1289, %v1286, %v1076
      %v1304 = vsel %vm1289, %v1287, %v1078
      %v1305 = vsel %vm1289, %v1288, %v1080
      %vm1306 = vcmask 457728
      %v1307 = vsel %vm1306, %v1290, %v1104
      %v1308 = vsel %vm1306, %v1291, %v1106
      %v1309 = vsel %vm1306, %v1292, %v1108
      %v1310 = vsel %vm1306, %v1293, %v1110
      %v1311 = vsel %vm1306, %v1294, %v1112
      %v1312 = vsel %vm1306, %v1295, %v1114
      %v1313 = vsel %vm1306, %v1296, %v1116
      %v1314 = vsel %vm1306, %v1297, %v1118
      %v1315 = vsel %vm1306, %v1298, %v1120
      %v1316 = vsel %vm1306, %v1299, %v1122
      %v1317 = vsel %vm1306, %v1300, %v1124
      %v1318 = vsel %vm1306, %v1301, %v1126
      %v1319 = vsel %vm1306, %v1302, %v1128
      %v1320 = vsel %vm1306, %v1303, %v1130
      %v1321 = vsel %vm1306, %v1304, %v1132
      %v1322 = vsel %vm1306, %v1305, %v1134
      %vm1323 = vcmask 523264
      %v1324 = vsel %vm1323, %v1307, %v1157
      %v1325 = vsel %vm1323, %v1308, %v1159
      %v1326 = vsel %vm1323, %v1309, %v1161
      %v1327 = vsel %vm1323, %v1310, %v1163
      %v1328 = vsel %vm1323, %v1311, %v1165
      %v1329 = vsel %vm1323, %v1312, %v1167
      %v1330 = vsel %vm1323, %v1313, %v1169
      %v1331 = vsel %vm1323, %v1314, %v1171
      %v1332 = vsel %vm1323, %v1315, %v1173
      %v1333 = vsel %vm1323, %v1316, %v1175
      %v1334 = vsel %vm1323, %v1317, %v1177
      %v1335 = vsel %vm1323, %v1318, %v1179
      %v1336 = vsel %vm1323, %v1319, %v1181
      %v1337 = vsel %vm1323, %v1320, %v1183
      %v1338 = vsel %vm1323, %v1321, %v1185
      %v1339 = vsel %vm1323, %v1322, %v1187
      %v1340 = vld [vmem:[%s3] sm:$0xff]
      %v1341 = vld [vmem:[%s3 + $0x8] sm:$0xff]
      %v1342 = vld [vmem:[%s3 + $0x10] sm:$0xff]
      %v1343 = vld [vmem:[%s3 + $0x18] sm:$0xff]
      %v1344 = vld [vmem:[%s3 + $0x20] sm:$0xff]
      %v1345 = vld [vmem:[%s3 + $0x28] sm:$0xff]
      %v1346 = vld [vmem:[%s3 + $0x30] sm:$0xff]
      %v1347 = vld [vmem:[%s3 + $0x38] sm:$0xff]
      %v1348 = vld [vmem:[%s3 + $0x40] sm:$0xff]
      %v1349 = vld [vmem:[%s4] sm:$0x1]
      %v1351 = vlaneseq
      %v1352 = vshrl.u32 %v1351, 7
      %v1353 = vsub.s32 0, %v1352
      %v1354 = vrot.slane %v1349, %v1353
      %vm1356 = vcmask 588800
      %v1358 = vsel %vm1356, %v1324, 0
      %v1361 = vsel %vm1356, %v1325, 0
      %v1364 = vsel %vm1356, %v1326, 0
      %v1367 = vsel %vm1356, %v1327, 0
      %v1370 = vsel %vm1356, %v1328, 0
      %v1373 = vsel %vm1356, %v1329, 0
      %v1376 = vsel %vm1356, %v1330, 0
      %v1379 = vsel %vm1356, %v1331, 0
      %v1382 = vsel %vm1356, %v1332, 0
      %v1385 = vsel %vm1356, %v1333, 0
      %v1388 = vsel %vm1356, %v1334, 0
      %v1391 = vsel %vm1356, %v1335, 0
      %v1394 = vsel %vm1356, %v1336, 0
      %v1397 = vsel %vm1356, %v1337, 0
      %v1400 = vsel %vm1356, %v1338, 0
      %v1403 = vsel %vm1356, %v1339, 0
      %1405 = vmatprep.subr.mxu0 0.0
      %1406 = vmatpush1.msra.mxu0 0.0
      %1407 = vmatprep.subr.mxu0 0.0
      %1408 = vmatpush1.msra.mxu0 0.0
      %1409 = vmatprep.subr.mxu0 0.0
      %1410 = vmatpush1.msra.mxu0 0.0
      %1411 = vmatprep.subr.mxu0 0.0
      %1412 = vmatpush1.msra.mxu0 0.0
      %1413 = vmatprep.subr.mxu0 0.0
      %1414 = vmatpush1.msra.mxu0 0.0
      %1415 = vmatprep.subr.mxu0 0.0
      %1416 = vmatpush1.msra.mxu0 0.0
      %1417 = vmatprep.subr.mxu0 0.0
      %1418 = vmatpush1.msra.mxu0 0.0
      %1419 = vmatprep.subr.mxu0 0.0
      %1420 = vmatpush1.msra.mxu0 %v1348
      %1421 = vmatprep.subr.mxu0 0.0
      %1422 = vmatpush1.msra.mxu0 %v1347
      %1423 = vmatprep.subr.mxu0 0.0
      %1424 = vmatpush1.msra.mxu0 %v1346
      %1425 = vmatprep.subr.mxu0 0.0
      %1426 = vmatpush1.msra.mxu0 %v1345
      %1427 = vmatprep.subr.mxu0 0.0
      %1428 = vmatpush1.msra.mxu0 %v1344
      %1429 = vmatprep.subr.mxu0 0.0
      %1430 = vmatpush1.msra.mxu0 %v1343
      %1431 = vmatprep.subr.mxu0 0.0
      %1432 = vmatpush1.msra.mxu0 %v1342
      %1433 = vmatprep.subr.mxu0 0.0
      %1434 = vmatpush1.msra.mxu0 %v1341
      %1435 = vmatprep.subr.mxu0 0.0
      %1436 = vmatpush1.msra.mxu0 %v1340
      %1437 = vmatprep.subr.mxu0 0.0
      %1438 = vmatpush2.msra.mxu0 0.0
      %1439 = vmatprep.subr.mxu0 0.0
      %1440 = vmatpush2.msra.mxu0 0.0
      %1441 = vmatprep.subr.mxu0 0.0
      %1442 = vmatpush2.msra.mxu0 0.0
      %1443 = vmatprep.subr.mxu0 0.0
      %1444 = vmatpush2.msra.mxu0 0.0
      %1445 = vmatprep.subr.mxu0 0.0
      %1446 = vmatpush2.msra.mxu0 0.0
      %1447 = vmatprep.subr.mxu0 0.0
      %1448 = vmatpush2.msra.mxu0 0.0
      %1449 = vmatprep.subr.mxu0 0.0
      %1450 = vmatpush2.msra.mxu0 0.0
      %1451 = vmatprep.subr.mxu0 0.0
      %1452 = vmatpush2.msra.mxu0 0.0
      %1453 = vmatprep.subr.mxu0 0.0
      %1454 = vmatpush2.msra.mxu0 0.0
      %1455 = vmatprep.subr.mxu0 0.0
      %1456 = vmatpush2.msra.mxu0 0.0
      %1457 = vmatprep.subr.mxu0 0.0
      %1458 = vmatpush2.msra.mxu0 0.0
      %1459 = vmatprep.subr.mxu0 0.0
      %1460 = vmatpush2.msra.mxu0 0.0
      %1461 = vmatprep.subr.mxu0 0.0
      %1462 = vmatpush2.msra.mxu0 0.0
      %1463 = vmatprep.subr.mxu0 0.0
      %1464 = vmatpush2.msra.mxu0 0.0
      %1465 = vmatprep.subr.mxu0 0.0
      %1466 = vmatpush2.msra.mxu0 0.0
      %1467 = vmatprep.subr.mxu0 0.0
      %1468 = vmatpush2.msra.mxu0 0.0
      %1469 = vmatprep.mubr.f32.mxu0 0.0
      %1470 = vmatmul.mubr.f32.gmra.mxu0 %v1358
      %v1471 = vpop.f32.mrf.mxu0
      %v1472 = vadd.f32 %v1354, %v1471
      %v1473 = vpop.f32.mrf.mxu0
      %1474 = vmatprep.mubr.f32.mxu0 0.0
      %1475 = vmatmul.mubr.f32.gmra.mxu0 %v1361
      %v1476 = vpop.f32.mrf.mxu0
      %v1477 = vadd.f32 %v1354, %v1476
      %v1478 = vpop.f32.mrf.mxu0
      %1479 = vmatprep.mubr.f32.mxu0 0.0
      %1480 = vmatmul.mubr.f32.gmra.mxu0 %v1364
      %v1481 = vpop.f32.mrf.mxu0
      %v1482 = vadd.f32 %v1354, %v1481
      %v1483 = vpop.f32.mrf.mxu0
      %1484 = vmatprep.mubr.f32.mxu0 0.0
      %1485 = vmatmul.mubr.f32.gmra.mxu0 %v1367
      %v1486 = vpop.f32.mrf.mxu0
      %v1487 = vadd.f32 %v1354, %v1486
      %v1488 = vpop.f32.mrf.mxu0
      %1489 = vmatprep.mubr.f32.mxu0 0.0
      %1490 = vmatmul.mubr.f32.gmra.mxu0 %v1370
      %v1491 = vpop.f32.mrf.mxu0
      %v1492 = vadd.f32 %v1354, %v1491
      %v1493 = vpop.f32.mrf.mxu0
      %1494 = vmatprep.mubr.f32.mxu0 0.0
      %1495 = vmatmul.mubr.f32.gmra.mxu0 %v1373
      %v1496 = vpop.f32.mrf.mxu0
      %v1497 = vadd.f32 %v1354, %v1496
      %v1498 = vpop.f32.mrf.mxu0
      %1499 = vmatprep.mubr.f32.mxu0 0.0
      %1500 = vmatmul.mubr.f32.gmra.mxu0 %v1376
      %v1501 = vpop.f32.mrf.mxu0
      %v1502 = vadd.f32 %v1354, %v1501
      %v1503 = vpop.f32.mrf.mxu0
      %1504 = vmatprep.mubr.f32.mxu0 0.0
      %1505 = vmatmul.mubr.f32.gmra.mxu0 %v1379
      %v1506 = vpop.f32.mrf.mxu0
      %v1507 = vadd.f32 %v1354, %v1506
      %v1508 = vpop.f32.mrf.mxu0
      %1509 = vmatprep.mubr.f32.mxu0 0.0
      %1510 = vmatmul.mubr.f32.gmra.mxu0 %v1382
      %v1511 = vpop.f32.mrf.mxu0
      %v1512 = vadd.f32 %v1354, %v1511
      %v1513 = vpop.f32.mrf.mxu0
      %1514 = vmatprep.mubr.f32.mxu0 0.0
      %1515 = vmatmul.mubr.f32.gmra.mxu0 %v1385
      %v1516 = vpop.f32.mrf.mxu0
      %v1517 = vadd.f32 %v1354, %v1516
      %v1518 = vpop.f32.mrf.mxu0
      %1519 = vmatprep.mubr.f32.mxu0 0.0
      %1520 = vmatmul.mubr.f32.gmra.mxu0 %v1388
      %v1521 = vpop.f32.mrf.mxu0
      %v1522 = vadd.f32 %v1354, %v1521
      %v1523 = vpop.f32.mrf.mxu0
      %1524 = vmatprep.mubr.f32.mxu0 0.0
      %1525 = vmatmul.mubr.f32.gmra.mxu0 %v1391
      %v1526 = vpop.f32.mrf.mxu0
      %v1527 = vadd.f32 %v1354, %v1526
      %v1528 = vpop.f32.mrf.mxu0
      %1529 = vmatprep.mubr.f32.mxu0 0.0
      %1530 = vmatmul.mubr.f32.gmra.mxu0 %v1394
      %v1531 = vpop.f32.mrf.mxu0
      %v1532 = vadd.f32 %v1354, %v1531
      %v1533 = vpop.f32.mrf.mxu0
      %1534 = vmatprep.mubr.f32.mxu0 0.0
      %1535 = vmatmul.mubr.f32.gmra.mxu0 %v1397
      %v1536 = vpop.f32.mrf.mxu0
      %v1537 = vadd.f32 %v1354, %v1536
      %v1538 = vpop.f32.mrf.mxu0
      %1539 = vmatprep.mubr.f32.mxu0 0.0
      %1540 = vmatmul.mubr.f32.gmra.mxu0 %v1400
      %v1541 = vpop.f32.mrf.mxu0
      %v1542 = vadd.f32 %v1354, %v1541
      %v1543 = vpop.f32.mrf.mxu0
      %1544 = vmatprep.mubr.f32.mxu0 0.0
      %1545 = vmatmul.mubr.f32.gmra.mxu0 %v1403
      %v1546 = vpop.f32.mrf.mxu0
      %v1547 = vadd.f32 %v1354, %v1546
      %v1548 = vpop.f32.mrf.mxu0
      %1549 = vdwg.mxu0
      %1550 = vst.msk [vmem:[%s485] sm:$0xff] %vm1204, %v1472
      %1551 = vst.msk [vmem:[%s485 + $0x8] sm:$0xff] %vm1204, %v1477
      %1552 = vst.msk [vmem:[%s485 + $0x10] sm:$0xff] %vm1204, %v1482
      %1553 = vst.msk [vmem:[%s485 + $0x18] sm:$0xff] %vm1204, %v1487
      %1554 = vst.msk [vmem:[%s485 + $0x20] sm:$0xff] %vm1204, %v1492
      %1555 = vst.msk [vmem:[%s485 + $0x28] sm:$0xff] %vm1204, %v1497
      %1556 = vst.msk [vmem:[%s485 + $0x30] sm:$0xff] %vm1204, %v1502
      %1557 = vst.msk [vmem:[%s485 + $0x38] sm:$0xff] %vm1204, %v1507
      %1558 = vst.msk [vmem:[%s485 + $0x40] sm:$0xff] %vm1204, %v1512
      %1559 = vst.msk [vmem:[%s485 + $0x48] sm:$0xff] %vm1204, %v1517
      %1560 = vst.msk [vmem:[%s485 + $0x50] sm:$0xff] %vm1204, %v1522
      %1561 = vst.msk [vmem:[%s485 + $0x58] sm:$0xff] %vm1204, %v1527
      %1562 = vst.msk [vmem:[%s485 + $0x60] sm:$0xff] %vm1204, %v1532
      %1563 = vst.msk [vmem:[%s485 + $0x68] sm:$0xff] %vm1204, %v1537
      %1564 = vst.msk [vmem:[%s485 + $0x70] sm:$0xff] %vm1204, %v1542
      %1565 = vst.msk [vmem:[%s485 + $0x78] sm:$0xff] %vm1204, %v1547
      %v1566 = vsel %vm1204, %v1472, 0.0
      %v1567 = vsel %vm1204, %v1477, 0.0
      %v1568 = vadd.f32 %v1566, %v1567
      %v1569 = vsel %vm1204, %v1482, 0.0
      %v1570 = vadd.f32 %v1568, %v1569
      %v1571 = vsel %vm1204, %v1487, 0.0
      %v1572 = vadd.f32 %v1570, %v1571
      %v1573 = vsel %vm1204, %v1492, 0.0
      %v1574 = vadd.f32 %v1572, %v1573
      %v1575 = vsel %vm1204, %v1497, 0.0
      %v1576 = vadd.f32 %v1574, %v1575
      %v1577 = vsel %vm1204, %v1502, 0.0
      %v1578 = vadd.f32 %v1576, %v1577
      %v1579 = vsel %vm1204, %v1507, 0.0
      %v1580 = vadd.f32 %v1578, %v1579
      %v1581 = vsel %vm1204, %v1512, 0.0
      %v1582 = vadd.f32 %v1580, %v1581
      %v1583 = vsel %vm1204, %v1517, 0.0
      %v1584 = vadd.f32 %v1582, %v1583
      %v1585 = vsel %vm1204, %v1522, 0.0
      %v1586 = vadd.f32 %v1584, %v1585
      %v1587 = vsel %vm1204, %v1527, 0.0
      %v1588 = vadd.f32 %v1586, %v1587
      %v1589 = vsel %vm1204, %v1532, 0.0
      %v1590 = vadd.f32 %v1588, %v1589
      %v1591 = vsel %vm1204, %v1537, 0.0
      %v1592 = vadd.f32 %v1590, %v1591
      %v1593 = vsel %vm1204, %v1542, 0.0
      %v1594 = vadd.f32 %v1592, %v1593
      %v1595 = vsel %vm1204, %v1547, 0.0
      %v1596 = vadd.f32 %v1594, %v1595
      %v1597 = vrot.slane %v1596, 4
      %v1598 = vadd.f32 %v1596, %v1597
      %v1599 = vrot.slane %v1598, 2
      %v1600 = vadd.f32 %v1598, %v1599
      %v1601 = vrot.slane %v1600, 1
      %v1602 = vadd.f32 %v1600, %v1601
      %v1603 = vmul.f32 %v1472, %v1472
      %v1604 = vmul.f32 %v1477, %v1477
      %v1605 = vmul.f32 %v1482, %v1482
      %v1606 = vmul.f32 %v1487, %v1487
      %v1607 = vmul.f32 %v1492, %v1492
      %v1608 = vmul.f32 %v1497, %v1497
      %v1609 = vmul.f32 %v1502, %v1502
      %v1610 = vmul.f32 %v1507, %v1507
      %v1611 = vmul.f32 %v1512, %v1512
      %v1612 = vmul.f32 %v1517, %v1517
      %v1613 = vmul.f32 %v1522, %v1522
      %v1614 = vmul.f32 %v1527, %v1527
      %v1615 = vmul.f32 %v1532, %v1532
      %v1616 = vmul.f32 %v1537, %v1537
      %v1617 = vmul.f32 %v1542, %v1542
      %v1618 = vmul.f32 %v1547, %v1547
      %v1619 = vsel %vm1204, %v1603, 0.0
      %v1620 = vsel %vm1204, %v1604, 0.0
      %v1621 = vadd.f32 %v1619, %v1620
      %v1622 = vsel %vm1204, %v1605, 0.0
      %v1623 = vadd.f32 %v1621, %v1622
      %v1624 = vsel %vm1204, %v1606, 0.0
      %v1625 = vadd.f32 %v1623, %v1624
      %v1626 = vsel %vm1204, %v1607, 0.0
      %v1627 = vadd.f32 %v1625, %v1626
      %v1628 = vsel %vm1204, %v1608, 0.0
      %v1629 = vadd.f32 %v1627, %v1628
      %v1630 = vsel %vm1204, %v1609, 0.0
      %v1631 = vadd.f32 %v1629, %v1630
      %v1632 = vsel %vm1204, %v1610, 0.0
      %v1633 = vadd.f32 %v1631, %v1632
      %v1634 = vsel %vm1204, %v1611, 0.0
      %v1635 = vadd.f32 %v1633, %v1634
      %v1636 = vsel %vm1204, %v1612, 0.0
      %v1637 = vadd.f32 %v1635, %v1636
      %v1638 = vsel %vm1204, %v1613, 0.0
      %v1639 = vadd.f32 %v1637, %v1638
      %v1640 = vsel %vm1204, %v1614, 0.0
      %v1641 = vadd.f32 %v1639, %v1640
      %v1642 = vsel %vm1204, %v1615, 0.0
      %v1643 = vadd.f32 %v1641, %v1642
      %v1644 = vsel %vm1204, %v1616, 0.0
      %v1645 = vadd.f32 %v1643, %v1644
      %v1646 = vsel %vm1204, %v1617, 0.0
      %v1647 = vadd.f32 %v1645, %v1646
      %v1648 = vsel %vm1204, %v1618, 0.0
      %v1649 = vadd.f32 %v1647, %v1648
      %v1650 = vrot.slane %v1649, 4
      %v1651 = vadd.f32 %v1649, %v1650
      %v1652 = vrot.slane %v1651, 2
      %v1653 = vadd.f32 %v1651, %v1652
      %v1654 = vrot.slane %v1653, 1
      %v1655 = vadd.f32 %v1653, %v1654
      %v1656 = vsel %vm619, %v1602, %v1655
      %vm1657 = vcmask 58368
      %1658 = vst.msk [vmem:[%s494] sm:$0x3] %vm1657, %v1656
      %s1659 = smul.u32 8, %s25
      %p1660 = scmp.lt.s32.totalorder %s24, 1
      %s1661 = scalar_select %p1660, %s24, 1
      %p1662 = scmp.lt.s32.totalorder %s1659, 15
      %s1663 = scalar_select %p1662, %s1659, 15
      %s1664 = smul.addr %s1663, 2
      %s1665 = smul.addr %s1661, 32
      %s1666 = sadd.s32 %s1664, %s1665
      %s1667 = smul.addr %s1666, 8
      %s1668 = scalar_lea.vmem %s7, %s1667
      %p1669 = scmp.lt.s32.totalorder %s24, 1
      %s1670 = scalar_select %p1669, %s24, 1
      %p1671 = scmp.lt.s32.totalorder %s25, 1
      %s1672 = scalar_select %p1671, %s25, 1
      %s1673 = smul.addr %s1670, 2
      %s1674 = sadd.s32 %s1672, %s1673
      %s1675 = smul.addr %s1674, 2
      %s1676 = scalar_lea.vmem %s8, %s1675
      // Predicated region
      $region49: #{double_conv.4} parent=47 // pred_check
        %p1677 = pneg %p236
      $region50: #{double_conv.4} parent=47 // pred_check_branch
        %1679 = sbr.rel (%p1677) target = $region52
      $region51: #{double_conv.4} parent=47 // pred_region
        %s1680 = smul.u32 8, %s25
      $region52: #{double_conv.4} parent=47 // pred_fallthru
        _
      // Predicated region
      $region53: #{double_conv.4} parent=47 // pred_check
        %p1681 = pneg %p264
      $region54: #{double_conv.4} parent=47 // pred_check_branch
        %1683 = sbr.rel (%p1681) target = $region56
      $region55: #{double_conv.4} parent=47 // pred_region
        _
      $region56: #{double_conv.4} parent=47 // pred_fallthru
        _
    $region48: #{double_conv.4} parent=5 // pred_fallthru
      _
    %p1684 = scmp.le.s32.totalorder 2, %s15
    // Predicated region
    $region57: #{double_conv.4} parent=5 // pred_check
      %p1685 = pneg %p1684
    $region58: #{double_conv.4} parent=5 // pred_check_branch
      %1687 = sbr.rel (%p1685) target = $region60
    $region59: #{double_conv.4} parent=5 // pred_region
      %s1688 = ssub.s32 %s15, 2
      // Predicated region
      $region61: #{double_conv.4} parent=59 // pred_check
        %p1689 = pneg %p242
      $region62: #{double_conv.4} parent=59 // pred_check_branch
        %1691 = sbr.rel (%p1689) target = $region64
      $region63: #{double_conv.4} parent=59 // pred_region
        %s1692 = smul.u32 8, %s27
        %p1693 = scmp.lt.s32.totalorder %s26, 1
        %s1694 = scalar_select %p1693, %s26, 1
        %p1695 = scmp.lt.s32.totalorder %s1692, 15
        %s1696 = scalar_select %p1695, %s1692, 15
        %s1697 = smul.addr %s1696, 2
        %s1698 = smul.addr %s1694, 32
        %s1699 = sadd.s32 %s1697, %s1698
        %s1700 = smul.addr %s1699, 8
        %s1701 = scalar_lea.vmem %s7, %s1700
      $region64: #{double_conv.4} parent=59 // pred_fallthru
        _
      // Predicated region
      $region65: #{double_conv.4} parent=59 // pred_check
        %p1702 = pneg %p270
      $region66: #{double_conv.4} parent=59 // pred_check_branch
        %1704 = sbr.rel (%p1702) target = $region68
      $region67: #{double_conv.4} parent=59 // pred_region
        %p1705 = scmp.lt.s32.totalorder %s26, 1
        %s1706 = scalar_select %p1705, %s26, 1
        %p1707 = scmp.lt.s32.totalorder %s27, 1
        %s1708 = scalar_select %p1707, %s27, 1
        %s1709 = smul.addr %s1706, 2
        %s1710 = sadd.s32 %s1708, %s1709
        %s1711 = smul.addr %s1710, 2
        %s1712 = scalar_lea.vmem %s8, %s1711
      $region68: #{double_conv.4} parent=59 // pred_fallthru
        _
    $region60: #{double_conv.4} parent=5 // pred_fallthru
      _
  $region6: #{double_conv.4} parent=0 // loop_footer
    %s19 = sadd.s32 1, %s15
  $region7: #{double_conv.4} parent=0 // loop_footer_branch
    %14 = sbr.rel target = $region3
  $region8: #{double_conv.4} parent=0 // loop_exit
    _

</llo_original>
